<compile_context>
chip_gen: v5e
topology: v5e:2x2
jax: 0.10.0
libtpu: 0.0.40
codegen_flags: <defaults>
</compile_context>

<pallas_src>
import jax
import jax.numpy as jnp
from jax.experimental import pallas as pl
from jax.experimental.pallas import tpu as pltpu

BN_EPS = 1e-5
_H = _W = 5          # spatial size fixed by the module contract ([N, C, 5, 5])


def _round_up(v, m):
    return (v + m - 1) // m * m


# ---------------------------------------------------------------------------
# Fused whole-network Pallas kernel (built per shape configuration)
# ---------------------------------------------------------------------------
def _make_kernel(tb, cp1, cp2, c2p, c3p, ncp):
    """Ref shapes seen by the kernel:
      x_ref    : (25*tb, k_fe)    bf16  im2col'd FE input, rows = (pixel, batch)
      fe_w_ref : (k_fe, cp1)      bf16  rows ordered (kh, kw, cin)
      c1_w_ref : (3, 3*cp1, cp2)  bf16  per-kh rows ordered (kw, cin)
      c2_w_ref : (3, 3*cp2, c2p)  bf16
      c3_w_ref : (c2p, c3p)       bf16
      fc_w_ref : (c3p, ncp)       bf16
      aff_ref  : (16, affw)       f32   rows [s0,b0,s1,b1,s2,b2,s3,b3,fc_b,0..]
      o_ref    : (tb, ncp)        f32
      p1_ref   : (5, tb, 5*cp1)   bf16  FE output, spatial, NO halo   (scratch)
      p2_ref   : (2, tb, 2*cp2)   bf16  pooled layer1 output          (scratch)
    """

    def conv3x3(src_ref, w_ref, y, x, h_in, w_in, cin_p):
        # 3x3 / pad=1 conv output (tb, cout_p) in f32 at position (y, x).
        # Out-of-bounds taps are skipped (== zero padding), so the scratch
        # needs no halo and no zero initialisation.  In-bounds kw taps are
        # contracted in ONE matmul (K = nw*cin_p <= 3*cin_p <= 96); in-bounds
        # kh taps are accumulated in f32.
        x_lo, x_hi = max(x - 1, 0), min(x + 1, w_in - 1)
        kw_lo, nw = x_lo - (x - 1), x_hi - x_lo + 1
        acc = None
        for dy in range(3):
            sy = y - 1 + dy
            if sy < 0 or sy >= h_in:
                continue
            lhs = src_ref[sy, :, x_lo * cin_p:(x_lo + nw) * cin_p]
            rhs = w_ref[dy, kw_lo * cin_p:(kw_lo + nw) * cin_p, :]
            d = jnp.dot(lhs, rhs, preferred_element_type=jnp.float32)
            acc = d if acc is None else acc + d
        return acc

    def kernel(x_ref, fe_w_ref, c1_w_ref, c2_w_ref, c3_w_ref, fc_w_ref,
               aff_ref, o_ref, p1_ref, p2_ref):
        # ---- FE: Conv3x3(bias=False) + BN -----------------------------------
        # One matmul covering all 25 output pixels: M = 25*tb, K = 9*Cin.
        fe_all = jnp.dot(x_ref[...], fe_w_ref[...],
                         preferred_element_type=jnp.float32)     # (25*tb, cp1)
        s0 = aff_ref[0:1, :cp1]
        b0 = aff_ref[1:2, :cp1]
        for p in range(_H * _W):
            y, x = divmod(p, _W)
            blk = fe_all[p * tb:(p + 1) * tb, :] * s0 + b0
            p1_ref[y, :, x * cp1:(x + 1) * cp1] = blk.astype(p1_ref.dtype)

        # ---- layer1: Conv3x3 + BN + ReLU with the 2x2/2 max-pool fused ------
        s1 = aff_ref[2:3, :cp2]
        b1 = aff_ref[3:4, :cp2]
        for oy in range(2):
            for ox in range(2):
                m = None
                for sy in range(2):
                    for sx in range(2):
                        t = conv3x3(p1_ref, c1_w_ref, 2 * oy + sy, 2 * ox + sx,
                                    _H, _W, cp1)
                        t = jnp.maximum(t * s1 + b1, 0.0)
                        m = t if m is None else jnp.maximum(m, t)
                p2_ref[oy, :, ox * cp2:(ox + 1) * cp2] = m.astype(p2_ref.dtype)

        # ---- layer2: Conv3x3 + BN + ReLU + 2x2/2 max-pool (Dropout2d == id) -
        s2 = aff_ref[4:5, :c2p]
        b2 = aff_ref[5:6, :c2p]
        pooled = None
        for y in range(2):
            for x in range(2):
                t = conv3x3(p2_ref, c2_w_ref, y, x, 2, 2, cp2)
                t = jnp.maximum(t * s2 + b2, 0.0)
                pooled = t if pooled is None else jnp.maximum(pooled, t)

        # ---- layer3: Conv1x1 + BN + ReLU (Dropout2d == id) -------------------
        y3 = jnp.dot(pooled.astype(jnp.bfloat16), c3_w_ref[...],
                     preferred_element_type=jnp.float32)
        s3 = aff_ref[6:7, :c3p]
        b3 = aff_ref[7:8, :c3p]
        y3 = jnp.maximum(y3 * s3 + b3, 0.0)

        # ---- classifier: Linear ----------------------------------------------
        out = jnp.dot(y3.astype(jnp.bfloat16), fc_w_ref[...],
                      preferred_element_type=jnp.float32)
        out = out + aff_ref[8:9, :ncp]
        o_ref[...] = out.astype(o_ref.dtype)

    return kernel


# ---------------------------------------------------------------------------
# Parameter packing (compact lane widths, weights in bf16)
# ---------------------------------------------------------------------------
def _pack_conv3x3_flat(w_oihw, k_pad, cout_pad):
    """[Cout, Cin, 3, 3] -> (k_pad, cout_pad); rows ordered (kh, kw, cin)."""
    cout, cin = w_oihw.shape[0], w_oihw.shape[1]
    w = jnp.transpose(w_oihw, (2, 3, 1, 0)).reshape(9 * cin, cout)
    w = jnp.pad(w, ((0, k_pad - 9 * cin), (0, cout_pad - cout)))
    return w.astype(jnp.bfloat16)


def _pack_conv3x3_tap(w_oihw, cin_pad, cout_pad):
    """[Cout, Cin, 3, 3] -> (3, 3*cin_pad, cout_pad); per-kh rows (kw, cin)."""
    cout, cin = w_oihw.shape[0], w_oihw.shape[1]
    w = jnp.transpose(w_oihw, (2, 3, 1, 0))                   # (kh, kw, cin, cout)
    w = jnp.pad(w, ((0, 0), (0, 0), (0, cin_pad - cin), (0, cout_pad - cout)))
    return w.reshape(3, 3 * cin_pad, cout_pad).astype(jnp.bfloat16)


def _pack_conv1x1(w_oihw, cin_pad, cout_pad):
    cout, cin = w_oihw.shape[0], w_oihw.shape[1]
    w = jnp.pad(w_oihw[:, :, 0, 0].T, ((0, cin_pad - cin), (0, cout_pad - cout)))
    return w.astype(jnp.bfloat16)


def _pack_fc(w_out_in, in_pad, out_pad):
    n_out, n_in = w_out_in.shape
    w = jnp.pad(w_out_in.T, ((0, in_pad - n_in), (0, out_pad - n_out)))
    return w.astype(jnp.bfloat16)


def _fold_bn(bn, conv_bias, width):
    scale = bn["gamma"] / jnp.sqrt(bn["var"] + BN_EPS)
    shift = bn["beta"] - bn["mean"] * scale
    if conv_bias is not None:
        shift = shift + conv_bias * scale
    c = scale.shape[0]
    return jnp.pad(scale, (0, width - c)), jnp.pad(shift, (0, width - c))


def _build_affine(p, affw):
    rows = []
    for bn, bias in ((p["bn0"], None), (p["bn1"], p["c1_b"]),
                     (p["bn2"], p["c2_b"]), (p["bn3"], p["c3_b"])):
        s, b = _fold_bn(bn, bias, affw)
        rows += [s, b]
    n_classes = p["fc_b"].shape[0]
    rows.append(jnp.pad(p["fc_b"], (0, affw - n_classes)))
    aff = jnp.stack(rows, axis=0)                             # (9, affw)
    return jnp.pad(aff, ((0, 16 - aff.shape[0]), (0, 0))).astype(jnp.float32)


# ---------------------------------------------------------------------------
# Forward pass wrapper (single pallas_call)
# ---------------------------------------------------------------------------
def cnn2d_new_forward(x_nchw, p):
    """Inference forward pass of CNN_2D_new as one fused Pallas TPU kernel."""
    n, c_in, h, w = x_nchw.shape
    assert (h, w) == (_H, _W), "CNN_2D_new expects 5x5 spatial input"
    in_planes = p["fe_w"].shape[0]
    n_classes = p["fc_w"].shape[0]

    # Batch tile: >=2 grid steps when the batch allows (so v7x's two
    # TensorCores both get work), up to 256 rows per tile (v6e friendly).
    n16 = _round_up(max(n, 1), 16)
    if n16 < 32:
        tb = n16
    else:
        tb = min(256, _round_up((n16 + 1) // 2, 16))
    n_pad = _round_up(n, tb)
    n_tiles = n_pad // tb

    # Per-layer channel/lane widths (compact — no padding to 128 lanes).
    k_fe = _round_up(9 * c_in, 8)          # FE im2col contraction depth
    cp1 = _round_up(in_planes, 32)         # FE out / layer1 in
    cp2 = 32                               # layer1 out / layer2 in
    c2p = 64                               # layer2 out / layer3 in
    c3p = 128                              # layer3 out / fc in
    ncp = _round_up(max(n_classes, 1), 128)
    affw = max(cp1, cp2, c2p, c3p, ncp)

    # FE input as compact im2col in HBM: (n_tiles*25*tb, k_fe) bf16 with rows
    # ordered (batch_tile, pixel, batch_within_tile).  Zero padding=1 of the
    # conv is baked into the patch extraction here.
    xp = jnp.pad(x_nchw.astype(jnp.float32),
                 ((0, n_pad - n), (0, 0), (1, 1), (1, 1)))
    taps = [xp[:, :, dy:dy + _H, dx:dx + _W]
            for dy in range(3) for dx in range(3)]
    xc = jnp.stack(taps, axis=1)                        # (n_pad, 9, c_in, 5, 5)
    xc = jnp.transpose(xc, (3, 4, 0, 1, 2)).reshape(_H * _W, n_pad, 9 * c_in)
    xc = jnp.pad(xc, ((0, 0), (0, 0), (0, k_fe - 9 * c_in)))
    xc = xc.reshape(_H * _W, n_tiles, tb, k_fe).transpose(1, 0, 2, 3)
    x_fe = xc.reshape(n_tiles * _H * _W * tb, k_fe).astype(jnp.bfloat16)

    fe_w = _pack_conv3x3_flat(p["fe_w"], k_fe, cp1)
    c1_w = _pack_conv3x3_tap(p["c1_w"], cp1, cp2)
    c2_w = _pack_conv3x3_tap(p["c2_w"], cp2, c2p)
    c3_w = _pack_conv1x1(p["c3_w"], c2p, c3p)
    fc_w = _pack_fc(p["fc_w"], c3p, ncp)
    aff = _build_affine(p, affw)

    kernel = _make_kernel(tb, cp1, cp2, c2p, c3p, ncp)

    flops = 2 * n_pad * (25 * k_fe * cp1 + 16 * 9 * cp1 * cp2
                         + 4 * 9 * cp2 * c2p + c2p * c3p + c3p * ncp)
    bytes_accessed = int(x_fe.size * 2
                         + (fe_w.size + c1_w.size + c2_w.size
                            + c3_w.size + fc_w.size) * 2
                         + aff.size * 4 + n_pad * ncp * 4)

    out = pl.pallas_call(
        kernel,
        out_shape=jax.ShapeDtypeStruct((n_pad, ncp), jnp.float32),
        grid=(n_tiles,),
        in_specs=[
            pl.BlockSpec((_H * _W * tb, k_fe), lambda g: (g, 0)),
            pl.BlockSpec((k_fe, cp1), lambda g: (0, 0)),
            pl.BlockSpec((3, 3 * cp1, cp2), lambda g: (0, 0, 0)),
            pl.BlockSpec((3, 3 * cp2, c2p), lambda g: (0, 0, 0)),
            pl.BlockSpec((c2p, c3p), lambda g: (0, 0)),
            pl.BlockSpec((c3p, ncp), lambda g: (0, 0)),
            pl.BlockSpec((16, affw), lambda g: (0, 0)),
        ],
        out_specs=pl.BlockSpec((tb, ncp), lambda g: (g, 0)),
        scratch_shapes=[
            pltpu.VMEM((_H, tb, _W * cp1), jnp.bfloat16),
            pltpu.VMEM((2, tb, 2 * cp2), jnp.bfloat16),
        ],
        compiler_params=pltpu.CompilerParams(
            dimension_semantics=("parallel",)),
        cost_estimate=pl.CostEstimate(flops=flops, transcendentals=0,
                                      bytes_accessed=bytes_accessed),
    )(x_fe, fe_w, c1_w, c2_w, c3_w, fc_w, aff)

    return out[:n, :n_classes]


# ---------------------------------------------------------------------------
# Pure-JAX (XLA, f32) reference of the PyTorch forward, for validation
# ---------------------------------------------------------------------------
def reference_forward(x_nchw, p):
    def conv(x, w, b, pad):
        y = jax.lax.conv_general_dilated(
            x, w, window_strides=(1, 1), padding=((pad, pad), (pad, pad)),
            dimension_numbers=("NCHW", "OIHW", "NCHW"))
        if b is not None:
            y = y + b.reshape(1, -1, 1, 1)
        return y

    def bn(x, q):
        s = q["gamma"] / jnp.sqrt(q["var"] + BN_EPS)
        t = q["beta"] - q["mean"] * s
        return x * s.reshape(1, -1, 1, 1) + t.reshape(1, -1, 1, 1)

    def pool(x):
        return jax.lax.reduce_window(x, -jnp.inf, jax.lax.max,
                                     (1, 1, 2, 2), (1, 1, 2, 2), "VALID")

    fe = bn(conv(x_nchw, p["fe_w"], None, 1), p["bn0"])
    l1 = pool(jax.nn.relu(bn(conv(fe, p["c1_w"], p["c1_b"], 1), p["bn1"])))
    l2 = pool(jax.nn.relu(bn(conv(l1, p["c2_w"], p["c2_b"], 1), p["bn2"])))
    l3 = jax.nn.relu(bn(conv(l2, p["c3_w"], p["c3_b"], 0), p["bn3"]))
    flat = l3.reshape(l3.shape[0], -1)
    return flat @ p["fc_w"].T + p["fc_b"]


# ---------------------------------------------------------------------------
# Deterministic parameter construction
# ---------------------------------------------------------------------------
def make_bn(key, c):
    k1, k2, k3, k4 = jax.random.split(key, 4)
    return {
        "gamma": 1.0 + 0.1 * jax.random.normal(k1, (c,), jnp.float32),
        "beta": 0.1 * jax.random.normal(k2, (c,), jnp.float32),
        "mean": 0.1 * jax.random.normal(k3, (c,), jnp.float32),
        "var": 0.5 + 0.25 * jnp.abs(jax.random.normal(k4, (c,), jnp.float32)),
    }


def make_params(key, c_in, in_planes, n_classes):
    ks = jax.random.split(key, 13)
    s = 0.1
    return {
        "fe_w": s * jax.random.normal(ks[0], (in_planes, c_in, 3, 3), jnp.float32),
        "bn0": make_bn(ks[1], in_planes),
        "c1_w": s * jax.random.normal(ks[2], (32, in_planes, 3, 3), jnp.float32),
        "c1_b": s * jax.random.normal(ks[3], (32,), jnp.float32),
        "bn1": make_bn(ks[4], 32),
        "c2_w": s * jax.random.normal(ks[5], (64, 32, 3, 3), jnp.float32),
        "c2_b": s * jax.random.normal(ks[6], (64,), jnp.float32),
        "bn2": make_bn(ks[7], 64),
        "c3_w": s * jax.random.normal(ks[8], (128, 64, 1, 1), jnp.float32),
        "c3_b": s * jax.random.normal(ks[9], (128,), jnp.float32),
        "bn3": make_bn(ks[10], 128),
        "fc_w": s * jax.random.normal(ks[11], (n_classes, 128), jnp.float32),
        "fc_b": s * jax.random.normal(ks[12], (n_classes,), jnp.float32),
    }


if __name__ == "__main__":
    # Module contract: input [N, C=spectral_channel, H=5, W=5].
    N, C_IN, H, W = 2, 4, 5, 5
    IN_PLANES, N_CLASSES = 16, 10

    key = jax.random.PRNGKey(0)
    kx, kp = jax.random.split(key)
    x = jax.random.normal(kx, (N, C_IN, H, W), jnp.float32)
    params = make_params(kp, C_IN, IN_PLANES, N_CLASSES)

    out = jax.block_until_ready(jax.jit(cnn2d_new_forward)(x, params))
    assert out.shape == (N, N_CLASSES), out.shape
    assert bool(jnp.all(jnp.isfinite(out)))

    # Validate against the f32 XLA reference (kernel matmuls run in bf16).
    ref = jax.block_until_ready(reference_forward(x, params))
    rel = float(jnp.linalg.norm(out - ref) / (jnp.linalg.norm(ref) + 1e-6))
    assert rel < 0.05, f"relative error too large: {rel}"

    print("KERNEL_OK")
</pallas_src>

<mosaic_0001>
module attributes {stable_mosaic.version = 11 : i64} {
  func.func @kernel(%arg0: i32, %arg1: memref<400x40xbf16, #tpu.memory_space<vmem>>, %arg2: memref<40x32xbf16, #tpu.memory_space<vmem>>, %arg3: memref<3x96x32xbf16, #tpu.memory_space<vmem>>, %arg4: memref<3x96x64xbf16, #tpu.memory_space<vmem>>, %arg5: memref<64x128xbf16, #tpu.memory_space<vmem>>, %arg6: memref<128x128xbf16, #tpu.memory_space<vmem>>, %arg7: memref<16x128xf32, #tpu.memory_space<vmem>>, %arg8: memref<16x128xf32, #tpu.memory_space<vmem>>, %arg9: memref<5x16x160xbf16, #tpu.memory_space<vmem>>, %arg10: memref<2x16x64xbf16, #tpu.memory_space<vmem>>) attributes {dimension_semantics = [#tpu.dimension_semantics<parallel>], iteration_bounds = array<i64: 1>, scalar_prefetch = 0 : i64, scratch_operands = 2 : i64, tpu.core_type = #tpu.core_type<tc>, window_params = [{transform_indices = @transform_0, window_bounds = array<i64: 400, 40>}, {pipeline_mode = #tpu.pipeline_mode<synchronous>, transform_indices = @transform_1, window_bounds = array<i64: 40, 32>}, {pipeline_mode = #tpu.pipeline_mode<synchronous>, transform_indices = @transform_2, window_bounds = array<i64: 3, 96, 32>}, {pipeline_mode = #tpu.pipeline_mode<synchronous>, transform_indices = @transform_3, window_bounds = array<i64: 3, 96, 64>}, {pipeline_mode = #tpu.pipeline_mode<synchronous>, transform_indices = @transform_4, window_bounds = array<i64: 64, 128>}, {pipeline_mode = #tpu.pipeline_mode<synchronous>, transform_indices = @transform_5, window_bounds = array<i64: 128, 128>}, {pipeline_mode = #tpu.pipeline_mode<synchronous>, transform_indices = @transform_6, window_bounds = array<i64: 16, 128>}, {transform_indices = @transform_7, window_bounds = array<i64: 16, 128>}]} {
    %c0 = arith.constant 0 : index
    %c0_0 = arith.constant 0 : index
    %0 = vector.load %arg1[%c0, %c0_0] : memref<400x40xbf16, #tpu.memory_space<vmem>>, vector<400x40xbf16>
    %c0_1 = arith.constant 0 : index
    %c0_2 = arith.constant 0 : index
    %1 = vector.load %arg2[%c0_1, %c0_2] : memref<40x32xbf16, #tpu.memory_space<vmem>>, vector<40x32xbf16>
    %cst = arith.constant dense<0.000000e+00> : vector<400x32xf32>
    %2 = tpu.matmul %0, %1, %cst {dimension_numbers = #tpu.dot_dimension_numbers<[1], [0], [0], [1], [0, 0, 1, 1], [], []>} : vector<400x40xbf16>, vector<40x32xbf16>, vector<400x32xf32> -> vector<400x32xf32>
    %c0_3 = arith.constant 0 : index
    %c0_4 = arith.constant 0 : index
    %3 = vector.load %arg7[%c0_3, %c0_4] : memref<16x128xf32, #tpu.memory_space<vmem>>, vector<1x32xf32>
    %c1 = arith.constant 1 : index
    %c0_5 = arith.constant 0 : index
    %4 = vector.load %arg7[%c1, %c0_5] : memref<16x128xf32, #tpu.memory_space<vmem>>, vector<1x32xf32>
    %5 = vector.extract_strided_slice %2 {offsets = [0, 0], sizes = [16, 32], strides = [1, 1]} : vector<400x32xf32> to vector<16x32xf32>
    %6 = vector.broadcast %3 : vector<1x32xf32> to vector<16x32xf32>
    %7 = arith.mulf %5, %6 : vector<16x32xf32>
    %8 = vector.broadcast %4 : vector<1x32xf32> to vector<16x32xf32>
    %9 = arith.addf %7, %8 : vector<16x32xf32>
    %10 = arith.truncf %9 : vector<16x32xf32> to vector<16x32xbf16>
    %c0_6 = arith.constant 0 : index
    %c0_7 = arith.constant 0 : index
    %c0_8 = arith.constant 0 : index
    %11 = vector.load %arg9[%c0_6, %c0_7, %c0_8] : memref<5x16x160xbf16, #tpu.memory_space<vmem>>, vector<1x16x32xbf16>
    %12 = vector.shape_cast %11 : vector<1x16x32xbf16> to vector<16x32xbf16>
    %13 = vector.shape_cast %10 : vector<16x32xbf16> to vector<1x16x32xbf16>
    tpu.vector_store %arg9[%c0_6, %c0_7, %c0_8], %13 {strides = array<i32>} : memref<5x16x160xbf16, #tpu.memory_space<vmem>>, vector<1x16x32xbf16>,
    %14 = vector.extract_strided_slice %2 {offsets = [16, 0], sizes = [16, 32], strides = [1, 1]} : vector<400x32xf32> to vector<16x32xf32>
    %15 = vector.broadcast %3 : vector<1x32xf32> to vector<16x32xf32>
    %16 = arith.mulf %14, %15 : vector<16x32xf32>
    %17 = vector.broadcast %4 : vector<1x32xf32> to vector<16x32xf32>
    %18 = arith.addf %16, %17 : vector<16x32xf32>
    %19 = arith.truncf %18 : vector<16x32xf32> to vector<16x32xbf16>
    %c0_9 = arith.constant 0 : index
    %c0_10 = arith.constant 0 : index
    %c32 = arith.constant 32 : index
    %20 = vector.load %arg9[%c0_9, %c0_10, %c32] : memref<5x16x160xbf16, #tpu.memory_space<vmem>>, vector<1x16x32xbf16>
    %21 = vector.shape_cast %20 : vector<1x16x32xbf16> to vector<16x32xbf16>
    %22 = vector.shape_cast %19 : vector<16x32xbf16> to vector<1x16x32xbf16>
    tpu.vector_store %arg9[%c0_9, %c0_10, %c32], %22 {strides = array<i32>} : memref<5x16x160xbf16, #tpu.memory_space<vmem>>, vector<1x16x32xbf16>,
    %23 = vector.extract_strided_slice %2 {offsets = [32, 0], sizes = [16, 32], strides = [1, 1]} : vector<400x32xf32> to vector<16x32xf32>
    %24 = vector.broadcast %3 : vector<1x32xf32> to vector<16x32xf32>
    %25 = arith.mulf %23, %24 : vector<16x32xf32>
    %26 = vector.broadcast %4 : vector<1x32xf32> to vector<16x32xf32>
    %27 = arith.addf %25, %26 : vector<16x32xf32>
    %28 = arith.truncf %27 : vector<16x32xf32> to vector<16x32xbf16>
    %c0_11 = arith.constant 0 : index
    %c0_12 = arith.constant 0 : index
    %c64 = arith.constant 64 : index
    %29 = vector.load %arg9[%c0_11, %c0_12, %c64] : memref<5x16x160xbf16, #tpu.memory_space<vmem>>, vector<1x16x32xbf16>
    %30 = vector.shape_cast %29 : vector<1x16x32xbf16> to vector<16x32xbf16>
    %31 = vector.shape_cast %28 : vector<16x32xbf16> to vector<1x16x32xbf16>
    tpu.vector_store %arg9[%c0_11, %c0_12, %c64], %31 {strides = array<i32>} : memref<5x16x160xbf16, #tpu.memory_space<vmem>>, vector<1x16x32xbf16>,
    %32 = vector.extract_strided_slice %2 {offsets = [48, 0], sizes = [16, 32], strides = [1, 1]} : vector<400x32xf32> to vector<16x32xf32>
    %33 = vector.broadcast %3 : vector<1x32xf32> to vector<16x32xf32>
    %34 = arith.mulf %32, %33 : vector<16x32xf32>
    %35 = vector.broadcast %4 : vector<1x32xf32> to vector<16x32xf32>
    %36 = arith.addf %34, %35 : vector<16x32xf32>
    %37 = arith.truncf %36 : vector<16x32xf32> to vector<16x32xbf16>
    %c0_13 = arith.constant 0 : index
    %c0_14 = arith.constant 0 : index
    %c96 = arith.constant 96 : index
    %38 = vector.load %arg9[%c0_13, %c0_14, %c96] : memref<5x16x160xbf16, #tpu.memory_space<vmem>>, vector<1x16x32xbf16>
    %39 = vector.shape_cast %38 : vector<1x16x32xbf16> to vector<16x32xbf16>
    %40 = vector.shape_cast %37 : vector<16x32xbf16> to vector<1x16x32xbf16>
    tpu.vector_store %arg9[%c0_13, %c0_14, %c96], %40 {strides = array<i32>} : memref<5x16x160xbf16, #tpu.memory_space<vmem>>, vector<1x16x32xbf16>,
    %41 = vector.extract_strided_slice %2 {offsets = [64, 0], sizes = [16, 32], strides = [1, 1]} : vector<400x32xf32> to vector<16x32xf32>
    %42 = vector.broadcast %3 : vector<1x32xf32> to vector<16x32xf32>
    %43 = arith.mulf %41, %42 : vector<16x32xf32>
    %44 = vector.broadcast %4 : vector<1x32xf32> to vector<16x32xf32>
    %45 = arith.addf %43, %44 : vector<16x32xf32>
    %46 = arith.truncf %45 : vector<16x32xf32> to vector<16x32xbf16>
    %c0_15 = arith.constant 0 : index
    %c0_16 = arith.constant 0 : index
    %c128 = arith.constant 128 : index
    %47 = vector.load %arg9[%c0_15, %c0_16, %c128] : memref<5x16x160xbf16, #tpu.memory_space<vmem>>, vector<1x16x32xbf16>
    %48 = vector.shape_cast %47 : vector<1x16x32xbf16> to vector<16x32xbf16>
    %49 = vector.shape_cast %46 : vector<16x32xbf16> to vector<1x16x32xbf16>
    tpu.vector_store %arg9[%c0_15, %c0_16, %c128], %49 {strides = array<i32>} : memref<5x16x160xbf16, #tpu.memory_space<vmem>>, vector<1x16x32xbf16>,
    %50 = vector.extract_strided_slice %2 {offsets = [80, 0], sizes = [16, 32], strides = [1, 1]} : vector<400x32xf32> to vector<16x32xf32>
    %51 = vector.broadcast %3 : vector<1x32xf32> to vector<16x32xf32>
    %52 = arith.mulf %50, %51 : vector<16x32xf32>
    %53 = vector.broadcast %4 : vector<1x32xf32> to vector<16x32xf32>
    %54 = arith.addf %52, %53 : vector<16x32xf32>
    %55 = arith.truncf %54 : vector<16x32xf32> to vector<16x32xbf16>
    %c1_17 = arith.constant 1 : index
    %c0_18 = arith.constant 0 : index
    %c0_19 = arith.constant 0 : index
    %56 = vector.load %arg9[%c1_17, %c0_18, %c0_19] : memref<5x16x160xbf16, #tpu.memory_space<vmem>>, vector<1x16x32xbf16>
    %57 = vector.shape_cast %56 : vector<1x16x32xbf16> to vector<16x32xbf16>
    %58 = vector.shape_cast %55 : vector<16x32xbf16> to vector<1x16x32xbf16>
    tpu.vector_store %arg9[%c1_17, %c0_18, %c0_19], %58 {strides = array<i32>} : memref<5x16x160xbf16, #tpu.memory_space<vmem>>, vector<1x16x32xbf16>,
    %59 = vector.extract_strided_slice %2 {offsets = [96, 0], sizes = [16, 32], strides = [1, 1]} : vector<400x32xf32> to vector<16x32xf32>
    %60 = vector.broadcast %3 : vector<1x32xf32> to vector<16x32xf32>
    %61 = arith.mulf %59, %60 : vector<16x32xf32>
    %62 = vector.broadcast %4 : vector<1x32xf32> to vector<16x32xf32>
    %63 = arith.addf %61, %62 : vector<16x32xf32>
    %64 = arith.truncf %63 : vector<16x32xf32> to vector<16x32xbf16>
    %c1_20 = arith.constant 1 : index
    %c0_21 = arith.constant 0 : index
    %c32_22 = arith.constant 32 : index
    %65 = vector.load %arg9[%c1_20, %c0_21, %c32_22] : memref<5x16x160xbf16, #tpu.memory_space<vmem>>, vector<1x16x32xbf16>
    %66 = vector.shape_cast %65 : vector<1x16x32xbf16> to vector<16x32xbf16>
    %67 = vector.shape_cast %64 : vector<16x32xbf16> to vector<1x16x32xbf16>
    tpu.vector_store %arg9[%c1_20, %c0_21, %c32_22], %67 {strides = array<i32>} : memref<5x16x160xbf16, #tpu.memory_space<vmem>>, vector<1x16x32xbf16>,
    %68 = vector.extract_strided_slice %2 {offsets = [112, 0], sizes = [16, 32], strides = [1, 1]} : vector<400x32xf32> to vector<16x32xf32>
    %69 = vector.broadcast %3 : vector<1x32xf32> to vector<16x32xf32>
    %70 = arith.mulf %68, %69 : vector<16x32xf32>
    %71 = vector.broadcast %4 : vector<1x32xf32> to vector<16x32xf32>
    %72 = arith.addf %70, %71 : vector<16x32xf32>
    %73 = arith.truncf %72 : vector<16x32xf32> to vector<16x32xbf16>
    %c1_23 = arith.constant 1 : index
    %c0_24 = arith.constant 0 : index
    %c64_25 = arith.constant 64 : index
    %74 = vector.load %arg9[%c1_23, %c0_24, %c64_25] : memref<5x16x160xbf16, #tpu.memory_space<vmem>>, vector<1x16x32xbf16>
    %75 = vector.shape_cast %74 : vector<1x16x32xbf16> to vector<16x32xbf16>
    %76 = vector.shape_cast %73 : vector<16x32xbf16> to vector<1x16x32xbf16>
    tpu.vector_store %arg9[%c1_23, %c0_24, %c64_25], %76 {strides = array<i32>} : memref<5x16x160xbf16, #tpu.memory_space<vmem>>, vector<1x16x32xbf16>,
    %77 = vector.extract_strided_slice %2 {offsets = [128, 0], sizes = [16, 32], strides = [1, 1]} : vector<400x32xf32> to vector<16x32xf32>
    %78 = vector.broadcast %3 : vector<1x32xf32> to vector<16x32xf32>
    %79 = arith.mulf %77, %78 : vector<16x32xf32>
    %80 = vector.broadcast %4 : vector<1x32xf32> to vector<16x32xf32>
    %81 = arith.addf %79, %80 : vector<16x32xf32>
    %82 = arith.truncf %81 : vector<16x32xf32> to vector<16x32xbf16>
    %c1_26 = arith.constant 1 : index
    %c0_27 = arith.constant 0 : index
    %c96_28 = arith.constant 96 : index
    %83 = vector.load %arg9[%c1_26, %c0_27, %c96_28] : memref<5x16x160xbf16, #tpu.memory_space<vmem>>, vector<1x16x32xbf16>
    %84 = vector.shape_cast %83 : vector<1x16x32xbf16> to vector<16x32xbf16>
    %85 = vector.shape_cast %82 : vector<16x32xbf16> to vector<1x16x32xbf16>
    tpu.vector_store %arg9[%c1_26, %c0_27, %c96_28], %85 {strides = array<i32>} : memref<5x16x160xbf16, #tpu.memory_space<vmem>>, vector<1x16x32xbf16>,
    %86 = vector.extract_strided_slice %2 {offsets = [144, 0], sizes = [16, 32], strides = [1, 1]} : vector<400x32xf32> to vector<16x32xf32>
    %87 = vector.broadcast %3 : vector<1x32xf32> to vector<16x32xf32>
    %88 = arith.mulf %86, %87 : vector<16x32xf32>
    %89 = vector.broadcast %4 : vector<1x32xf32> to vector<16x32xf32>
    %90 = arith.addf %88, %89 : vector<16x32xf32>
    %91 = arith.truncf %90 : vector<16x32xf32> to vector<16x32xbf16>
    %c1_29 = arith.constant 1 : index
    %c0_30 = arith.constant 0 : index
    %c128_31 = arith.constant 128 : index
    %92 = vector.load %arg9[%c1_29, %c0_30, %c128_31] : memref<5x16x160xbf16, #tpu.memory_space<vmem>>, vector<1x16x32xbf16>
    %93 = vector.shape_cast %92 : vector<1x16x32xbf16> to vector<16x32xbf16>
    %94 = vector.shape_cast %91 : vector<16x32xbf16> to vector<1x16x32xbf16>
    tpu.vector_store %arg9[%c1_29, %c0_30, %c128_31], %94 {strides = array<i32>} : memref<5x16x160xbf16, #tpu.memory_space<vmem>>, vector<1x16x32xbf16>,
    %95 = vector.extract_strided_slice %2 {offsets = [160, 0], sizes = [16, 32], strides = [1, 1]} : vector<400x32xf32> to vector<16x32xf32>
    %96 = vector.broadcast %3 : vector<1x32xf32> to vector<16x32xf32>
    %97 = arith.mulf %95, %96 : vector<16x32xf32>
    %98 = vector.broadcast %4 : vector<1x32xf32> to vector<16x32xf32>
    %99 = arith.addf %97, %98 : vector<16x32xf32>
    %100 = arith.truncf %99 : vector<16x32xf32> to vector<16x32xbf16>
    %c2 = arith.constant 2 : index
    %c0_32 = arith.constant 0 : index
    %c0_33 = arith.constant 0 : index
    %101 = vector.load %arg9[%c2, %c0_32, %c0_33] : memref<5x16x160xbf16, #tpu.memory_space<vmem>>, vector<1x16x32xbf16>
    %102 = vector.shape_cast %101 : vector<1x16x32xbf16> to vector<16x32xbf16>
    %103 = vector.shape_cast %100 : vector<16x32xbf16> to vector<1x16x32xbf16>
    tpu.vector_store %arg9[%c2, %c0_32, %c0_33], %103 {strides = array<i32>} : memref<5x16x160xbf16, #tpu.memory_space<vmem>>, vector<1x16x32xbf16>,
    %104 = vector.extract_strided_slice %2 {offsets = [176, 0], sizes = [16, 32], strides = [1, 1]} : vector<400x32xf32> to vector<16x32xf32>
    %105 = vector.broadcast %3 : vector<1x32xf32> to vector<16x32xf32>
    %106 = arith.mulf %104, %105 : vector<16x32xf32>
    %107 = vector.broadcast %4 : vector<1x32xf32> to vector<16x32xf32>
    %108 = arith.addf %106, %107 : vector<16x32xf32>
    %109 = arith.truncf %108 : vector<16x32xf32> to vector<16x32xbf16>
    %c2_34 = arith.constant 2 : index
    %c0_35 = arith.constant 0 : index
    %c32_36 = arith.constant 32 : index
    %110 = vector.load %arg9[%c2_34, %c0_35, %c32_36] : memref<5x16x160xbf16, #tpu.memory_space<vmem>>, vector<1x16x32xbf16>
    %111 = vector.shape_cast %110 : vector<1x16x32xbf16> to vector<16x32xbf16>
    %112 = vector.shape_cast %109 : vector<16x32xbf16> to vector<1x16x32xbf16>
    tpu.vector_store %arg9[%c2_34, %c0_35, %c32_36], %112 {strides = array<i32>} : memref<5x16x160xbf16, #tpu.memory_space<vmem>>, vector<1x16x32xbf16>,
    %113 = vector.extract_strided_slice %2 {offsets = [192, 0], sizes = [16, 32], strides = [1, 1]} : vector<400x32xf32> to vector<16x32xf32>
    %114 = vector.broadcast %3 : vector<1x32xf32> to vector<16x32xf32>
    %115 = arith.mulf %113, %114 : vector<16x32xf32>
    %116 = vector.broadcast %4 : vector<1x32xf32> to vector<16x32xf32>
    %117 = arith.addf %115, %116 : vector<16x32xf32>
    %118 = arith.truncf %117 : vector<16x32xf32> to vector<16x32xbf16>
    %c2_37 = arith.constant 2 : index
    %c0_38 = arith.constant 0 : index
    %c64_39 = arith.constant 64 : index
    %119 = vector.load %arg9[%c2_37, %c0_38, %c64_39] : memref<5x16x160xbf16, #tpu.memory_space<vmem>>, vector<1x16x32xbf16>
    %120 = vector.shape_cast %119 : vector<1x16x32xbf16> to vector<16x32xbf16>
    %121 = vector.shape_cast %118 : vector<16x32xbf16> to vector<1x16x32xbf16>
    tpu.vector_store %arg9[%c2_37, %c0_38, %c64_39], %121 {strides = array<i32>} : memref<5x16x160xbf16, #tpu.memory_space<vmem>>, vector<1x16x32xbf16>,
    %122 = vector.extract_strided_slice %2 {offsets = [208, 0], sizes = [16, 32], strides = [1, 1]} : vector<400x32xf32> to vector<16x32xf32>
    %123 = vector.broadcast %3 : vector<1x32xf32> to vector<16x32xf32>
    %124 = arith.mulf %122, %123 : vector<16x32xf32>
    %125 = vector.broadcast %4 : vector<1x32xf32> to vector<16x32xf32>
    %126 = arith.addf %124, %125 : vector<16x32xf32>
    %127 = arith.truncf %126 : vector<16x32xf32> to vector<16x32xbf16>
    %c2_40 = arith.constant 2 : index
    %c0_41 = arith.constant 0 : index
    %c96_42 = arith.constant 96 : index
    %128 = vector.load %arg9[%c2_40, %c0_41, %c96_42] : memref<5x16x160xbf16, #tpu.memory_space<vmem>>, vector<1x16x32xbf16>
    %129 = vector.shape_cast %128 : vector<1x16x32xbf16> to vector<16x32xbf16>
    %130 = vector.shape_cast %127 : vector<16x32xbf16> to vector<1x16x32xbf16>
    tpu.vector_store %arg9[%c2_40, %c0_41, %c96_42], %130 {strides = array<i32>} : memref<5x16x160xbf16, #tpu.memory_space<vmem>>, vector<1x16x32xbf16>,
    %131 = vector.extract_strided_slice %2 {offsets = [224, 0], sizes = [16, 32], strides = [1, 1]} : vector<400x32xf32> to vector<16x32xf32>
    %132 = vector.broadcast %3 : vector<1x32xf32> to vector<16x32xf32>
    %133 = arith.mulf %131, %132 : vector<16x32xf32>
    %134 = vector.broadcast %4 : vector<1x32xf32> to vector<16x32xf32>
    %135 = arith.addf %133, %134 : vector<16x32xf32>
    %136 = arith.truncf %135 : vector<16x32xf32> to vector<16x32xbf16>
    %c2_43 = arith.constant 2 : index
    %c0_44 = arith.constant 0 : index
    %c128_45 = arith.constant 128 : index
    %137 = vector.load %arg9[%c2_43, %c0_44, %c128_45] : memref<5x16x160xbf16, #tpu.memory_space<vmem>>, vector<1x16x32xbf16>
    %138 = vector.shape_cast %137 : vector<1x16x32xbf16> to vector<16x32xbf16>
    %139 = vector.shape_cast %136 : vector<16x32xbf16> to vector<1x16x32xbf16>
    tpu.vector_store %arg9[%c2_43, %c0_44, %c128_45], %139 {strides = array<i32>} : memref<5x16x160xbf16, #tpu.memory_space<vmem>>, vector<1x16x32xbf16>,
    %140 = vector.extract_strided_slice %2 {offsets = [240, 0], sizes = [16, 32], strides = [1, 1]} : vector<400x32xf32> to vector<16x32xf32>
    %141 = vector.broadcast %3 : vector<1x32xf32> to vector<16x32xf32>
    %142 = arith.mulf %140, %141 : vector<16x32xf32>
    %143 = vector.broadcast %4 : vector<1x32xf32> to vector<16x32xf32>
    %144 = arith.addf %142, %143 : vector<16x32xf32>
    %145 = arith.truncf %144 : vector<16x32xf32> to vector<16x32xbf16>
    %c3 = arith.constant 3 : index
    %c0_46 = arith.constant 0 : index
    %c0_47 = arith.constant 0 : index
    %146 = vector.load %arg9[%c3, %c0_46, %c0_47] : memref<5x16x160xbf16, #tpu.memory_space<vmem>>, vector<1x16x32xbf16>
    %147 = vector.shape_cast %146 : vector<1x16x32xbf16> to vector<16x32xbf16>
    %148 = vector.shape_cast %145 : vector<16x32xbf16> to vector<1x16x32xbf16>
    tpu.vector_store %arg9[%c3, %c0_46, %c0_47], %148 {strides = array<i32>} : memref<5x16x160xbf16, #tpu.memory_space<vmem>>, vector<1x16x32xbf16>,
    %149 = vector.extract_strided_slice %2 {offsets = [256, 0], sizes = [16, 32], strides = [1, 1]} : vector<400x32xf32> to vector<16x32xf32>
    %150 = vector.broadcast %3 : vector<1x32xf32> to vector<16x32xf32>
    %151 = arith.mulf %149, %150 : vector<16x32xf32>
    %152 = vector.broadcast %4 : vector<1x32xf32> to vector<16x32xf32>
    %153 = arith.addf %151, %152 : vector<16x32xf32>
    %154 = arith.truncf %153 : vector<16x32xf32> to vector<16x32xbf16>
    %c3_48 = arith.constant 3 : index
    %c0_49 = arith.constant 0 : index
    %c32_50 = arith.constant 32 : index
    %155 = vector.load %arg9[%c3_48, %c0_49, %c32_50] : memref<5x16x160xbf16, #tpu.memory_space<vmem>>, vector<1x16x32xbf16>
    %156 = vector.shape_cast %155 : vector<1x16x32xbf16> to vector<16x32xbf16>
    %157 = vector.shape_cast %154 : vector<16x32xbf16> to vector<1x16x32xbf16>
    tpu.vector_store %arg9[%c3_48, %c0_49, %c32_50], %157 {strides = array<i32>} : memref<5x16x160xbf16, #tpu.memory_space<vmem>>, vector<1x16x32xbf16>,
    %158 = vector.extract_strided_slice %2 {offsets = [272, 0], sizes = [16, 32], strides = [1, 1]} : vector<400x32xf32> to vector<16x32xf32>
    %159 = vector.broadcast %3 : vector<1x32xf32> to vector<16x32xf32>
    %160 = arith.mulf %158, %159 : vector<16x32xf32>
    %161 = vector.broadcast %4 : vector<1x32xf32> to vector<16x32xf32>
    %162 = arith.addf %160, %161 : vector<16x32xf32>
    %163 = arith.truncf %162 : vector<16x32xf32> to vector<16x32xbf16>
    %c3_51 = arith.constant 3 : index
    %c0_52 = arith.constant 0 : index
    %c64_53 = arith.constant 64 : index
    %164 = vector.load %arg9[%c3_51, %c0_52, %c64_53] : memref<5x16x160xbf16, #tpu.memory_space<vmem>>, vector<1x16x32xbf16>
    %165 = vector.shape_cast %164 : vector<1x16x32xbf16> to vector<16x32xbf16>
    %166 = vector.shape_cast %163 : vector<16x32xbf16> to vector<1x16x32xbf16>
    tpu.vector_store %arg9[%c3_51, %c0_52, %c64_53], %166 {strides = array<i32>} : memref<5x16x160xbf16, #tpu.memory_space<vmem>>, vector<1x16x32xbf16>,
    %167 = vector.extract_strided_slice %2 {offsets = [288, 0], sizes = [16, 32], strides = [1, 1]} : vector<400x32xf32> to vector<16x32xf32>
    %168 = vector.broadcast %3 : vector<1x32xf32> to vector<16x32xf32>
    %169 = arith.mulf %167, %168 : vector<16x32xf32>
    %170 = vector.broadcast %4 : vector<1x32xf32> to vector<16x32xf32>
    %171 = arith.addf %169, %170 : vector<16x32xf32>
    %172 = arith.truncf %171 : vector<16x32xf32> to vector<16x32xbf16>
    %c3_54 = arith.constant 3 : index
    %c0_55 = arith.constant 0 : index
    %c96_56 = arith.constant 96 : index
    %173 = vector.load %arg9[%c3_54, %c0_55, %c96_56] : memref<5x16x160xbf16, #tpu.memory_space<vmem>>, vector<1x16x32xbf16>
    %174 = vector.shape_cast %173 : vector<1x16x32xbf16> to vector<16x32xbf16>
    %175 = vector.shape_cast %172 : vector<16x32xbf16> to vector<1x16x32xbf16>
    tpu.vector_store %arg9[%c3_54, %c0_55, %c96_56], %175 {strides = array<i32>} : memref<5x16x160xbf16, #tpu.memory_space<vmem>>, vector<1x16x32xbf16>,
    %176 = vector.extract_strided_slice %2 {offsets = [304, 0], sizes = [16, 32], strides = [1, 1]} : vector<400x32xf32> to vector<16x32xf32>
    %177 = vector.broadcast %3 : vector<1x32xf32> to vector<16x32xf32>
    %178 = arith.mulf %176, %177 : vector<16x32xf32>
    %179 = vector.broadcast %4 : vector<1x32xf32> to vector<16x32xf32>
    %180 = arith.addf %178, %179 : vector<16x32xf32>
    %181 = arith.truncf %180 : vector<16x32xf32> to vector<16x32xbf16>
    %c3_57 = arith.constant 3 : index
    %c0_58 = arith.constant 0 : index
    %c128_59 = arith.constant 128 : index
    %182 = vector.load %arg9[%c3_57, %c0_58, %c128_59] : memref<5x16x160xbf16, #tpu.memory_space<vmem>>, vector<1x16x32xbf16>
    %183 = vector.shape_cast %182 : vector<1x16x32xbf16> to vector<16x32xbf16>
    %184 = vector.shape_cast %181 : vector<16x32xbf16> to vector<1x16x32xbf16>
    tpu.vector_store %arg9[%c3_57, %c0_58, %c128_59], %184 {strides = array<i32>} : memref<5x16x160xbf16, #tpu.memory_space<vmem>>, vector<1x16x32xbf16>,
    %185 = vector.extract_strided_slice %2 {offsets = [320, 0], sizes = [16, 32], strides = [1, 1]} : vector<400x32xf32> to vector<16x32xf32>
    %186 = vector.broadcast %3 : vector<1x32xf32> to vector<16x32xf32>
    %187 = arith.mulf %185, %186 : vector<16x32xf32>
    %188 = vector.broadcast %4 : vector<1x32xf32> to vector<16x32xf32>
    %189 = arith.addf %187, %188 : vector<16x32xf32>
    %190 = arith.truncf %189 : vector<16x32xf32> to vector<16x32xbf16>
    %c4 = arith.constant 4 : index
    %c0_60 = arith.constant 0 : index
    %c0_61 = arith.constant 0 : index
    %191 = vector.load %arg9[%c4, %c0_60, %c0_61] : memref<5x16x160xbf16, #tpu.memory_space<vmem>>, vector<1x16x32xbf16>
    %192 = vector.shape_cast %191 : vector<1x16x32xbf16> to vector<16x32xbf16>
    %193 = vector.shape_cast %190 : vector<16x32xbf16> to vector<1x16x32xbf16>
    tpu.vector_store %arg9[%c4, %c0_60, %c0_61], %193 {strides = array<i32>} : memref<5x16x160xbf16, #tpu.memory_space<vmem>>, vector<1x16x32xbf16>,
    %194 = vector.extract_strided_slice %2 {offsets = [336, 0], sizes = [16, 32], strides = [1, 1]} : vector<400x32xf32> to vector<16x32xf32>
    %195 = vector.broadcast %3 : vector<1x32xf32> to vector<16x32xf32>
    %196 = arith.mulf %194, %195 : vector<16x32xf32>
    %197 = vector.broadcast %4 : vector<1x32xf32> to vector<16x32xf32>
    %198 = arith.addf %196, %197 : vector<16x32xf32>
    %199 = arith.truncf %198 : vector<16x32xf32> to vector<16x32xbf16>
    %c4_62 = arith.constant 4 : index
    %c0_63 = arith.constant 0 : index
    %c32_64 = arith.constant 32 : index
    %200 = vector.load %arg9[%c4_62, %c0_63, %c32_64] : memref<5x16x160xbf16, #tpu.memory_space<vmem>>, vector<1x16x32xbf16>
    %201 = vector.shape_cast %200 : vector<1x16x32xbf16> to vector<16x32xbf16>
    %202 = vector.shape_cast %199 : vector<16x32xbf16> to vector<1x16x32xbf16>
    tpu.vector_store %arg9[%c4_62, %c0_63, %c32_64], %202 {strides = array<i32>} : memref<5x16x160xbf16, #tpu.memory_space<vmem>>, vector<1x16x32xbf16>,
    %203 = vector.extract_strided_slice %2 {offsets = [352, 0], sizes = [16, 32], strides = [1, 1]} : vector<400x32xf32> to vector<16x32xf32>
    %204 = vector.broadcast %3 : vector<1x32xf32> to vector<16x32xf32>
    %205 = arith.mulf %203, %204 : vector<16x32xf32>
    %206 = vector.broadcast %4 : vector<1x32xf32> to vector<16x32xf32>
    %207 = arith.addf %205, %206 : vector<16x32xf32>
    %208 = arith.truncf %207 : vector<16x32xf32> to vector<16x32xbf16>
    %c4_65 = arith.constant 4 : index
    %c0_66 = arith.constant 0 : index
    %c64_67 = arith.constant 64 : index
    %209 = vector.load %arg9[%c4_65, %c0_66, %c64_67] : memref<5x16x160xbf16, #tpu.memory_space<vmem>>, vector<1x16x32xbf16>
    %210 = vector.shape_cast %209 : vector<1x16x32xbf16> to vector<16x32xbf16>
    %211 = vector.shape_cast %208 : vector<16x32xbf16> to vector<1x16x32xbf16>
    tpu.vector_store %arg9[%c4_65, %c0_66, %c64_67], %211 {strides = array<i32>} : memref<5x16x160xbf16, #tpu.memory_space<vmem>>, vector<1x16x32xbf16>,
    %212 = vector.extract_strided_slice %2 {offsets = [368, 0], sizes = [16, 32], strides = [1, 1]} : vector<400x32xf32> to vector<16x32xf32>
    %213 = vector.broadcast %3 : vector<1x32xf32> to vector<16x32xf32>
    %214 = arith.mulf %212, %213 : vector<16x32xf32>
    %215 = vector.broadcast %4 : vector<1x32xf32> to vector<16x32xf32>
    %216 = arith.addf %214, %215 : vector<16x32xf32>
    %217 = arith.truncf %216 : vector<16x32xf32> to vector<16x32xbf16>
    %c4_68 = arith.constant 4 : index
    %c0_69 = arith.constant 0 : index
    %c96_70 = arith.constant 96 : index
    %218 = vector.load %arg9[%c4_68, %c0_69, %c96_70] : memref<5x16x160xbf16, #tpu.memory_space<vmem>>, vector<1x16x32xbf16>
    %219 = vector.shape_cast %218 : vector<1x16x32xbf16> to vector<16x32xbf16>
    %220 = vector.shape_cast %217 : vector<16x32xbf16> to vector<1x16x32xbf16>
    tpu.vector_store %arg9[%c4_68, %c0_69, %c96_70], %220 {strides = array<i32>} : memref<5x16x160xbf16, #tpu.memory_space<vmem>>, vector<1x16x32xbf16>,
    %221 = vector.extract_strided_slice %2 {offsets = [384, 0], sizes = [16, 32], strides = [1, 1]} : vector<400x32xf32> to vector<16x32xf32>
    %222 = vector.broadcast %3 : vector<1x32xf32> to vector<16x32xf32>
    %223 = arith.mulf %221, %222 : vector<16x32xf32>
    %224 = vector.broadcast %4 : vector<1x32xf32> to vector<16x32xf32>
    %225 = arith.addf %223, %224 : vector<16x32xf32>
    %226 = arith.truncf %225 : vector<16x32xf32> to vector<16x32xbf16>
    %c4_71 = arith.constant 4 : index
    %c0_72 = arith.constant 0 : index
    %c128_73 = arith.constant 128 : index
    %227 = vector.load %arg9[%c4_71, %c0_72, %c128_73] : memref<5x16x160xbf16, #tpu.memory_space<vmem>>, vector<1x16x32xbf16>
    %228 = vector.shape_cast %227 : vector<1x16x32xbf16> to vector<16x32xbf16>
    %229 = vector.shape_cast %226 : vector<16x32xbf16> to vector<1x16x32xbf16>
    tpu.vector_store %arg9[%c4_71, %c0_72, %c128_73], %229 {strides = array<i32>} : memref<5x16x160xbf16, #tpu.memory_space<vmem>>, vector<1x16x32xbf16>,
    %c2_74 = arith.constant 2 : index
    %c0_75 = arith.constant 0 : index
    %230 = vector.load %arg7[%c2_74, %c0_75] : memref<16x128xf32, #tpu.memory_space<vmem>>, vector<1x32xf32>
    %c3_76 = arith.constant 3 : index
    %c0_77 = arith.constant 0 : index
    %231 = vector.load %arg7[%c3_76, %c0_77] : memref<16x128xf32, #tpu.memory_space<vmem>>, vector<1x32xf32>
    %c0_78 = arith.constant 0 : index
    %c0_79 = arith.constant 0 : index
    %c0_80 = arith.constant 0 : index
    %232 = vector.load %arg9[%c0_78, %c0_79, %c0_80] : memref<5x16x160xbf16, #tpu.memory_space<vmem>>, vector<1x16x64xbf16>
    %233 = vector.shape_cast %232 : vector<1x16x64xbf16> to vector<16x64xbf16>
    %c1_81 = arith.constant 1 : index
    %c32_82 = arith.constant 32 : index
    %c0_83 = arith.constant 0 : index
    %234 = vector.load %arg3[%c1_81, %c32_82, %c0_83] : memref<3x96x32xbf16, #tpu.memory_space<vmem>>, vector<1x64x32xbf16>
    %235 = vector.shape_cast %234 : vector<1x64x32xbf16> to vector<64x32xbf16>
    %cst_84 = arith.constant dense<0.000000e+00> : vector<16x32xf32>
    %236 = tpu.matmul %233, %235, %cst_84 {dimension_numbers = #tpu.dot_dimension_numbers<[1], [0], [0], [1], [0, 0, 1, 1], [], []>} : vector<16x64xbf16>, vector<64x32xbf16>, vector<16x32xf32> -> vector<16x32xf32>
    %c1_85 = arith.constant 1 : index
    %c0_86 = arith.constant 0 : index
    %c0_87 = arith.constant 0 : index
    %237 = vector.load %arg9[%c1_85, %c0_86, %c0_87] : memref<5x16x160xbf16, #tpu.memory_space<vmem>>, vector<1x16x64xbf16>
    %238 = vector.shape_cast %237 : vector<1x16x64xbf16> to vector<16x64xbf16>
    %c2_88 = arith.constant 2 : index
    %c32_89 = arith.constant 32 : index
    %c0_90 = arith.constant 0 : index
    %239 = vector.load %arg3[%c2_88, %c32_89, %c0_90] : memref<3x96x32xbf16, #tpu.memory_space<vmem>>, vector<1x64x32xbf16>
    %240 = vector.shape_cast %239 : vector<1x64x32xbf16> to vector<64x32xbf16>
    %cst_91 = arith.constant dense<0.000000e+00> : vector<16x32xf32>
    %241 = tpu.matmul %238, %240, %cst_91 {dimension_numbers = #tpu.dot_dimension_numbers<[1], [0], [0], [1], [0, 0, 1, 1], [], []>} : vector<16x64xbf16>, vector<64x32xbf16>, vector<16x32xf32> -> vector<16x32xf32>
    %242 = arith.addf %236, %241 : vector<16x32xf32>
    %243 = vector.broadcast %230 : vector<1x32xf32> to vector<16x32xf32>
    %244 = arith.mulf %242, %243 : vector<16x32xf32>
    %245 = vector.broadcast %231 : vector<1x32xf32> to vector<16x32xf32>
    %246 = arith.addf %244, %245 : vector<16x32xf32>
    %cst_92 = arith.constant 0.000000e+00 : f32
    %247 = vector.broadcast %cst_92 : f32 to vector<16x32xf32>
    %248 = arith.maximumf %246, %247 : vector<16x32xf32>
    %c0_93 = arith.constant 0 : index
    %c0_94 = arith.constant 0 : index
    %c0_95 = arith.constant 0 : index
    %249 = vector.load %arg9[%c0_93, %c0_94, %c0_95] : memref<5x16x160xbf16, #tpu.memory_space<vmem>>, vector<1x16x96xbf16>
    %250 = vector.shape_cast %249 : vector<1x16x96xbf16> to vector<16x96xbf16>
    %c1_96 = arith.constant 1 : index
    %c0_97 = arith.constant 0 : index
    %c0_98 = arith.constant 0 : index
    %251 = vector.load %arg3[%c1_96, %c0_97, %c0_98] : memref<3x96x32xbf16, #tpu.memory_space<vmem>>, vector<1x96x32xbf16>
    %252 = vector.shape_cast %251 : vector<1x96x32xbf16> to vector<96x32xbf16>
    %cst_99 = arith.constant dense<0.000000e+00> : vector<16x32xf32>
    %253 = tpu.matmul %250, %252, %cst_99 {dimension_numbers = #tpu.dot_dimension_numbers<[1], [0], [0], [1], [0, 0, 1, 1], [], []>} : vector<16x96xbf16>, vector<96x32xbf16>, vector<16x32xf32> -> vector<16x32xf32>
    %c1_100 = arith.constant 1 : index
    %c0_101 = arith.constant 0 : index
    %c0_102 = arith.constant 0 : index
    %254 = vector.load %arg9[%c1_100, %c0_101, %c0_102] : memref<5x16x160xbf16, #tpu.memory_space<vmem>>, vector<1x16x96xbf16>
    %255 = vector.shape_cast %254 : vector<1x16x96xbf16> to vector<16x96xbf16>
    %c2_103 = arith.constant 2 : index
    %c0_104 = arith.constant 0 : index
    %c0_105 = arith.constant 0 : index
    %256 = vector.load %arg3[%c2_103, %c0_104, %c0_105] : memref<3x96x32xbf16, #tpu.memory_space<vmem>>, vector<1x96x32xbf16>
    %257 = vector.shape_cast %256 : vector<1x96x32xbf16> to vector<96x32xbf16>
    %cst_106 = arith.constant dense<0.000000e+00> : vector<16x32xf32>
    %258 = tpu.matmul %255, %257, %cst_106 {dimension_numbers = #tpu.dot_dimension_numbers<[1], [0], [0], [1], [0, 0, 1, 1], [], []>} : vector<16x96xbf16>, vector<96x32xbf16>, vector<16x32xf32> -> vector<16x32xf32>
    %259 = arith.addf %253, %258 : vector<16x32xf32>
    %260 = vector.broadcast %230 : vector<1x32xf32> to vector<16x32xf32>
    %261 = arith.mulf %259, %260 : vector<16x32xf32>
    %262 = vector.broadcast %231 : vector<1x32xf32> to vector<16x32xf32>
    %263 = arith.addf %261, %262 : vector<16x32xf32>
    %cst_107 = arith.constant 0.000000e+00 : f32
    %264 = vector.broadcast %cst_107 : f32 to vector<16x32xf32>
    %265 = arith.maximumf %263, %264 : vector<16x32xf32>
    %266 = arith.maximumf %248, %265 : vector<16x32xf32>
    %c0_108 = arith.constant 0 : index
    %c0_109 = arith.constant 0 : index
    %c0_110 = arith.constant 0 : index
    %267 = vector.load %arg9[%c0_108, %c0_109, %c0_110] : memref<5x16x160xbf16, #tpu.memory_space<vmem>>, vector<1x16x64xbf16>
    %268 = vector.shape_cast %267 : vector<1x16x64xbf16> to vector<16x64xbf16>
    %c0_111 = arith.constant 0 : index
    %c32_112 = arith.constant 32 : index
    %c0_113 = arith.constant 0 : index
    %269 = vector.load %arg3[%c0_111, %c32_112, %c0_113] : memref<3x96x32xbf16, #tpu.memory_space<vmem>>, vector<1x64x32xbf16>
    %270 = vector.shape_cast %269 : vector<1x64x32xbf16> to vector<64x32xbf16>
    %cst_114 = arith.constant dense<0.000000e+00> : vector<16x32xf32>
    %271 = tpu.matmul %268, %270, %cst_114 {dimension_numbers = #tpu.dot_dimension_numbers<[1], [0], [0], [1], [0, 0, 1, 1], [], []>} : vector<16x64xbf16>, vector<64x32xbf16>, vector<16x32xf32> -> vector<16x32xf32>
    %c1_115 = arith.constant 1 : index
    %c0_116 = arith.constant 0 : index
    %c0_117 = arith.constant 0 : index
    %272 = vector.load %arg9[%c1_115, %c0_116, %c0_117] : memref<5x16x160xbf16, #tpu.memory_space<vmem>>, vector<1x16x64xbf16>
    %273 = vector.shape_cast %272 : vector<1x16x64xbf16> to vector<16x64xbf16>
    %c1_118 = arith.constant 1 : index
    %c32_119 = arith.constant 32 : index
    %c0_120 = arith.constant 0 : index
    %274 = vector.load %arg3[%c1_118, %c32_119, %c0_120] : memref<3x96x32xbf16, #tpu.memory_space<vmem>>, vector<1x64x32xbf16>
    %275 = vector.shape_cast %274 : vector<1x64x32xbf16> to vector<64x32xbf16>
    %cst_121 = arith.constant dense<0.000000e+00> : vector<16x32xf32>
    %276 = tpu.matmul %273, %275, %cst_121 {dimension_numbers = #tpu.dot_dimension_numbers<[1], [0], [0], [1], [0, 0, 1, 1], [], []>} : vector<16x64xbf16>, vector<64x32xbf16>, vector<16x32xf32> -> vector<16x32xf32>
    %277 = arith.addf %271, %276 : vector<16x32xf32>
    %c2_122 = arith.constant 2 : index
    %c0_123 = arith.constant 0 : index
    %c0_124 = arith.constant 0 : index
    %278 = vector.load %arg9[%c2_122, %c0_123, %c0_124] : memref<5x16x160xbf16, #tpu.memory_space<vmem>>, vector<1x16x64xbf16>
    %279 = vector.shape_cast %278 : vector<1x16x64xbf16> to vector<16x64xbf16>
    %c2_125 = arith.constant 2 : index
    %c32_126 = arith.constant 32 : index
    %c0_127 = arith.constant 0 : index
    %280 = vector.load %arg3[%c2_125, %c32_126, %c0_127] : memref<3x96x32xbf16, #tpu.memory_space<vmem>>, vector<1x64x32xbf16>
    %281 = vector.shape_cast %280 : vector<1x64x32xbf16> to vector<64x32xbf16>
    %cst_128 = arith.constant dense<0.000000e+00> : vector<16x32xf32>
    %282 = tpu.matmul %279, %281, %cst_128 {dimension_numbers = #tpu.dot_dimension_numbers<[1], [0], [0], [1], [0, 0, 1, 1], [], []>} : vector<16x64xbf16>, vector<64x32xbf16>, vector<16x32xf32> -> vector<16x32xf32>
    %283 = arith.addf %277, %282 : vector<16x32xf32>
    %284 = vector.broadcast %230 : vector<1x32xf32> to vector<16x32xf32>
    %285 = arith.mulf %283, %284 : vector<16x32xf32>
    %286 = vector.broadcast %231 : vector<1x32xf32> to vector<16x32xf32>
    %287 = arith.addf %285, %286 : vector<16x32xf32>
    %cst_129 = arith.constant 0.000000e+00 : f32
    %288 = vector.broadcast %cst_129 : f32 to vector<16x32xf32>
    %289 = arith.maximumf %287, %288 : vector<16x32xf32>
    %290 = arith.maximumf %266, %289 : vector<16x32xf32>
    %c0_130 = arith.constant 0 : index
    %c0_131 = arith.constant 0 : index
    %c0_132 = arith.constant 0 : index
    %291 = vector.load %arg9[%c0_130, %c0_131, %c0_132] : memref<5x16x160xbf16, #tpu.memory_space<vmem>>, vector<1x16x96xbf16>
    %292 = vector.shape_cast %291 : vector<1x16x96xbf16> to vector<16x96xbf16>
    %c0_133 = arith.constant 0 : index
    %c0_134 = arith.constant 0 : index
    %c0_135 = arith.constant 0 : index
    %293 = vector.load %arg3[%c0_133, %c0_134, %c0_135] : memref<3x96x32xbf16, #tpu.memory_space<vmem>>, vector<1x96x32xbf16>
    %294 = vector.shape_cast %293 : vector<1x96x32xbf16> to vector<96x32xbf16>
    %cst_136 = arith.constant dense<0.000000e+00> : vector<16x32xf32>
    %295 = tpu.matmul %292, %294, %cst_136 {dimension_numbers = #tpu.dot_dimension_numbers<[1], [0], [0], [1], [0, 0, 1, 1], [], []>} : vector<16x96xbf16>, vector<96x32xbf16>, vector<16x32xf32> -> vector<16x32xf32>
    %c1_137 = arith.constant 1 : index
    %c0_138 = arith.constant 0 : index
    %c0_139 = arith.constant 0 : index
    %296 = vector.load %arg9[%c1_137, %c0_138, %c0_139] : memref<5x16x160xbf16, #tpu.memory_space<vmem>>, vector<1x16x96xbf16>
    %297 = vector.shape_cast %296 : vector<1x16x96xbf16> to vector<16x96xbf16>
    %c1_140 = arith.constant 1 : index
    %c0_141 = arith.constant 0 : index
    %c0_142 = arith.constant 0 : index
    %298 = vector.load %arg3[%c1_140, %c0_141, %c0_142] : memref<3x96x32xbf16, #tpu.memory_space<vmem>>, vector<1x96x32xbf16>
    %299 = vector.shape_cast %298 : vector<1x96x32xbf16> to vector<96x32xbf16>
    %cst_143 = arith.constant dense<0.000000e+00> : vector<16x32xf32>
    %300 = tpu.matmul %297, %299, %cst_143 {dimension_numbers = #tpu.dot_dimension_numbers<[1], [0], [0], [1], [0, 0, 1, 1], [], []>} : vector<16x96xbf16>, vector<96x32xbf16>, vector<16x32xf32> -> vector<16x32xf32>
    %301 = arith.addf %295, %300 : vector<16x32xf32>
    %c2_144 = arith.constant 2 : index
    %c0_145 = arith.constant 0 : index
    %c0_146 = arith.constant 0 : index
    %302 = vector.load %arg9[%c2_144, %c0_145, %c0_146] : memref<5x16x160xbf16, #tpu.memory_space<vmem>>, vector<1x16x96xbf16>
    %303 = vector.shape_cast %302 : vector<1x16x96xbf16> to vector<16x96xbf16>
    %c2_147 = arith.constant 2 : index
    %c0_148 = arith.constant 0 : index
    %c0_149 = arith.constant 0 : index
    %304 = vector.load %arg3[%c2_147, %c0_148, %c0_149] : memref<3x96x32xbf16, #tpu.memory_space<vmem>>, vector<1x96x32xbf16>
    %305 = vector.shape_cast %304 : vector<1x96x32xbf16> to vector<96x32xbf16>
    %cst_150 = arith.constant dense<0.000000e+00> : vector<16x32xf32>
    %306 = tpu.matmul %303, %305, %cst_150 {dimension_numbers = #tpu.dot_dimension_numbers<[1], [0], [0], [1], [0, 0, 1, 1], [], []>} : vector<16x96xbf16>, vector<96x32xbf16>, vector<16x32xf32> -> vector<16x32xf32>
    %307 = arith.addf %301, %306 : vector<16x32xf32>
    %308 = vector.broadcast %230 : vector<1x32xf32> to vector<16x32xf32>
    %309 = arith.mulf %307, %308 : vector<16x32xf32>
    %310 = vector.broadcast %231 : vector<1x32xf32> to vector<16x32xf32>
    %311 = arith.addf %309, %310 : vector<16x32xf32>
    %cst_151 = arith.constant 0.000000e+00 : f32
    %312 = vector.broadcast %cst_151 : f32 to vector<16x32xf32>
    %313 = arith.maximumf %311, %312 : vector<16x32xf32>
    %314 = arith.maximumf %290, %313 : vector<16x32xf32>
    %315 = arith.truncf %314 : vector<16x32xf32> to vector<16x32xbf16>
    %c0_152 = arith.constant 0 : index
    %c0_153 = arith.constant 0 : index
    %c0_154 = arith.constant 0 : index
    %316 = vector.load %arg10[%c0_152, %c0_153, %c0_154] : memref<2x16x64xbf16, #tpu.memory_space<vmem>>, vector<1x16x32xbf16>
    %317 = vector.shape_cast %316 : vector<1x16x32xbf16> to vector<16x32xbf16>
    %318 = vector.shape_cast %315 : vector<16x32xbf16> to vector<1x16x32xbf16>
    tpu.vector_store %arg10[%c0_152, %c0_153, %c0_154], %318 {strides = array<i32>} : memref<2x16x64xbf16, #tpu.memory_space<vmem>>, vector<1x16x32xbf16>,
    %c0_155 = arith.constant 0 : index
    %c0_156 = arith.constant 0 : index
    %c32_157 = arith.constant 32 : index
    %319 = vector.load %arg9[%c0_155, %c0_156, %c32_157] : memref<5x16x160xbf16, #tpu.memory_space<vmem>>, vector<1x16x96xbf16>
    %320 = vector.shape_cast %319 : vector<1x16x96xbf16> to vector<16x96xbf16>
    %c1_158 = arith.constant 1 : index
    %c0_159 = arith.constant 0 : index
    %c0_160 = arith.constant 0 : index
    %321 = vector.load %arg3[%c1_158, %c0_159, %c0_160] : memref<3x96x32xbf16, #tpu.memory_space<vmem>>, vector<1x96x32xbf16>
    %322 = vector.shape_cast %321 : vector<1x96x32xbf16> to vector<96x32xbf16>
    %cst_161 = arith.constant dense<0.000000e+00> : vector<16x32xf32>
    %323 = tpu.matmul %320, %322, %cst_161 {dimension_numbers = #tpu.dot_dimension_numbers<[1], [0], [0], [1], [0, 0, 1, 1], [], []>} : vector<16x96xbf16>, vector<96x32xbf16>, vector<16x32xf32> -> vector<16x32xf32>
    %c1_162 = arith.constant 1 : index
    %c0_163 = arith.constant 0 : index
    %c32_164 = arith.constant 32 : index
    %324 = vector.load %arg9[%c1_162, %c0_163, %c32_164] : memref<5x16x160xbf16, #tpu.memory_space<vmem>>, vector<1x16x96xbf16>
    %325 = vector.shape_cast %324 : vector<1x16x96xbf16> to vector<16x96xbf16>
    %c2_165 = arith.constant 2 : index
    %c0_166 = arith.constant 0 : index
    %c0_167 = arith.constant 0 : index
    %326 = vector.load %arg3[%c2_165, %c0_166, %c0_167] : memref<3x96x32xbf16, #tpu.memory_space<vmem>>, vector<1x96x32xbf16>
    %327 = vector.shape_cast %326 : vector<1x96x32xbf16> to vector<96x32xbf16>
    %cst_168 = arith.constant dense<0.000000e+00> : vector<16x32xf32>
    %328 = tpu.matmul %325, %327, %cst_168 {dimension_numbers = #tpu.dot_dimension_numbers<[1], [0], [0], [1], [0, 0, 1, 1], [], []>} : vector<16x96xbf16>, vector<96x32xbf16>, vector<16x32xf32> -> vector<16x32xf32>
    %329 = arith.addf %323, %328 : vector<16x32xf32>
    %330 = vector.broadcast %230 : vector<1x32xf32> to vector<16x32xf32>
    %331 = arith.mulf %329, %330 : vector<16x32xf32>
    %332 = vector.broadcast %231 : vector<1x32xf32> to vector<16x32xf32>
    %333 = arith.addf %331, %332 : vector<16x32xf32>
    %cst_169 = arith.constant 0.000000e+00 : f32
    %334 = vector.broadcast %cst_169 : f32 to vector<16x32xf32>
    %335 = arith.maximumf %333, %334 : vector<16x32xf32>
    %c0_170 = arith.constant 0 : index
    %c0_171 = arith.constant 0 : index
    %c64_172 = arith.constant 64 : index
    %336 = vector.load %arg9[%c0_170, %c0_171, %c64_172] : memref<5x16x160xbf16, #tpu.memory_space<vmem>>, vector<1x16x96xbf16>
    %337 = vector.shape_cast %336 : vector<1x16x96xbf16> to vector<16x96xbf16>
    %c1_173 = arith.constant 1 : index
    %c0_174 = arith.constant 0 : index
    %c0_175 = arith.constant 0 : index
    %338 = vector.load %arg3[%c1_173, %c0_174, %c0_175] : memref<3x96x32xbf16, #tpu.memory_space<vmem>>, vector<1x96x32xbf16>
    %339 = vector.shape_cast %338 : vector<1x96x32xbf16> to vector<96x32xbf16>
    %cst_176 = arith.constant dense<0.000000e+00> : vector<16x32xf32>
    %340 = tpu.matmul %337, %339, %cst_176 {dimension_numbers = #tpu.dot_dimension_numbers<[1], [0], [0], [1], [0, 0, 1, 1], [], []>} : vector<16x96xbf16>, vector<96x32xbf16>, vector<16x32xf32> -> vector<16x32xf32>
    %c1_177 = arith.constant 1 : index
    %c0_178 = arith.constant 0 : index
    %c64_179 = arith.constant 64 : index
    %341 = vector.load %arg9[%c1_177, %c0_178, %c64_179] : memref<5x16x160xbf16, #tpu.memory_space<vmem>>, vector<1x16x96xbf16>
    %342 = vector.shape_cast %341 : vector<1x16x96xbf16> to vector<16x96xbf16>
    %c2_180 = arith.constant 2 : index
    %c0_181 = arith.constant 0 : index
    %c0_182 = arith.constant 0 : index
    %343 = vector.load %arg3[%c2_180, %c0_181, %c0_182] : memref<3x96x32xbf16, #tpu.memory_space<vmem>>, vector<1x96x32xbf16>
    %344 = vector.shape_cast %343 : vector<1x96x32xbf16> to vector<96x32xbf16>
    %cst_183 = arith.constant dense<0.000000e+00> : vector<16x32xf32>
    %345 = tpu.matmul %342, %344, %cst_183 {dimension_numbers = #tpu.dot_dimension_numbers<[1], [0], [0], [1], [0, 0, 1, 1], [], []>} : vector<16x96xbf16>, vector<96x32xbf16>, vector<16x32xf32> -> vector<16x32xf32>
    %346 = arith.addf %340, %345 : vector<16x32xf32>
    %347 = vector.broadcast %230 : vector<1x32xf32> to vector<16x32xf32>
    %348 = arith.mulf %346, %347 : vector<16x32xf32>
    %349 = vector.broadcast %231 : vector<1x32xf32> to vector<16x32xf32>
    %350 = arith.addf %348, %349 : vector<16x32xf32>
    %cst_184 = arith.constant 0.000000e+00 : f32
    %351 = vector.broadcast %cst_184 : f32 to vector<16x32xf32>
    %352 = arith.maximumf %350, %351 : vector<16x32xf32>
    %353 = arith.maximumf %335, %352 : vector<16x32xf32>
    %c0_185 = arith.constant 0 : index
    %c0_186 = arith.constant 0 : index
    %c32_187 = arith.constant 32 : index
    %354 = vector.load %arg9[%c0_185, %c0_186, %c32_187] : memref<5x16x160xbf16, #tpu.memory_space<vmem>>, vector<1x16x96xbf16>
    %355 = vector.shape_cast %354 : vector<1x16x96xbf16> to vector<16x96xbf16>
    %c0_188 = arith.constant 0 : index
    %c0_189 = arith.constant 0 : index
    %c0_190 = arith.constant 0 : index
    %356 = vector.load %arg3[%c0_188, %c0_189, %c0_190] : memref<3x96x32xbf16, #tpu.memory_space<vmem>>, vector<1x96x32xbf16>
    %357 = vector.shape_cast %356 : vector<1x96x32xbf16> to vector<96x32xbf16>
    %cst_191 = arith.constant dense<0.000000e+00> : vector<16x32xf32>
    %358 = tpu.matmul %355, %357, %cst_191 {dimension_numbers = #tpu.dot_dimension_numbers<[1], [0], [0], [1], [0, 0, 1, 1], [], []>} : vector<16x96xbf16>, vector<96x32xbf16>, vector<16x32xf32> -> vector<16x32xf32>
    %c1_192 = arith.constant 1 : index
    %c0_193 = arith.constant 0 : index
    %c32_194 = arith.constant 32 : index
    %359 = vector.load %arg9[%c1_192, %c0_193, %c32_194] : memref<5x16x160xbf16, #tpu.memory_space<vmem>>, vector<1x16x96xbf16>
    %360 = vector.shape_cast %359 : vector<1x16x96xbf16> to vector<16x96xbf16>
    %c1_195 = arith.constant 1 : index
    %c0_196 = arith.constant 0 : index
    %c0_197 = arith.constant 0 : index
    %361 = vector.load %arg3[%c1_195, %c0_196, %c0_197] : memref<3x96x32xbf16, #tpu.memory_space<vmem>>, vector<1x96x32xbf16>
    %362 = vector.shape_cast %361 : vector<1x96x32xbf16> to vector<96x32xbf16>
    %cst_198 = arith.constant dense<0.000000e+00> : vector<16x32xf32>
    %363 = tpu.matmul %360, %362, %cst_198 {dimension_numbers = #tpu.dot_dimension_numbers<[1], [0], [0], [1], [0, 0, 1, 1], [], []>} : vector<16x96xbf16>, vector<96x32xbf16>, vector<16x32xf32> -> vector<16x32xf32>
    %364 = arith.addf %358, %363 : vector<16x32xf32>
    %c2_199 = arith.constant 2 : index
    %c0_200 = arith.constant 0 : index
    %c32_201 = arith.constant 32 : index
    %365 = vector.load %arg9[%c2_199, %c0_200, %c32_201] : memref<5x16x160xbf16, #tpu.memory_space<vmem>>, vector<1x16x96xbf16>
    %366 = vector.shape_cast %365 : vector<1x16x96xbf16> to vector<16x96xbf16>
    %c2_202 = arith.constant 2 : index
    %c0_203 = arith.constant 0 : index
    %c0_204 = arith.constant 0 : index
    %367 = vector.load %arg3[%c2_202, %c0_203, %c0_204] : memref<3x96x32xbf16, #tpu.memory_space<vmem>>, vector<1x96x32xbf16>
    %368 = vector.shape_cast %367 : vector<1x96x32xbf16> to vector<96x32xbf16>
    %cst_205 = arith.constant dense<0.000000e+00> : vector<16x32xf32>
    %369 = tpu.matmul %366, %368, %cst_205 {dimension_numbers = #tpu.dot_dimension_numbers<[1], [0], [0], [1], [0, 0, 1, 1], [], []>} : vector<16x96xbf16>, vector<96x32xbf16>, vector<16x32xf32> -> vector<16x32xf32>
    %370 = arith.addf %364, %369 : vector<16x32xf32>
    %371 = vector.broadcast %230 : vector<1x32xf32> to vector<16x32xf32>
    %372 = arith.mulf %370, %371 : vector<16x32xf32>
    %373 = vector.broadcast %231 : vector<1x32xf32> to vector<16x32xf32>
    %374 = arith.addf %372, %373 : vector<16x32xf32>
    %cst_206 = arith.constant 0.000000e+00 : f32
    %375 = vector.broadcast %cst_206 : f32 to vector<16x32xf32>
    %376 = arith.maximumf %374, %375 : vector<16x32xf32>
    %377 = arith.maximumf %353, %376 : vector<16x32xf32>
    %c0_207 = arith.constant 0 : index
    %c0_208 = arith.constant 0 : index
    %c64_209 = arith.constant 64 : index
    %378 = vector.load %arg9[%c0_207, %c0_208, %c64_209] : memref<5x16x160xbf16, #tpu.memory_space<vmem>>, vector<1x16x96xbf16>
    %379 = vector.shape_cast %378 : vector<1x16x96xbf16> to vector<16x96xbf16>
    %c0_210 = arith.constant 0 : index
    %c0_211 = arith.constant 0 : index
    %c0_212 = arith.constant 0 : index
    %380 = vector.load %arg3[%c0_210, %c0_211, %c0_212] : memref<3x96x32xbf16, #tpu.memory_space<vmem>>, vector<1x96x32xbf16>
    %381 = vector.shape_cast %380 : vector<1x96x32xbf16> to vector<96x32xbf16>
    %cst_213 = arith.constant dense<0.000000e+00> : vector<16x32xf32>
    %382 = tpu.matmul %379, %381, %cst_213 {dimension_numbers = #tpu.dot_dimension_numbers<[1], [0], [0], [1], [0, 0, 1, 1], [], []>} : vector<16x96xbf16>, vector<96x32xbf16>, vector<16x32xf32> -> vector<16x32xf32>
    %c1_214 = arith.constant 1 : index
    %c0_215 = arith.constant 0 : index
    %c64_216 = arith.constant 64 : index
    %383 = vector.load %arg9[%c1_214, %c0_215, %c64_216] : memref<5x16x160xbf16, #tpu.memory_space<vmem>>, vector<1x16x96xbf16>
    %384 = vector.shape_cast %383 : vector<1x16x96xbf16> to vector<16x96xbf16>
    %c1_217 = arith.constant 1 : index
    %c0_218 = arith.constant 0 : index
    %c0_219 = arith.constant 0 : index
    %385 = vector.load %arg3[%c1_217, %c0_218, %c0_219] : memref<3x96x32xbf16, #tpu.memory_space<vmem>>, vector<1x96x32xbf16>
    %386 = vector.shape_cast %385 : vector<1x96x32xbf16> to vector<96x32xbf16>
    %cst_220 = arith.constant dense<0.000000e+00> : vector<16x32xf32>
    %387 = tpu.matmul %384, %386, %cst_220 {dimension_numbers = #tpu.dot_dimension_numbers<[1], [0], [0], [1], [0, 0, 1, 1], [], []>} : vector<16x96xbf16>, vector<96x32xbf16>, vector<16x32xf32> -> vector<16x32xf32>
    %388 = arith.addf %382, %387 : vector<16x32xf32>
    %c2_221 = arith.constant 2 : index
    %c0_222 = arith.constant 0 : index
    %c64_223 = arith.constant 64 : index
    %389 = vector.load %arg9[%c2_221, %c0_222, %c64_223] : memref<5x16x160xbf16, #tpu.memory_space<vmem>>, vector<1x16x96xbf16>
    %390 = vector.shape_cast %389 : vector<1x16x96xbf16> to vector<16x96xbf16>
    %c2_224 = arith.constant 2 : index
    %c0_225 = arith.constant 0 : index
    %c0_226 = arith.constant 0 : index
    %391 = vector.load %arg3[%c2_224, %c0_225, %c0_226] : memref<3x96x32xbf16, #tpu.memory_space<vmem>>, vector<1x96x32xbf16>
    %392 = vector.shape_cast %391 : vector<1x96x32xbf16> to vector<96x32xbf16>
    %cst_227 = arith.constant dense<0.000000e+00> : vector<16x32xf32>
    %393 = tpu.matmul %390, %392, %cst_227 {dimension_numbers = #tpu.dot_dimension_numbers<[1], [0], [0], [1], [0, 0, 1, 1], [], []>} : vector<16x96xbf16>, vector<96x32xbf16>, vector<16x32xf32> -> vector<16x32xf32>
    %394 = arith.addf %388, %393 : vector<16x32xf32>
    %395 = vector.broadcast %230 : vector<1x32xf32> to vector<16x32xf32>
    %396 = arith.mulf %394, %395 : vector<16x32xf32>
    %397 = vector.broadcast %231 : vector<1x32xf32> to vector<16x32xf32>
    %398 = arith.addf %396, %397 : vector<16x32xf32>
    %cst_228 = arith.constant 0.000000e+00 : f32
    %399 = vector.broadcast %cst_228 : f32 to vector<16x32xf32>
    %400 = arith.maximumf %398, %399 : vector<16x32xf32>
    %401 = arith.maximumf %377, %400 : vector<16x32xf32>
    %402 = arith.truncf %401 : vector<16x32xf32> to vector<16x32xbf16>
    %c0_229 = arith.constant 0 : index
    %c0_230 = arith.constant 0 : index
    %c32_231 = arith.constant 32 : index
    %403 = vector.load %arg10[%c0_229, %c0_230, %c32_231] : memref<2x16x64xbf16, #tpu.memory_space<vmem>>, vector<1x16x32xbf16>
    %404 = vector.shape_cast %403 : vector<1x16x32xbf16> to vector<16x32xbf16>
    %405 = vector.shape_cast %402 : vector<16x32xbf16> to vector<1x16x32xbf16>
    tpu.vector_store %arg10[%c0_229, %c0_230, %c32_231], %405 {strides = array<i32>} : memref<2x16x64xbf16, #tpu.memory_space<vmem>>, vector<1x16x32xbf16>,
    %c1_232 = arith.constant 1 : index
    %c0_233 = arith.constant 0 : index
    %c0_234 = arith.constant 0 : index
    %406 = vector.load %arg9[%c1_232, %c0_233, %c0_234] : memref<5x16x160xbf16, #tpu.memory_space<vmem>>, vector<1x16x64xbf16>
    %407 = vector.shape_cast %406 : vector<1x16x64xbf16> to vector<16x64xbf16>
    %c0_235 = arith.constant 0 : index
    %c32_236 = arith.constant 32 : index
    %c0_237 = arith.constant 0 : index
    %408 = vector.load %arg3[%c0_235, %c32_236, %c0_237] : memref<3x96x32xbf16, #tpu.memory_space<vmem>>, vector<1x64x32xbf16>
    %409 = vector.shape_cast %408 : vector<1x64x32xbf16> to vector<64x32xbf16>
    %cst_238 = arith.constant dense<0.000000e+00> : vector<16x32xf32>
    %410 = tpu.matmul %407, %409, %cst_238 {dimension_numbers = #tpu.dot_dimension_numbers<[1], [0], [0], [1], [0, 0, 1, 1], [], []>} : vector<16x64xbf16>, vector<64x32xbf16>, vector<16x32xf32> -> vector<16x32xf32>
    %c2_239 = arith.constant 2 : index
    %c0_240 = arith.constant 0 : index
    %c0_241 = arith.constant 0 : index
    %411 = vector.load %arg9[%c2_239, %c0_240, %c0_241] : memref<5x16x160xbf16, #tpu.memory_space<vmem>>, vector<1x16x64xbf16>
    %412 = vector.shape_cast %411 : vector<1x16x64xbf16> to vector<16x64xbf16>
    %c1_242 = arith.constant 1 : index
    %c32_243 = arith.constant 32 : index
    %c0_244 = arith.constant 0 : index
    %413 = vector.load %arg3[%c1_242, %c32_243, %c0_244] : memref<3x96x32xbf16, #tpu.memory_space<vmem>>, vector<1x64x32xbf16>
    %414 = vector.shape_cast %413 : vector<1x64x32xbf16> to vector<64x32xbf16>
    %cst_245 = arith.constant dense<0.000000e+00> : vector<16x32xf32>
    %415 = tpu.matmul %412, %414, %cst_245 {dimension_numbers = #tpu.dot_dimension_numbers<[1], [0], [0], [1], [0, 0, 1, 1], [], []>} : vector<16x64xbf16>, vector<64x32xbf16>, vector<16x32xf32> -> vector<16x32xf32>
    %416 = arith.addf %410, %415 : vector<16x32xf32>
    %c3_246 = arith.constant 3 : index
    %c0_247 = arith.constant 0 : index
    %c0_248 = arith.constant 0 : index
    %417 = vector.load %arg9[%c3_246, %c0_247, %c0_248] : memref<5x16x160xbf16, #tpu.memory_space<vmem>>, vector<1x16x64xbf16>
    %418 = vector.shape_cast %417 : vector<1x16x64xbf16> to vector<16x64xbf16>
    %c2_249 = arith.constant 2 : index
    %c32_250 = arith.constant 32 : index
    %c0_251 = arith.constant 0 : index
    %419 = vector.load %arg3[%c2_249, %c32_250, %c0_251] : memref<3x96x32xbf16, #tpu.memory_space<vmem>>, vector<1x64x32xbf16>
    %420 = vector.shape_cast %419 : vector<1x64x32xbf16> to vector<64x32xbf16>
    %cst_252 = arith.constant dense<0.000000e+00> : vector<16x32xf32>
    %421 = tpu.matmul %418, %420, %cst_252 {dimension_numbers = #tpu.dot_dimension_numbers<[1], [0], [0], [1], [0, 0, 1, 1], [], []>} : vector<16x64xbf16>, vector<64x32xbf16>, vector<16x32xf32> -> vector<16x32xf32>
    %422 = arith.addf %416, %421 : vector<16x32xf32>
    %423 = vector.broadcast %230 : vector<1x32xf32> to vector<16x32xf32>
    %424 = arith.mulf %422, %423 : vector<16x32xf32>
    %425 = vector.broadcast %231 : vector<1x32xf32> to vector<16x32xf32>
    %426 = arith.addf %424, %425 : vector<16x32xf32>
    %cst_253 = arith.constant 0.000000e+00 : f32
    %427 = vector.broadcast %cst_253 : f32 to vector<16x32xf32>
    %428 = arith.maximumf %426, %427 : vector<16x32xf32>
    %c1_254 = arith.constant 1 : index
    %c0_255 = arith.constant 0 : index
    %c0_256 = arith.constant 0 : index
    %429 = vector.load %arg9[%c1_254, %c0_255, %c0_256] : memref<5x16x160xbf16, #tpu.memory_space<vmem>>, vector<1x16x96xbf16>
    %430 = vector.shape_cast %429 : vector<1x16x96xbf16> to vector<16x96xbf16>
    %c0_257 = arith.constant 0 : index
    %c0_258 = arith.constant 0 : index
    %c0_259 = arith.constant 0 : index
    %431 = vector.load %arg3[%c0_257, %c0_258, %c0_259] : memref<3x96x32xbf16, #tpu.memory_space<vmem>>, vector<1x96x32xbf16>
    %432 = vector.shape_cast %431 : vector<1x96x32xbf16> to vector<96x32xbf16>
    %cst_260 = arith.constant dense<0.000000e+00> : vector<16x32xf32>
    %433 = tpu.matmul %430, %432, %cst_260 {dimension_numbers = #tpu.dot_dimension_numbers<[1], [0], [0], [1], [0, 0, 1, 1], [], []>} : vector<16x96xbf16>, vector<96x32xbf16>, vector<16x32xf32> -> vector<16x32xf32>
    %c2_261 = arith.constant 2 : index
    %c0_262 = arith.constant 0 : index
    %c0_263 = arith.constant 0 : index
    %434 = vector.load %arg9[%c2_261, %c0_262, %c0_263] : memref<5x16x160xbf16, #tpu.memory_space<vmem>>, vector<1x16x96xbf16>
    %435 = vector.shape_cast %434 : vector<1x16x96xbf16> to vector<16x96xbf16>
    %c1_264 = arith.constant 1 : index
    %c0_265 = arith.constant 0 : index
    %c0_266 = arith.constant 0 : index
    %436 = vector.load %arg3[%c1_264, %c0_265, %c0_266] : memref<3x96x32xbf16, #tpu.memory_space<vmem>>, vector<1x96x32xbf16>
    %437 = vector.shape_cast %436 : vector<1x96x32xbf16> to vector<96x32xbf16>
    %cst_267 = arith.constant dense<0.000000e+00> : vector<16x32xf32>
    %438 = tpu.matmul %435, %437, %cst_267 {dimension_numbers = #tpu.dot_dimension_numbers<[1], [0], [0], [1], [0, 0, 1, 1], [], []>} : vector<16x96xbf16>, vector<96x32xbf16>, vector<16x32xf32> -> vector<16x32xf32>
    %439 = arith.addf %433, %438 : vector<16x32xf32>
    %c3_268 = arith.constant 3 : index
    %c0_269 = arith.constant 0 : index
    %c0_270 = arith.constant 0 : index
    %440 = vector.load %arg9[%c3_268, %c0_269, %c0_270] : memref<5x16x160xbf16, #tpu.memory_space<vmem>>, vector<1x16x96xbf16>
    %441 = vector.shape_cast %440 : vector<1x16x96xbf16> to vector<16x96xbf16>
    %c2_271 = arith.constant 2 : index
    %c0_272 = arith.constant 0 : index
    %c0_273 = arith.constant 0 : index
    %442 = vector.load %arg3[%c2_271, %c0_272, %c0_273] : memref<3x96x32xbf16, #tpu.memory_space<vmem>>, vector<1x96x32xbf16>
    %443 = vector.shape_cast %442 : vector<1x96x32xbf16> to vector<96x32xbf16>
    %cst_274 = arith.constant dense<0.000000e+00> : vector<16x32xf32>
    %444 = tpu.matmul %441, %443, %cst_274 {dimension_numbers = #tpu.dot_dimension_numbers<[1], [0], [0], [1], [0, 0, 1, 1], [], []>} : vector<16x96xbf16>, vector<96x32xbf16>, vector<16x32xf32> -> vector<16x32xf32>
    %445 = arith.addf %439, %444 : vector<16x32xf32>
    %446 = vector.broadcast %230 : vector<1x32xf32> to vector<16x32xf32>
    %447 = arith.mulf %445, %446 : vector<16x32xf32>
    %448 = vector.broadcast %231 : vector<1x32xf32> to vector<16x32xf32>
    %449 = arith.addf %447, %448 : vector<16x32xf32>
    %cst_275 = arith.constant 0.000000e+00 : f32
    %450 = vector.broadcast %cst_275 : f32 to vector<16x32xf32>
    %451 = arith.maximumf %449, %450 : vector<16x32xf32>
    %452 = arith.maximumf %428, %451 : vector<16x32xf32>
    %c2_276 = arith.constant 2 : index
    %c0_277 = arith.constant 0 : index
    %c0_278 = arith.constant 0 : index
    %453 = vector.load %arg9[%c2_276, %c0_277, %c0_278] : memref<5x16x160xbf16, #tpu.memory_space<vmem>>, vector<1x16x64xbf16>
    %454 = vector.shape_cast %453 : vector<1x16x64xbf16> to vector<16x64xbf16>
    %c0_279 = arith.constant 0 : index
    %c32_280 = arith.constant 32 : index
    %c0_281 = arith.constant 0 : index
    %455 = vector.load %arg3[%c0_279, %c32_280, %c0_281] : memref<3x96x32xbf16, #tpu.memory_space<vmem>>, vector<1x64x32xbf16>
    %456 = vector.shape_cast %455 : vector<1x64x32xbf16> to vector<64x32xbf16>
    %cst_282 = arith.constant dense<0.000000e+00> : vector<16x32xf32>
    %457 = tpu.matmul %454, %456, %cst_282 {dimension_numbers = #tpu.dot_dimension_numbers<[1], [0], [0], [1], [0, 0, 1, 1], [], []>} : vector<16x64xbf16>, vector<64x32xbf16>, vector<16x32xf32> -> vector<16x32xf32>
    %c3_283 = arith.constant 3 : index
    %c0_284 = arith.constant 0 : index
    %c0_285 = arith.constant 0 : index
    %458 = vector.load %arg9[%c3_283, %c0_284, %c0_285] : memref<5x16x160xbf16, #tpu.memory_space<vmem>>, vector<1x16x64xbf16>
    %459 = vector.shape_cast %458 : vector<1x16x64xbf16> to vector<16x64xbf16>
    %c1_286 = arith.constant 1 : index
    %c32_287 = arith.constant 32 : index
    %c0_288 = arith.constant 0 : index
    %460 = vector.load %arg3[%c1_286, %c32_287, %c0_288] : memref<3x96x32xbf16, #tpu.memory_space<vmem>>, vector<1x64x32xbf16>
    %461 = vector.shape_cast %460 : vector<1x64x32xbf16> to vector<64x32xbf16>
    %cst_289 = arith.constant dense<0.000000e+00> : vector<16x32xf32>
    %462 = tpu.matmul %459, %461, %cst_289 {dimension_numbers = #tpu.dot_dimension_numbers<[1], [0], [0], [1], [0, 0, 1, 1], [], []>} : vector<16x64xbf16>, vector<64x32xbf16>, vector<16x32xf32> -> vector<16x32xf32>
    %463 = arith.addf %457, %462 : vector<16x32xf32>
    %c4_290 = arith.constant 4 : index
    %c0_291 = arith.constant 0 : index
    %c0_292 = arith.constant 0 : index
    %464 = vector.load %arg9[%c4_290, %c0_291, %c0_292] : memref<5x16x160xbf16, #tpu.memory_space<vmem>>, vector<1x16x64xbf16>
    %465 = vector.shape_cast %464 : vector<1x16x64xbf16> to vector<16x64xbf16>
    %c2_293 = arith.constant 2 : index
    %c32_294 = arith.constant 32 : index
    %c0_295 = arith.constant 0 : index
    %466 = vector.load %arg3[%c2_293, %c32_294, %c0_295] : memref<3x96x32xbf16, #tpu.memory_space<vmem>>, vector<1x64x32xbf16>
    %467 = vector.shape_cast %466 : vector<1x64x32xbf16> to vector<64x32xbf16>
    %cst_296 = arith.constant dense<0.000000e+00> : vector<16x32xf32>
    %468 = tpu.matmul %465, %467, %cst_296 {dimension_numbers = #tpu.dot_dimension_numbers<[1], [0], [0], [1], [0, 0, 1, 1], [], []>} : vector<16x64xbf16>, vector<64x32xbf16>, vector<16x32xf32> -> vector<16x32xf32>
    %469 = arith.addf %463, %468 : vector<16x32xf32>
    %470 = vector.broadcast %230 : vector<1x32xf32> to vector<16x32xf32>
    %471 = arith.mulf %469, %470 : vector<16x32xf32>
    %472 = vector.broadcast %231 : vector<1x32xf32> to vector<16x32xf32>
    %473 = arith.addf %471, %472 : vector<16x32xf32>
    %cst_297 = arith.constant 0.000000e+00 : f32
    %474 = vector.broadcast %cst_297 : f32 to vector<16x32xf32>
    %475 = arith.maximumf %473, %474 : vector<16x32xf32>
    %476 = arith.maximumf %452, %475 : vector<16x32xf32>
    %c2_298 = arith.constant 2 : index
    %c0_299 = arith.constant 0 : index
    %c0_300 = arith.constant 0 : index
    %477 = vector.load %arg9[%c2_298, %c0_299, %c0_300] : memref<5x16x160xbf16, #tpu.memory_space<vmem>>, vector<1x16x96xbf16>
    %478 = vector.shape_cast %477 : vector<1x16x96xbf16> to vector<16x96xbf16>
    %c0_301 = arith.constant 0 : index
    %c0_302 = arith.constant 0 : index
    %c0_303 = arith.constant 0 : index
    %479 = vector.load %arg3[%c0_301, %c0_302, %c0_303] : memref<3x96x32xbf16, #tpu.memory_space<vmem>>, vector<1x96x32xbf16>
    %480 = vector.shape_cast %479 : vector<1x96x32xbf16> to vector<96x32xbf16>
    %cst_304 = arith.constant dense<0.000000e+00> : vector<16x32xf32>
    %481 = tpu.matmul %478, %480, %cst_304 {dimension_numbers = #tpu.dot_dimension_numbers<[1], [0], [0], [1], [0, 0, 1, 1], [], []>} : vector<16x96xbf16>, vector<96x32xbf16>, vector<16x32xf32> -> vector<16x32xf32>
    %c3_305 = arith.constant 3 : index
    %c0_306 = arith.constant 0 : index
    %c0_307 = arith.constant 0 : index
    %482 = vector.load %arg9[%c3_305, %c0_306, %c0_307] : memref<5x16x160xbf16, #tpu.memory_space<vmem>>, vector<1x16x96xbf16>
    %483 = vector.shape_cast %482 : vector<1x16x96xbf16> to vector<16x96xbf16>
    %c1_308 = arith.constant 1 : index
    %c0_309 = arith.constant 0 : index
    %c0_310 = arith.constant 0 : index
    %484 = vector.load %arg3[%c1_308, %c0_309, %c0_310] : memref<3x96x32xbf16, #tpu.memory_space<vmem>>, vector<1x96x32xbf16>
    %485 = vector.shape_cast %484 : vector<1x96x32xbf16> to vector<96x32xbf16>
    %cst_311 = arith.constant dense<0.000000e+00> : vector<16x32xf32>
    %486 = tpu.matmul %483, %485, %cst_311 {dimension_numbers = #tpu.dot_dimension_numbers<[1], [0], [0], [1], [0, 0, 1, 1], [], []>} : vector<16x96xbf16>, vector<96x32xbf16>, vector<16x32xf32> -> vector<16x32xf32>
    %487 = arith.addf %481, %486 : vector<16x32xf32>
    %c4_312 = arith.constant 4 : index
    %c0_313 = arith.constant 0 : index
    %c0_314 = arith.constant 0 : index
    %488 = vector.load %arg9[%c4_312, %c0_313, %c0_314] : memref<5x16x160xbf16, #tpu.memory_space<vmem>>, vector<1x16x96xbf16>
    %489 = vector.shape_cast %488 : vector<1x16x96xbf16> to vector<16x96xbf16>
    %c2_315 = arith.constant 2 : index
    %c0_316 = arith.constant 0 : index
    %c0_317 = arith.constant 0 : index
    %490 = vector.load %arg3[%c2_315, %c0_316, %c0_317] : memref<3x96x32xbf16, #tpu.memory_space<vmem>>, vector<1x96x32xbf16>
    %491 = vector.shape_cast %490 : vector<1x96x32xbf16> to vector<96x32xbf16>
    %cst_318 = arith.constant dense<0.000000e+00> : vector<16x32xf32>
    %492 = tpu.matmul %489, %491, %cst_318 {dimension_numbers = #tpu.dot_dimension_numbers<[1], [0], [0], [1], [0, 0, 1, 1], [], []>} : vector<16x96xbf16>, vector<96x32xbf16>, vector<16x32xf32> -> vector<16x32xf32>
    %493 = arith.addf %487, %492 : vector<16x32xf32>
    %494 = vector.broadcast %230 : vector<1x32xf32> to vector<16x32xf32>
    %495 = arith.mulf %493, %494 : vector<16x32xf32>
    %496 = vector.broadcast %231 : vector<1x32xf32> to vector<16x32xf32>
    %497 = arith.addf %495, %496 : vector<16x32xf32>
    %cst_319 = arith.constant 0.000000e+00 : f32
    %498 = vector.broadcast %cst_319 : f32 to vector<16x32xf32>
    %499 = arith.maximumf %497, %498 : vector<16x32xf32>
    %500 = arith.maximumf %476, %499 : vector<16x32xf32>
    %501 = arith.truncf %500 : vector<16x32xf32> to vector<16x32xbf16>
    %c1_320 = arith.constant 1 : index
    %c0_321 = arith.constant 0 : index
    %c0_322 = arith.constant 0 : index
    %502 = vector.load %arg10[%c1_320, %c0_321, %c0_322] : memref<2x16x64xbf16, #tpu.memory_space<vmem>>, vector<1x16x32xbf16>
    %503 = vector.shape_cast %502 : vector<1x16x32xbf16> to vector<16x32xbf16>
    %504 = vector.shape_cast %501 : vector<16x32xbf16> to vector<1x16x32xbf16>
    tpu.vector_store %arg10[%c1_320, %c0_321, %c0_322], %504 {strides = array<i32>} : memref<2x16x64xbf16, #tpu.memory_space<vmem>>, vector<1x16x32xbf16>,
    %c1_323 = arith.constant 1 : index
    %c0_324 = arith.constant 0 : index
    %c32_325 = arith.constant 32 : index
    %505 = vector.load %arg9[%c1_323, %c0_324, %c32_325] : memref<5x16x160xbf16, #tpu.memory_space<vmem>>, vector<1x16x96xbf16>
    %506 = vector.shape_cast %505 : vector<1x16x96xbf16> to vector<16x96xbf16>
    %c0_326 = arith.constant 0 : index
    %c0_327 = arith.constant 0 : index
    %c0_328 = arith.constant 0 : index
    %507 = vector.load %arg3[%c0_326, %c0_327, %c0_328] : memref<3x96x32xbf16, #tpu.memory_space<vmem>>, vector<1x96x32xbf16>
    %508 = vector.shape_cast %507 : vector<1x96x32xbf16> to vector<96x32xbf16>
    %cst_329 = arith.constant dense<0.000000e+00> : vector<16x32xf32>
    %509 = tpu.matmul %506, %508, %cst_329 {dimension_numbers = #tpu.dot_dimension_numbers<[1], [0], [0], [1], [0, 0, 1, 1], [], []>} : vector<16x96xbf16>, vector<96x32xbf16>, vector<16x32xf32> -> vector<16x32xf32>
    %c2_330 = arith.constant 2 : index
    %c0_331 = arith.constant 0 : index
    %c32_332 = arith.constant 32 : index
    %510 = vector.load %arg9[%c2_330, %c0_331, %c32_332] : memref<5x16x160xbf16, #tpu.memory_space<vmem>>, vector<1x16x96xbf16>
    %511 = vector.shape_cast %510 : vector<1x16x96xbf16> to vector<16x96xbf16>
    %c1_333 = arith.constant 1 : index
    %c0_334 = arith.constant 0 : index
    %c0_335 = arith.constant 0 : index
    %512 = vector.load %arg3[%c1_333, %c0_334, %c0_335] : memref<3x96x32xbf16, #tpu.memory_space<vmem>>, vector<1x96x32xbf16>
    %513 = vector.shape_cast %512 : vector<1x96x32xbf16> to vector<96x32xbf16>
    %cst_336 = arith.constant dense<0.000000e+00> : vector<16x32xf32>
    %514 = tpu.matmul %511, %513, %cst_336 {dimension_numbers = #tpu.dot_dimension_numbers<[1], [0], [0], [1], [0, 0, 1, 1], [], []>} : vector<16x96xbf16>, vector<96x32xbf16>, vector<16x32xf32> -> vector<16x32xf32>
    %515 = arith.addf %509, %514 : vector<16x32xf32>
    %c3_337 = arith.constant 3 : index
    %c0_338 = arith.constant 0 : index
    %c32_339 = arith.constant 32 : index
    %516 = vector.load %arg9[%c3_337, %c0_338, %c32_339] : memref<5x16x160xbf16, #tpu.memory_space<vmem>>, vector<1x16x96xbf16>
    %517 = vector.shape_cast %516 : vector<1x16x96xbf16> to vector<16x96xbf16>
    %c2_340 = arith.constant 2 : index
    %c0_341 = arith.constant 0 : index
    %c0_342 = arith.constant 0 : index
    %518 = vector.load %arg3[%c2_340, %c0_341, %c0_342] : memref<3x96x32xbf16, #tpu.memory_space<vmem>>, vector<1x96x32xbf16>
    %519 = vector.shape_cast %518 : vector<1x96x32xbf16> to vector<96x32xbf16>
    %cst_343 = arith.constant dense<0.000000e+00> : vector<16x32xf32>
    %520 = tpu.matmul %517, %519, %cst_343 {dimension_numbers = #tpu.dot_dimension_numbers<[1], [0], [0], [1], [0, 0, 1, 1], [], []>} : vector<16x96xbf16>, vector<96x32xbf16>, vector<16x32xf32> -> vector<16x32xf32>
    %521 = arith.addf %515, %520 : vector<16x32xf32>
    %522 = vector.broadcast %230 : vector<1x32xf32> to vector<16x32xf32>
    %523 = arith.mulf %521, %522 : vector<16x32xf32>
    %524 = vector.broadcast %231 : vector<1x32xf32> to vector<16x32xf32>
    %525 = arith.addf %523, %524 : vector<16x32xf32>
    %cst_344 = arith.constant 0.000000e+00 : f32
    %526 = vector.broadcast %cst_344 : f32 to vector<16x32xf32>
    %527 = arith.maximumf %525, %526 : vector<16x32xf32>
    %c1_345 = arith.constant 1 : index
    %c0_346 = arith.constant 0 : index
    %c64_347 = arith.constant 64 : index
    %528 = vector.load %arg9[%c1_345, %c0_346, %c64_347] : memref<5x16x160xbf16, #tpu.memory_space<vmem>>, vector<1x16x96xbf16>
    %529 = vector.shape_cast %528 : vector<1x16x96xbf16> to vector<16x96xbf16>
    %c0_348 = arith.constant 0 : index
    %c0_349 = arith.constant 0 : index
    %c0_350 = arith.constant 0 : index
    %530 = vector.load %arg3[%c0_348, %c0_349, %c0_350] : memref<3x96x32xbf16, #tpu.memory_space<vmem>>, vector<1x96x32xbf16>
    %531 = vector.shape_cast %530 : vector<1x96x32xbf16> to vector<96x32xbf16>
    %cst_351 = arith.constant dense<0.000000e+00> : vector<16x32xf32>
    %532 = tpu.matmul %529, %531, %cst_351 {dimension_numbers = #tpu.dot_dimension_numbers<[1], [0], [0], [1], [0, 0, 1, 1], [], []>} : vector<16x96xbf16>, vector<96x32xbf16>, vector<16x32xf32> -> vector<16x32xf32>
    %c2_352 = arith.constant 2 : index
    %c0_353 = arith.constant 0 : index
    %c64_354 = arith.constant 64 : index
    %533 = vector.load %arg9[%c2_352, %c0_353, %c64_354] : memref<5x16x160xbf16, #tpu.memory_space<vmem>>, vector<1x16x96xbf16>
    %534 = vector.shape_cast %533 : vector<1x16x96xbf16> to vector<16x96xbf16>
    %c1_355 = arith.constant 1 : index
    %c0_356 = arith.constant 0 : index
    %c0_357 = arith.constant 0 : index
    %535 = vector.load %arg3[%c1_355, %c0_356, %c0_357] : memref<3x96x32xbf16, #tpu.memory_space<vmem>>, vector<1x96x32xbf16>
    %536 = vector.shape_cast %535 : vector<1x96x32xbf16> to vector<96x32xbf16>
    %cst_358 = arith.constant dense<0.000000e+00> : vector<16x32xf32>
    %537 = tpu.matmul %534, %536, %cst_358 {dimension_numbers = #tpu.dot_dimension_numbers<[1], [0], [0], [1], [0, 0, 1, 1], [], []>} : vector<16x96xbf16>, vector<96x32xbf16>, vector<16x32xf32> -> vector<16x32xf32>
    %538 = arith.addf %532, %537 : vector<16x32xf32>
    %c3_359 = arith.constant 3 : index
    %c0_360 = arith.constant 0 : index
    %c64_361 = arith.constant 64 : index
    %539 = vector.load %arg9[%c3_359, %c0_360, %c64_361] : memref<5x16x160xbf16, #tpu.memory_space<vmem>>, vector<1x16x96xbf16>
    %540 = vector.shape_cast %539 : vector<1x16x96xbf16> to vector<16x96xbf16>
    %c2_362 = arith.constant 2 : index
    %c0_363 = arith.constant 0 : index
    %c0_364 = arith.constant 0 : index
    %541 = vector.load %arg3[%c2_362, %c0_363, %c0_364] : memref<3x96x32xbf16, #tpu.memory_space<vmem>>, vector<1x96x32xbf16>
    %542 = vector.shape_cast %541 : vector<1x96x32xbf16> to vector<96x32xbf16>
    %cst_365 = arith.constant dense<0.000000e+00> : vector<16x32xf32>
    %543 = tpu.matmul %540, %542, %cst_365 {dimension_numbers = #tpu.dot_dimension_numbers<[1], [0], [0], [1], [0, 0, 1, 1], [], []>} : vector<16x96xbf16>, vector<96x32xbf16>, vector<16x32xf32> -> vector<16x32xf32>
    %544 = arith.addf %538, %543 : vector<16x32xf32>
    %545 = vector.broadcast %230 : vector<1x32xf32> to vector<16x32xf32>
    %546 = arith.mulf %544, %545 : vector<16x32xf32>
    %547 = vector.broadcast %231 : vector<1x32xf32> to vector<16x32xf32>
    %548 = arith.addf %546, %547 : vector<16x32xf32>
    %cst_366 = arith.constant 0.000000e+00 : f32
    %549 = vector.broadcast %cst_366 : f32 to vector<16x32xf32>
    %550 = arith.maximumf %548, %549 : vector<16x32xf32>
    %551 = arith.maximumf %527, %550 : vector<16x32xf32>
    %c2_367 = arith.constant 2 : index
    %c0_368 = arith.constant 0 : index
    %c32_369 = arith.constant 32 : index
    %552 = vector.load %arg9[%c2_367, %c0_368, %c32_369] : memref<5x16x160xbf16, #tpu.memory_space<vmem>>, vector<1x16x96xbf16>
    %553 = vector.shape_cast %552 : vector<1x16x96xbf16> to vector<16x96xbf16>
    %c0_370 = arith.constant 0 : index
    %c0_371 = arith.constant 0 : index
    %c0_372 = arith.constant 0 : index
    %554 = vector.load %arg3[%c0_370, %c0_371, %c0_372] : memref<3x96x32xbf16, #tpu.memory_space<vmem>>, vector<1x96x32xbf16>
    %555 = vector.shape_cast %554 : vector<1x96x32xbf16> to vector<96x32xbf16>
    %cst_373 = arith.constant dense<0.000000e+00> : vector<16x32xf32>
    %556 = tpu.matmul %553, %555, %cst_373 {dimension_numbers = #tpu.dot_dimension_numbers<[1], [0], [0], [1], [0, 0, 1, 1], [], []>} : vector<16x96xbf16>, vector<96x32xbf16>, vector<16x32xf32> -> vector<16x32xf32>
    %c3_374 = arith.constant 3 : index
    %c0_375 = arith.constant 0 : index
    %c32_376 = arith.constant 32 : index
    %557 = vector.load %arg9[%c3_374, %c0_375, %c32_376] : memref<5x16x160xbf16, #tpu.memory_space<vmem>>, vector<1x16x96xbf16>
    %558 = vector.shape_cast %557 : vector<1x16x96xbf16> to vector<16x96xbf16>
    %c1_377 = arith.constant 1 : index
    %c0_378 = arith.constant 0 : index
    %c0_379 = arith.constant 0 : index
    %559 = vector.load %arg3[%c1_377, %c0_378, %c0_379] : memref<3x96x32xbf16, #tpu.memory_space<vmem>>, vector<1x96x32xbf16>
    %560 = vector.shape_cast %559 : vector<1x96x32xbf16> to vector<96x32xbf16>
    %cst_380 = arith.constant dense<0.000000e+00> : vector<16x32xf32>
    %561 = tpu.matmul %558, %560, %cst_380 {dimension_numbers = #tpu.dot_dimension_numbers<[1], [0], [0], [1], [0, 0, 1, 1], [], []>} : vector<16x96xbf16>, vector<96x32xbf16>, vector<16x32xf32> -> vector<16x32xf32>
    %562 = arith.addf %556, %561 : vector<16x32xf32>
    %c4_381 = arith.constant 4 : index
    %c0_382 = arith.constant 0 : index
    %c32_383 = arith.constant 32 : index
    %563 = vector.load %arg9[%c4_381, %c0_382, %c32_383] : memref<5x16x160xbf16, #tpu.memory_space<vmem>>, vector<1x16x96xbf16>
    %564 = vector.shape_cast %563 : vector<1x16x96xbf16> to vector<16x96xbf16>
    %c2_384 = arith.constant 2 : index
    %c0_385 = arith.constant 0 : index
    %c0_386 = arith.constant 0 : index
    %565 = vector.load %arg3[%c2_384, %c0_385, %c0_386] : memref<3x96x32xbf16, #tpu.memory_space<vmem>>, vector<1x96x32xbf16>
    %566 = vector.shape_cast %565 : vector<1x96x32xbf16> to vector<96x32xbf16>
    %cst_387 = arith.constant dense<0.000000e+00> : vector<16x32xf32>
    %567 = tpu.matmul %564, %566, %cst_387 {dimension_numbers = #tpu.dot_dimension_numbers<[1], [0], [0], [1], [0, 0, 1, 1], [], []>} : vector<16x96xbf16>, vector<96x32xbf16>, vector<16x32xf32> -> vector<16x32xf32>
    %568 = arith.addf %562, %567 : vector<16x32xf32>
    %569 = vector.broadcast %230 : vector<1x32xf32> to vector<16x32xf32>
    %570 = arith.mulf %568, %569 : vector<16x32xf32>
    %571 = vector.broadcast %231 : vector<1x32xf32> to vector<16x32xf32>
    %572 = arith.addf %570, %571 : vector<16x32xf32>
    %cst_388 = arith.constant 0.000000e+00 : f32
    %573 = vector.broadcast %cst_388 : f32 to vector<16x32xf32>
    %574 = arith.maximumf %572, %573 : vector<16x32xf32>
    %575 = arith.maximumf %551, %574 : vector<16x32xf32>
    %c2_389 = arith.constant 2 : index
    %c0_390 = arith.constant 0 : index
    %c64_391 = arith.constant 64 : index
    %576 = vector.load %arg9[%c2_389, %c0_390, %c64_391] : memref<5x16x160xbf16, #tpu.memory_space<vmem>>, vector<1x16x96xbf16>
    %577 = vector.shape_cast %576 : vector<1x16x96xbf16> to vector<16x96xbf16>
    %c0_392 = arith.constant 0 : index
    %c0_393 = arith.constant 0 : index
    %c0_394 = arith.constant 0 : index
    %578 = vector.load %arg3[%c0_392, %c0_393, %c0_394] : memref<3x96x32xbf16, #tpu.memory_space<vmem>>, vector<1x96x32xbf16>
    %579 = vector.shape_cast %578 : vector<1x96x32xbf16> to vector<96x32xbf16>
    %cst_395 = arith.constant dense<0.000000e+00> : vector<16x32xf32>
    %580 = tpu.matmul %577, %579, %cst_395 {dimension_numbers = #tpu.dot_dimension_numbers<[1], [0], [0], [1], [0, 0, 1, 1], [], []>} : vector<16x96xbf16>, vector<96x32xbf16>, vector<16x32xf32> -> vector<16x32xf32>
    %c3_396 = arith.constant 3 : index
    %c0_397 = arith.constant 0 : index
    %c64_398 = arith.constant 64 : index
    %581 = vector.load %arg9[%c3_396, %c0_397, %c64_398] : memref<5x16x160xbf16, #tpu.memory_space<vmem>>, vector<1x16x96xbf16>
    %582 = vector.shape_cast %581 : vector<1x16x96xbf16> to vector<16x96xbf16>
    %c1_399 = arith.constant 1 : index
    %c0_400 = arith.constant 0 : index
    %c0_401 = arith.constant 0 : index
    %583 = vector.load %arg3[%c1_399, %c0_400, %c0_401] : memref<3x96x32xbf16, #tpu.memory_space<vmem>>, vector<1x96x32xbf16>
    %584 = vector.shape_cast %583 : vector<1x96x32xbf16> to vector<96x32xbf16>
    %cst_402 = arith.constant dense<0.000000e+00> : vector<16x32xf32>
    %585 = tpu.matmul %582, %584, %cst_402 {dimension_numbers = #tpu.dot_dimension_numbers<[1], [0], [0], [1], [0, 0, 1, 1], [], []>} : vector<16x96xbf16>, vector<96x32xbf16>, vector<16x32xf32> -> vector<16x32xf32>
    %586 = arith.addf %580, %585 : vector<16x32xf32>
    %c4_403 = arith.constant 4 : index
    %c0_404 = arith.constant 0 : index
    %c64_405 = arith.constant 64 : index
    %587 = vector.load %arg9[%c4_403, %c0_404, %c64_405] : memref<5x16x160xbf16, #tpu.memory_space<vmem>>, vector<1x16x96xbf16>
    %588 = vector.shape_cast %587 : vector<1x16x96xbf16> to vector<16x96xbf16>
    %c2_406 = arith.constant 2 : index
    %c0_407 = arith.constant 0 : index
    %c0_408 = arith.constant 0 : index
    %589 = vector.load %arg3[%c2_406, %c0_407, %c0_408] : memref<3x96x32xbf16, #tpu.memory_space<vmem>>, vector<1x96x32xbf16>
    %590 = vector.shape_cast %589 : vector<1x96x32xbf16> to vector<96x32xbf16>
    %cst_409 = arith.constant dense<0.000000e+00> : vector<16x32xf32>
    %591 = tpu.matmul %588, %590, %cst_409 {dimension_numbers = #tpu.dot_dimension_numbers<[1], [0], [0], [1], [0, 0, 1, 1], [], []>} : vector<16x96xbf16>, vector<96x32xbf16>, vector<16x32xf32> -> vector<16x32xf32>
    %592 = arith.addf %586, %591 : vector<16x32xf32>
    %593 = vector.broadcast %230 : vector<1x32xf32> to vector<16x32xf32>
    %594 = arith.mulf %592, %593 : vector<16x32xf32>
    %595 = vector.broadcast %231 : vector<1x32xf32> to vector<16x32xf32>
    %596 = arith.addf %594, %595 : vector<16x32xf32>
    %cst_410 = arith.constant 0.000000e+00 : f32
    %597 = vector.broadcast %cst_410 : f32 to vector<16x32xf32>
    %598 = arith.maximumf %596, %597 : vector<16x32xf32>
    %599 = arith.maximumf %575, %598 : vector<16x32xf32>
    %600 = arith.truncf %599 : vector<16x32xf32> to vector<16x32xbf16>
    %c1_411 = arith.constant 1 : index
    %c0_412 = arith.constant 0 : index
    %c32_413 = arith.constant 32 : index
    %601 = vector.load %arg10[%c1_411, %c0_412, %c32_413] : memref<2x16x64xbf16, #tpu.memory_space<vmem>>, vector<1x16x32xbf16>
    %602 = vector.shape_cast %601 : vector<1x16x32xbf16> to vector<16x32xbf16>
    %603 = vector.shape_cast %600 : vector<16x32xbf16> to vector<1x16x32xbf16>
    tpu.vector_store %arg10[%c1_411, %c0_412, %c32_413], %603 {strides = array<i32>} : memref<2x16x64xbf16, #tpu.memory_space<vmem>>, vector<1x16x32xbf16>,
    %c4_414 = arith.constant 4 : index
    %c0_415 = arith.constant 0 : index
    %604 = vector.load %arg7[%c4_414, %c0_415] : memref<16x128xf32, #tpu.memory_space<vmem>>, vector<1x64xf32>
    %c5 = arith.constant 5 : index
    %c0_416 = arith.constant 0 : index
    %605 = vector.load %arg7[%c5, %c0_416] : memref<16x128xf32, #tpu.memory_space<vmem>>, vector<1x64xf32>
    %c0_417 = arith.constant 0 : index
    %c0_418 = arith.constant 0 : index
    %c0_419 = arith.constant 0 : index
    %606 = vector.load %arg10[%c0_417, %c0_418, %c0_419] : memref<2x16x64xbf16, #tpu.memory_space<vmem>>, vector<1x16x64xbf16>
    %607 = vector.shape_cast %606 : vector<1x16x64xbf16> to vector<16x64xbf16>
    %c1_420 = arith.constant 1 : index
    %c32_421 = arith.constant 32 : index
    %c0_422 = arith.constant 0 : index
    %608 = vector.load %arg4[%c1_420, %c32_421, %c0_422] : memref<3x96x64xbf16, #tpu.memory_space<vmem>>, vector<1x64x64xbf16>
    %609 = vector.shape_cast %608 : vector<1x64x64xbf16> to vector<64x64xbf16>
    %cst_423 = arith.constant dense<0.000000e+00> : vector<16x64xf32>
    %610 = tpu.matmul %607, %609, %cst_423 {dimension_numbers = #tpu.dot_dimension_numbers<[1], [0], [0], [1], [0, 0, 1, 1], [], []>} : vector<16x64xbf16>, vector<64x64xbf16>, vector<16x64xf32> -> vector<16x64xf32>
    %c1_424 = arith.constant 1 : index
    %c0_425 = arith.constant 0 : index
    %c0_426 = arith.constant 0 : index
    %611 = vector.load %arg10[%c1_424, %c0_425, %c0_426] : memref<2x16x64xbf16, #tpu.memory_space<vmem>>, vector<1x16x64xbf16>
    %612 = vector.shape_cast %611 : vector<1x16x64xbf16> to vector<16x64xbf16>
    %c2_427 = arith.constant 2 : index
    %c32_428 = arith.constant 32 : index
    %c0_429 = arith.constant 0 : index
    %613 = vector.load %arg4[%c2_427, %c32_428, %c0_429] : memref<3x96x64xbf16, #tpu.memory_space<vmem>>, vector<1x64x64xbf16>
    %614 = vector.shape_cast %613 : vector<1x64x64xbf16> to vector<64x64xbf16>
    %cst_430 = arith.constant dense<0.000000e+00> : vector<16x64xf32>
    %615 = tpu.matmul %612, %614, %cst_430 {dimension_numbers = #tpu.dot_dimension_numbers<[1], [0], [0], [1], [0, 0, 1, 1], [], []>} : vector<16x64xbf16>, vector<64x64xbf16>, vector<16x64xf32> -> vector<16x64xf32>
    %616 = arith.addf %610, %615 : vector<16x64xf32>
    %617 = vector.broadcast %604 : vector<1x64xf32> to vector<16x64xf32>
    %618 = arith.mulf %616, %617 : vector<16x64xf32>
    %619 = vector.broadcast %605 : vector<1x64xf32> to vector<16x64xf32>
    %620 = arith.addf %618, %619 : vector<16x64xf32>
    %cst_431 = arith.constant 0.000000e+00 : f32
    %621 = vector.broadcast %cst_431 : f32 to vector<16x64xf32>
    %622 = arith.maximumf %620, %621 : vector<16x64xf32>
    %c0_432 = arith.constant 0 : index
    %c0_433 = arith.constant 0 : index
    %c0_434 = arith.constant 0 : index
    %623 = vector.load %arg10[%c0_432, %c0_433, %c0_434] : memref<2x16x64xbf16, #tpu.memory_space<vmem>>, vector<1x16x64xbf16>
    %624 = vector.shape_cast %623 : vector<1x16x64xbf16> to vector<16x64xbf16>
    %c1_435 = arith.constant 1 : index
    %c0_436 = arith.constant 0 : index
    %c0_437 = arith.constant 0 : index
    %625 = vector.load %arg4[%c1_435, %c0_436, %c0_437] : memref<3x96x64xbf16, #tpu.memory_space<vmem>>, vector<1x64x64xbf16>
    %626 = vector.shape_cast %625 : vector<1x64x64xbf16> to vector<64x64xbf16>
    %cst_438 = arith.constant dense<0.000000e+00> : vector<16x64xf32>
    %627 = tpu.matmul %624, %626, %cst_438 {dimension_numbers = #tpu.dot_dimension_numbers<[1], [0], [0], [1], [0, 0, 1, 1], [], []>} : vector<16x64xbf16>, vector<64x64xbf16>, vector<16x64xf32> -> vector<16x64xf32>
    %c1_439 = arith.constant 1 : index
    %c0_440 = arith.constant 0 : index
    %c0_441 = arith.constant 0 : index
    %628 = vector.load %arg10[%c1_439, %c0_440, %c0_441] : memref<2x16x64xbf16, #tpu.memory_space<vmem>>, vector<1x16x64xbf16>
    %629 = vector.shape_cast %628 : vector<1x16x64xbf16> to vector<16x64xbf16>
    %c2_442 = arith.constant 2 : index
    %c0_443 = arith.constant 0 : index
    %c0_444 = arith.constant 0 : index
    %630 = vector.load %arg4[%c2_442, %c0_443, %c0_444] : memref<3x96x64xbf16, #tpu.memory_space<vmem>>, vector<1x64x64xbf16>
    %631 = vector.shape_cast %630 : vector<1x64x64xbf16> to vector<64x64xbf16>
    %cst_445 = arith.constant dense<0.000000e+00> : vector<16x64xf32>
    %632 = tpu.matmul %629, %631, %cst_445 {dimension_numbers = #tpu.dot_dimension_numbers<[1], [0], [0], [1], [0, 0, 1, 1], [], []>} : vector<16x64xbf16>, vector<64x64xbf16>, vector<16x64xf32> -> vector<16x64xf32>
    %633 = arith.addf %627, %632 : vector<16x64xf32>
    %634 = vector.broadcast %604 : vector<1x64xf32> to vector<16x64xf32>
    %635 = arith.mulf %633, %634 : vector<16x64xf32>
    %636 = vector.broadcast %605 : vector<1x64xf32> to vector<16x64xf32>
    %637 = arith.addf %635, %636 : vector<16x64xf32>
    %cst_446 = arith.constant 0.000000e+00 : f32
    %638 = vector.broadcast %cst_446 : f32 to vector<16x64xf32>
    %639 = arith.maximumf %637, %638 : vector<16x64xf32>
    %640 = arith.maximumf %622, %639 : vector<16x64xf32>
    %c0_447 = arith.constant 0 : index
    %c0_448 = arith.constant 0 : index
    %c0_449 = arith.constant 0 : index
    %641 = vector.load %arg10[%c0_447, %c0_448, %c0_449] : memref<2x16x64xbf16, #tpu.memory_space<vmem>>, vector<1x16x64xbf16>
    %642 = vector.shape_cast %641 : vector<1x16x64xbf16> to vector<16x64xbf16>
    %c0_450 = arith.constant 0 : index
    %c32_451 = arith.constant 32 : index
    %c0_452 = arith.constant 0 : index
    %643 = vector.load %arg4[%c0_450, %c32_451, %c0_452] : memref<3x96x64xbf16, #tpu.memory_space<vmem>>, vector<1x64x64xbf16>
    %644 = vector.shape_cast %643 : vector<1x64x64xbf16> to vector<64x64xbf16>
    %cst_453 = arith.constant dense<0.000000e+00> : vector<16x64xf32>
    %645 = tpu.matmul %642, %644, %cst_453 {dimension_numbers = #tpu.dot_dimension_numbers<[1], [0], [0], [1], [0, 0, 1, 1], [], []>} : vector<16x64xbf16>, vector<64x64xbf16>, vector<16x64xf32> -> vector<16x64xf32>
    %c1_454 = arith.constant 1 : index
    %c0_455 = arith.constant 0 : index
    %c0_456 = arith.constant 0 : index
    %646 = vector.load %arg10[%c1_454, %c0_455, %c0_456] : memref<2x16x64xbf16, #tpu.memory_space<vmem>>, vector<1x16x64xbf16>
    %647 = vector.shape_cast %646 : vector<1x16x64xbf16> to vector<16x64xbf16>
    %c1_457 = arith.constant 1 : index
    %c32_458 = arith.constant 32 : index
    %c0_459 = arith.constant 0 : index
    %648 = vector.load %arg4[%c1_457, %c32_458, %c0_459] : memref<3x96x64xbf16, #tpu.memory_space<vmem>>, vector<1x64x64xbf16>
    %649 = vector.shape_cast %648 : vector<1x64x64xbf16> to vector<64x64xbf16>
    %cst_460 = arith.constant dense<0.000000e+00> : vector<16x64xf32>
    %650 = tpu.matmul %647, %649, %cst_460 {dimension_numbers = #tpu.dot_dimension_numbers<[1], [0], [0], [1], [0, 0, 1, 1], [], []>} : vector<16x64xbf16>, vector<64x64xbf16>, vector<16x64xf32> -> vector<16x64xf32>
    %651 = arith.addf %645, %650 : vector<16x64xf32>
    %652 = vector.broadcast %604 : vector<1x64xf32> to vector<16x64xf32>
    %653 = arith.mulf %651, %652 : vector<16x64xf32>
    %654 = vector.broadcast %605 : vector<1x64xf32> to vector<16x64xf32>
    %655 = arith.addf %653, %654 : vector<16x64xf32>
    %cst_461 = arith.constant 0.000000e+00 : f32
    %656 = vector.broadcast %cst_461 : f32 to vector<16x64xf32>
    %657 = arith.maximumf %655, %656 : vector<16x64xf32>
    %658 = arith.maximumf %640, %657 : vector<16x64xf32>
    %c0_462 = arith.constant 0 : index
    %c0_463 = arith.constant 0 : index
    %c0_464 = arith.constant 0 : index
    %659 = vector.load %arg10[%c0_462, %c0_463, %c0_464] : memref<2x16x64xbf16, #tpu.memory_space<vmem>>, vector<1x16x64xbf16>
    %660 = vector.shape_cast %659 : vector<1x16x64xbf16> to vector<16x64xbf16>
    %c0_465 = arith.constant 0 : index
    %c0_466 = arith.constant 0 : index
    %c0_467 = arith.constant 0 : index
    %661 = vector.load %arg4[%c0_465, %c0_466, %c0_467] : memref<3x96x64xbf16, #tpu.memory_space<vmem>>, vector<1x64x64xbf16>
    %662 = vector.shape_cast %661 : vector<1x64x64xbf16> to vector<64x64xbf16>
    %cst_468 = arith.constant dense<0.000000e+00> : vector<16x64xf32>
    %663 = tpu.matmul %660, %662, %cst_468 {dimension_numbers = #tpu.dot_dimension_numbers<[1], [0], [0], [1], [0, 0, 1, 1], [], []>} : vector<16x64xbf16>, vector<64x64xbf16>, vector<16x64xf32> -> vector<16x64xf32>
    %c1_469 = arith.constant 1 : index
    %c0_470 = arith.constant 0 : index
    %c0_471 = arith.constant 0 : index
    %664 = vector.load %arg10[%c1_469, %c0_470, %c0_471] : memref<2x16x64xbf16, #tpu.memory_space<vmem>>, vector<1x16x64xbf16>
    %665 = vector.shape_cast %664 : vector<1x16x64xbf16> to vector<16x64xbf16>
    %c1_472 = arith.constant 1 : index
    %c0_473 = arith.constant 0 : index
    %c0_474 = arith.constant 0 : index
    %666 = vector.load %arg4[%c1_472, %c0_473, %c0_474] : memref<3x96x64xbf16, #tpu.memory_space<vmem>>, vector<1x64x64xbf16>
    %667 = vector.shape_cast %666 : vector<1x64x64xbf16> to vector<64x64xbf16>
    %cst_475 = arith.constant dense<0.000000e+00> : vector<16x64xf32>
    %668 = tpu.matmul %665, %667, %cst_475 {dimension_numbers = #tpu.dot_dimension_numbers<[1], [0], [0], [1], [0, 0, 1, 1], [], []>} : vector<16x64xbf16>, vector<64x64xbf16>, vector<16x64xf32> -> vector<16x64xf32>
    %669 = arith.addf %663, %668 : vector<16x64xf32>
    %670 = vector.broadcast %604 : vector<1x64xf32> to vector<16x64xf32>
    %671 = arith.mulf %669, %670 : vector<16x64xf32>
    %672 = vector.broadcast %605 : vector<1x64xf32> to vector<16x64xf32>
    %673 = arith.addf %671, %672 : vector<16x64xf32>
    %cst_476 = arith.constant 0.000000e+00 : f32
    %674 = vector.broadcast %cst_476 : f32 to vector<16x64xf32>
    %675 = arith.maximumf %673, %674 : vector<16x64xf32>
    %676 = arith.maximumf %658, %675 : vector<16x64xf32>
    %677 = arith.truncf %676 : vector<16x64xf32> to vector<16x64xbf16>
    %c0_477 = arith.constant 0 : index
    %c0_478 = arith.constant 0 : index
    %678 = vector.load %arg5[%c0_477, %c0_478] : memref<64x128xbf16, #tpu.memory_space<vmem>>, vector<64x128xbf16>
    %cst_479 = arith.constant dense<0.000000e+00> : vector<16x128xf32>
    %679 = tpu.matmul %677, %678, %cst_479 {dimension_numbers = #tpu.dot_dimension_numbers<[1], [0], [0], [1], [0, 0, 1, 1], [], []>} : vector<16x64xbf16>, vector<64x128xbf16>, vector<16x128xf32> -> vector<16x128xf32>
    %c6 = arith.constant 6 : index
    %c0_480 = arith.constant 0 : index
    %680 = vector.load %arg7[%c6, %c0_480] : memref<16x128xf32, #tpu.memory_space<vmem>>, vector<1x128xf32>
    %c7 = arith.constant 7 : index
    %c0_481 = arith.constant 0 : index
    %681 = vector.load %arg7[%c7, %c0_481] : memref<16x128xf32, #tpu.memory_space<vmem>>, vector<1x128xf32>
    %682 = vector.broadcast %680 : vector<1x128xf32> to vector<16x128xf32>
    %683 = arith.mulf %679, %682 : vector<16x128xf32>
    %684 = vector.broadcast %681 : vector<1x128xf32> to vector<16x128xf32>
    %685 = arith.addf %683, %684 : vector<16x128xf32>
    %cst_482 = arith.constant 0.000000e+00 : f32
    %686 = vector.broadcast %cst_482 : f32 to vector<16x128xf32>
    %687 = arith.maximumf %685, %686 : vector<16x128xf32>
    %688 = arith.truncf %687 : vector<16x128xf32> to vector<16x128xbf16>
    %c0_483 = arith.constant 0 : index
    %c0_484 = arith.constant 0 : index
    %689 = vector.load %arg6[%c0_483, %c0_484] : memref<128x128xbf16, #tpu.memory_space<vmem>>, vector<128x128xbf16>
    %cst_485 = arith.constant dense<0.000000e+00> : vector<16x128xf32>
    %690 = tpu.matmul %688, %689, %cst_485 {dimension_numbers = #tpu.dot_dimension_numbers<[1], [0], [0], [1], [0, 0, 1, 1], [], []>} : vector<16x128xbf16>, vector<128x128xbf16>, vector<16x128xf32> -> vector<16x128xf32>
    %c8 = arith.constant 8 : index
    %c0_486 = arith.constant 0 : index
    %691 = vector.load %arg7[%c8, %c0_486] : memref<16x128xf32, #tpu.memory_space<vmem>>, vector<1x128xf32>
    %692 = vector.broadcast %691 : vector<1x128xf32> to vector<16x128xf32>
    %693 = arith.addf %690, %692 : vector<16x128xf32>
    %c0_487 = arith.constant 0 : index
    %c0_488 = arith.constant 0 : index
    %694 = vector.load %arg8[%c0_487, %c0_488] : memref<16x128xf32, #tpu.memory_space<vmem>>, vector<16x128xf32>
    tpu.vector_store %arg8[%c0_487, %c0_488], %693 {strides = array<i32>} : memref<16x128xf32, #tpu.memory_space<vmem>>, vector<16x128xf32>,
    return
  }
  func.func @transform_0(%arg0: i32) -> (i32, i32) {
    %c0_i32 = arith.constant 0 : i32
    %c0_i32_0 = arith.constant 0 : i32
    return %arg0, %c0_i32 : i32, i32
  }
  func.func @transform_1(%arg0: i32) -> (i32, i32) {
    %c0_i32 = arith.constant 0 : i32
    %c0_i32_0 = arith.constant 0 : i32
    %c0_i32_1 = arith.constant 0 : i32
    return %c0_i32, %c0_i32_0 : i32, i32
  }
  func.func @transform_2(%arg0: i32) -> (i32, i32, i32) {
    %c0_i32 = arith.constant 0 : i32
    %c0_i32_0 = arith.constant 0 : i32
    %c0_i32_1 = arith.constant 0 : i32
    %c0_i32_2 = arith.constant 0 : i32
    return %c0_i32, %c0_i32_0, %c0_i32_1 : i32, i32, i32
  }
  func.func @transform_3(%arg0: i32) -> (i32, i32, i32) {
    %c0_i32 = arith.constant 0 : i32
    %c0_i32_0 = arith.constant 0 : i32
    %c0_i32_1 = arith.constant 0 : i32
    %c0_i32_2 = arith.constant 0 : i32
    return %c0_i32, %c0_i32_0, %c0_i32_1 : i32, i32, i32
  }
  func.func @transform_4(%arg0: i32) -> (i32, i32) {
    %c0_i32 = arith.constant 0 : i32
    %c0_i32_0 = arith.constant 0 : i32
    %c0_i32_1 = arith.constant 0 : i32
    return %c0_i32, %c0_i32_0 : i32, i32
  }
  func.func @transform_5(%arg0: i32) -> (i32, i32) {
    %c0_i32 = arith.constant 0 : i32
    %c0_i32_0 = arith.constant 0 : i32
    %c0_i32_1 = arith.constant 0 : i32
    return %c0_i32, %c0_i32_0 : i32, i32
  }
  func.func @transform_6(%arg0: i32) -> (i32, i32) {
    %c0_i32 = arith.constant 0 : i32
    %c0_i32_0 = arith.constant 0 : i32
    %c0_i32_1 = arith.constant 0 : i32
    return %c0_i32, %c0_i32_0 : i32, i32
  }
  func.func @transform_7(%arg0: i32) -> (i32, i32) {
    %c0_i32 = arith.constant 0 : i32
    %c0_i32_0 = arith.constant 0 : i32
    return %arg0, %c0_i32 : i32, i32
  }
}

</mosaic_0001>

<llo_original>
// kernel: cnn2d_new_forward.1
$region0: #{cnn2d_new_forward.1}
  #allocation0 [shape = 'u32[]', space=smem, size = 0x4, offset = 0x4, fixed_abs, tag = 'smem constant byte address 0x4 - core index']
  #allocation1 [shape = 'u32[72,128]{1,0:T(1,128)}', space=vmem, size = 0x9000, scoped, tag = 'internal scratch']
  #allocation2 [shape = 'bf16[5,16,160]{2,1,0:T(8,128)(2,1)}', space=vmem, size = 0xa000, scoped, tag = 'scratch operand']
  #allocation3 [shape = 'bf16[2,16,64]{2,1,0:T(8,128)(2,1)}', space=vmem, size = 0x2000, scoped, tag = 'scratch operand']
  %s0 = inlined_call_operand.vmem [shape: bf16[400,40], index: 0, kind: input, shape index: {}]
  %s1 = inlined_call_operand.vmem [shape: bf16[40,32], index: 1, kind: input, shape index: {}]
  %s2 = inlined_call_operand.vmem [shape: bf16[3,96,32], index: 2, kind: input, shape index: {}]
  %s3 = inlined_call_operand.vmem [shape: bf16[3,96,64], index: 3, kind: input, shape index: {}]
  %s4 = inlined_call_operand.vmem [shape: bf16[64,128], index: 4, kind: input, shape index: {}]
  %s5 = inlined_call_operand.vmem [shape: bf16[128,128], index: 5, kind: input, shape index: {}]
  %s6 = inlined_call_operand.vmem [shape: f32[16,128], index: 6, kind: input, shape index: {}]
  %s7 = inlined_call_operand.vmem [shape: f32[16,128], index: 7, kind: output, shape index: {}]
  %s8 = sld [smem:[#allocation0]]
  $region38: #{cnn2d_new_forward.1} parent=0
    _
  %s10 = ssub.s32 1, %s8
  %s11 = scalar_select 0, %s10, %s8
  // Predicated region
  $region2: #{cnn2d_new_forward.1} parent=0 // pred_check
    _
  $region3: #{cnn2d_new_forward.1} parent=0 // pred_check_branch
    %13 = sbr.rel (0) target = $region5
  $region4: #{cnn2d_new_forward.1} parent=0 // pred_region
    _
  $region5: #{cnn2d_new_forward.1} parent=0 // pred_fallthru
    _
  // Predicated region
  $region6: #{cnn2d_new_forward.1} parent=0 // pred_check
    _
  $region7: #{cnn2d_new_forward.1} parent=0 // pred_check_branch
    %15 = sbr.rel (0) target = $region9
  $region8: #{cnn2d_new_forward.1} parent=0 // pred_region
    _
  $region9: #{cnn2d_new_forward.1} parent=0 // pred_fallthru
    _
  // Predicated region
  $region10: #{cnn2d_new_forward.1} parent=0 // pred_check
    _
  $region11: #{cnn2d_new_forward.1} parent=0 // pred_check_branch
    %17 = sbr.rel (0) target = $region13
  $region12: #{cnn2d_new_forward.1} parent=0 // pred_region
    _
  $region13: #{cnn2d_new_forward.1} parent=0 // pred_fallthru
    _
  // Predicated region
  $region14: #{cnn2d_new_forward.1} parent=0 // pred_check
    _
  $region15: #{cnn2d_new_forward.1} parent=0 // pred_check_branch
    %19 = sbr.rel (0) target = $region17
  $region16: #{cnn2d_new_forward.1} parent=0 // pred_region
    _
  $region17: #{cnn2d_new_forward.1} parent=0 // pred_fallthru
    _
  // Predicated region
  $region18: #{cnn2d_new_forward.1} parent=0 // pred_check
    _
  $region19: #{cnn2d_new_forward.1} parent=0 // pred_check_branch
    %21 = sbr.rel (0) target = $region21
  $region20: #{cnn2d_new_forward.1} parent=0 // pred_region
    _
  $region21: #{cnn2d_new_forward.1} parent=0 // pred_fallthru
    _
  // Predicated region
  $region22: #{cnn2d_new_forward.1} parent=0 // pred_check
    _
  $region23: #{cnn2d_new_forward.1} parent=0 // pred_check_branch
    %23 = sbr.rel (0) target = $region25
  $region24: #{cnn2d_new_forward.1} parent=0 // pred_region
    _
  $region25: #{cnn2d_new_forward.1} parent=0 // pred_fallthru
    _
  // Predicated region
  $region26: #{cnn2d_new_forward.1} parent=0 // pred_check
    _
  $region27: #{cnn2d_new_forward.1} parent=0 // pred_check_branch
    %25 = sbr.rel (0) target = $region29
  $region28: #{cnn2d_new_forward.1} parent=0 // pred_region
    _
  $region29: #{cnn2d_new_forward.1} parent=0 // pred_fallthru
    _
  %v27 = vld [vmem:[%s0] sm:$0xf]
  %v28 = vld [vmem:[%s0 + $0x4] sm:$0xf]
  %v29 = vld [vmem:[%s0 + $0x8] sm:$0xf]
  %v30 = vld [vmem:[%s0 + $0xc] sm:$0xf]
  %v31 = vld [vmem:[%s0 + $0x10] sm:$0xf]
  %v32 = vld [vmem:[%s0 + $0x14] sm:$0xf]
  %v33 = vld [vmem:[%s0 + $0x18] sm:$0xf]
  %v34 = vld [vmem:[%s0 + $0x1c] sm:$0xf]
  %v35 = vld [vmem:[%s0 + $0x20] sm:$0xf]
  %v36 = vld [vmem:[%s0 + $0x24] sm:$0xf]
  %v37 = vld [vmem:[%s0 + $0x28] sm:$0xf]
  %v38 = vld [vmem:[%s0 + $0x2c] sm:$0xf]
  %v39 = vld [vmem:[%s0 + $0x30] sm:$0xf]
  %v40 = vld [vmem:[%s0 + $0x34] sm:$0xf]
  %v41 = vld [vmem:[%s0 + $0x38] sm:$0xf]
  %v42 = vld [vmem:[%s0 + $0x3c] sm:$0xf]
  %v43 = vld [vmem:[%s0 + $0x40] sm:$0xf]
  %v44 = vld [vmem:[%s0 + $0x44] sm:$0xf]
  %v45 = vld [vmem:[%s0 + $0x48] sm:$0xf]
  %v46 = vld [vmem:[%s0 + $0x4c] sm:$0xf]
  %v47 = vld [vmem:[%s0 + $0x50] sm:$0xf]
  %v48 = vld [vmem:[%s0 + $0x54] sm:$0xf]
  %v49 = vld [vmem:[%s0 + $0x58] sm:$0xf]
  %v50 = vld [vmem:[%s0 + $0x5c] sm:$0xf]
  %v51 = vld [vmem:[%s0 + $0x60] sm:$0xf]
  %v52 = vld [vmem:[%s0 + $0x64] sm:$0xf]
  %v53 = vld [vmem:[%s0 + $0x68] sm:$0xf]
  %v54 = vld [vmem:[%s0 + $0x6c] sm:$0xf]
  %v55 = vld [vmem:[%s0 + $0x70] sm:$0xf]
  %v56 = vld [vmem:[%s0 + $0x74] sm:$0xf]
  %v57 = vld [vmem:[%s0 + $0x78] sm:$0xf]
  %v58 = vld [vmem:[%s0 + $0x7c] sm:$0xf]
  %v59 = vld [vmem:[%s0 + $0x80] sm:$0xf]
  %v60 = vld [vmem:[%s0 + $0x84] sm:$0xf]
  %v61 = vld [vmem:[%s0 + $0x88] sm:$0xf]
  %v62 = vld [vmem:[%s0 + $0x8c] sm:$0xf]
  %v63 = vld [vmem:[%s0 + $0x90] sm:$0xf]
  %v64 = vld [vmem:[%s0 + $0x94] sm:$0xf]
  %v65 = vld [vmem:[%s0 + $0x98] sm:$0xf]
  %v66 = vld [vmem:[%s0 + $0x9c] sm:$0xf]
  %v67 = vld [vmem:[%s0 + $0xa0] sm:$0xf]
  %v68 = vld [vmem:[%s0 + $0xa4] sm:$0xf]
  %v69 = vld [vmem:[%s0 + $0xa8] sm:$0xf]
  %v70 = vld [vmem:[%s0 + $0xac] sm:$0xf]
  %v71 = vld [vmem:[%s0 + $0xb0] sm:$0xf]
  %v72 = vld [vmem:[%s0 + $0xb4] sm:$0xf]
  %v73 = vld [vmem:[%s0 + $0xb8] sm:$0xf]
  %v74 = vld [vmem:[%s0 + $0xbc] sm:$0xf]
  %v75 = vld [vmem:[%s0 + $0xc0] sm:$0xf]
  %v76 = vld [vmem:[%s0 + $0xc4] sm:$0xf]
  %v77 = vld [vmem:[%s1] sm:$0xf]
  %v78 = vld [vmem:[%s1 + $0x4] sm:$0xf]
  %v79 = vld [vmem:[%s1 + $0x8] sm:$0xf]
  %v80 = vld [vmem:[%s1 + $0xc] sm:$0xf]
  %v81 = vld [vmem:[%s1 + $0x10] sm:$0xf]
  %v132 = vunpack.c.l.b16 %v27
  %v133 = vunpack.c.l.b16 %v28
  %v134 = vunpack.c.l.b16 %v29
  %v135 = vunpack.c.l.b16 %v30
  %v136 = vunpack.c.l.b16 %v31
  %v137 = vunpack.c.l.b16 %v32
  %v138 = vunpack.c.l.b16 %v33
  %v139 = vunpack.c.l.b16 %v34
  %v140 = vunpack.c.l.b16 %v35
  %v141 = vunpack.c.l.b16 %v36
  %v142 = vunpack.c.l.b16 %v37
  %v143 = vunpack.c.l.b16 %v38
  %v144 = vunpack.c.l.b16 %v39
  %v145 = vunpack.c.l.b16 %v40
  %v146 = vunpack.c.l.b16 %v41
  %v147 = vunpack.c.l.b16 %v42
  %v148 = vunpack.c.l.b16 %v43
  %v149 = vunpack.c.l.b16 %v44
  %v150 = vunpack.c.l.b16 %v45
  %v151 = vunpack.c.l.b16 %v46
  %v152 = vunpack.c.l.b16 %v47
  %v153 = vunpack.c.l.b16 %v48
  %v154 = vunpack.c.l.b16 %v49
  %v155 = vunpack.c.l.b16 %v50
  %v156 = vunpack.c.l.b16 %v51
  %v157 = vunpack.c.l.b16 %v52
  %v158 = vunpack.c.l.b16 %v53
  %v159 = vunpack.c.l.b16 %v54
  %v160 = vunpack.c.l.b16 %v55
  %v161 = vunpack.c.l.b16 %v56
  %v162 = vunpack.c.l.b16 %v57
  %v163 = vunpack.c.l.b16 %v58
  %v164 = vunpack.c.l.b16 %v59
  %v165 = vunpack.c.l.b16 %v60
  %v166 = vunpack.c.l.b16 %v61
  %v167 = vunpack.c.l.b16 %v62
  %v168 = vunpack.c.l.b16 %v63
  %v169 = vunpack.c.l.b16 %v64
  %v170 = vunpack.c.l.b16 %v65
  %v171 = vunpack.c.l.b16 %v66
  %v172 = vunpack.c.l.b16 %v67
  %v173 = vunpack.c.l.b16 %v68
  %v174 = vunpack.c.l.b16 %v69
  %v175 = vunpack.c.l.b16 %v70
  %v176 = vunpack.c.l.b16 %v71
  %v177 = vunpack.c.l.b16 %v72
  %v178 = vunpack.c.l.b16 %v73
  %v179 = vunpack.c.l.b16 %v74
  %v180 = vunpack.c.l.b16 %v75
  %v181 = vunpack.c.l.b16 %v76
  %v182 = vpack.c.b16 %v133, %v132
  %v183 = vpack.c.b16 %v135, %v134
  %v184 = vpack.c.b16 %v137, %v136
  %v185 = vpack.c.b16 %v139, %v138
  %v186 = vpack.c.b16 %v141, %v140
  %v187 = vpack.c.b16 %v143, %v142
  %v188 = vpack.c.b16 %v145, %v144
  %v189 = vpack.c.b16 %v147, %v146
  %v190 = vpack.c.b16 %v149, %v148
  %v191 = vpack.c.b16 %v151, %v150
  %v192 = vpack.c.b16 %v153, %v152
  %v193 = vpack.c.b16 %v155, %v154
  %v194 = vpack.c.b16 %v157, %v156
  %v195 = vpack.c.b16 %v159, %v158
  %v196 = vpack.c.b16 %v161, %v160
  %v197 = vpack.c.b16 %v163, %v162
  %v198 = vpack.c.b16 %v165, %v164
  %v199 = vpack.c.b16 %v167, %v166
  %v200 = vpack.c.b16 %v169, %v168
  %v201 = vpack.c.b16 %v171, %v170
  %v202 = vpack.c.b16 %v173, %v172
  %v203 = vpack.c.b16 %v175, %v174
  %v204 = vpack.c.b16 %v177, %v176
  %v205 = vpack.c.b16 %v179, %v178
  %v206 = vpack.c.b16 %v181, %v180
  %v212 = vunpack.c.l.b16 %v77
  %v213 = vunpack.c.l.b16 %v78
  %v214 = vunpack.c.l.b16 %v79
  %v215 = vunpack.c.l.b16 %v80
  %v216 = vunpack.c.l.b16 %v81
  %v217 = vpack.c.b16 %v213, %v212
  %v218 = vpack.c.b16 %v215, %v214
  %v219 = vpack.c.b16 %v216, %v216
  %vm222 = vcmask 326656
  %v224 = vsel %vm222, %v182, 0
  %v227 = vsel %vm222, %v183, 0
  %v230 = vsel %vm222, %v184, 0
  %v233 = vsel %vm222, %v185, 0
  %v236 = vsel %vm222, %v186, 0
  %v239 = vsel %vm222, %v187, 0
  %v242 = vsel %vm222, %v188, 0
  %v245 = vsel %vm222, %v189, 0
  %v248 = vsel %vm222, %v190, 0
  %v251 = vsel %vm222, %v191, 0
  %v254 = vsel %vm222, %v192, 0
  %v257 = vsel %vm222, %v193, 0
  %v260 = vsel %vm222, %v194, 0
  %v263 = vsel %vm222, %v195, 0
  %v266 = vsel %vm222, %v196, 0
  %v269 = vsel %vm222, %v197, 0
  %v272 = vsel %vm222, %v198, 0
  %v275 = vsel %vm222, %v199, 0
  %v278 = vsel %vm222, %v200, 0
  %v281 = vsel %vm222, %v201, 0
  %v284 = vsel %vm222, %v202, 0
  %v287 = vsel %vm222, %v203, 0
  %v290 = vsel %vm222, %v204, 0
  %v293 = vsel %vm222, %v205, 0
  %v296 = vsel %vm222, %v206, 0
  %vm298 = vcmask 1043456
  %v300 = vsel %vm298, %v219, 0
  %302 = vmatpush.bf16.msra.mxu0 0
  %303 = vmatpush.bf16.msra.mxu0 0
  %304 = vmatpush.bf16.msra.mxu0 0
  %305 = vmatpush.bf16.msra.mxu0 0
  %306 = vmatpush.bf16.msra.mxu0 0
  %307 = vmatpush.bf16.msra.mxu0 %v300
  %308 = vmatpush.bf16.msra.mxu0 %v218
  %309 = vmatpush.bf16.msra.mxu0 %v217
  %310 = vmatmul.bf16.gmra.mxu0 %v224
  %v311 = vpop.f32.mrf.mxu0
  %v312 = vadd.f32 0.0, %v311
  %v313 = vpop.f32.mrf.mxu0
  %v314 = vadd.f32 0.0, %v313
  %315 = vmatmul.bf16.gmra.mxu0 %v227
  %v316 = vpop.f32.mrf.mxu0
  %v317 = vadd.f32 0.0, %v316
  %v318 = vpop.f32.mrf.mxu0
  %v319 = vadd.f32 0.0, %v318
  %320 = vmatmul.bf16.gmra.mxu0 %v230
  %v321 = vpop.f32.mrf.mxu0
  %v322 = vadd.f32 0.0, %v321
  %v323 = vpop.f32.mrf.mxu0
  %v324 = vadd.f32 0.0, %v323
  %325 = vmatmul.bf16.gmra.mxu0 %v233
  %v326 = vpop.f32.mrf.mxu0
  %v327 = vadd.f32 0.0, %v326
  %v328 = vpop.f32.mrf.mxu0
  %v329 = vadd.f32 0.0, %v328
  %330 = vmatmul.bf16.gmra.mxu0 %v236
  %v331 = vpop.f32.mrf.mxu0
  %v332 = vadd.f32 0.0, %v331
  %v333 = vpop.f32.mrf.mxu0
  %v334 = vadd.f32 0.0, %v333
  %335 = vmatmul.bf16.gmra.mxu0 %v239
  %v336 = vpop.f32.mrf.mxu0
  %v337 = vadd.f32 0.0, %v336
  %v338 = vpop.f32.mrf.mxu0
  %v339 = vadd.f32 0.0, %v338
  %340 = vmatmul.bf16.gmra.mxu0 %v242
  %v341 = vpop.f32.mrf.mxu0
  %v342 = vadd.f32 0.0, %v341
  %v343 = vpop.f32.mrf.mxu0
  %v344 = vadd.f32 0.0, %v343
  %345 = vmatmul.bf16.gmra.mxu0 %v245
  %v346 = vpop.f32.mrf.mxu0
  %v347 = vadd.f32 0.0, %v346
  %v348 = vpop.f32.mrf.mxu0
  %v349 = vadd.f32 0.0, %v348
  %350 = vmatmul.bf16.gmra.mxu0 %v248
  %v351 = vpop.f32.mrf.mxu0
  %v352 = vadd.f32 0.0, %v351
  %v353 = vpop.f32.mrf.mxu0
  %v354 = vadd.f32 0.0, %v353
  %355 = vmatmul.bf16.gmra.mxu0 %v251
  %v356 = vpop.f32.mrf.mxu0
  %v357 = vadd.f32 0.0, %v356
  %v358 = vpop.f32.mrf.mxu0
  %v359 = vadd.f32 0.0, %v358
  %360 = vmatmul.bf16.gmra.mxu0 %v254
  %v361 = vpop.f32.mrf.mxu0
  %v362 = vadd.f32 0.0, %v361
  %v363 = vpop.f32.mrf.mxu0
  %v364 = vadd.f32 0.0, %v363
  %365 = vmatmul.bf16.gmra.mxu0 %v257
  %v366 = vpop.f32.mrf.mxu0
  %v367 = vadd.f32 0.0, %v366
  %v368 = vpop.f32.mrf.mxu0
  %v369 = vadd.f32 0.0, %v368
  %370 = vmatmul.bf16.gmra.mxu0 %v260
  %v371 = vpop.f32.mrf.mxu0
  %v372 = vadd.f32 0.0, %v371
  %v373 = vpop.f32.mrf.mxu0
  %v374 = vadd.f32 0.0, %v373
  %375 = vmatmul.bf16.gmra.mxu0 %v263
  %v376 = vpop.f32.mrf.mxu0
  %v377 = vadd.f32 0.0, %v376
  %v378 = vpop.f32.mrf.mxu0
  %v379 = vadd.f32 0.0, %v378
  %380 = vmatmul.bf16.gmra.mxu0 %v266
  %v381 = vpop.f32.mrf.mxu0
  %v382 = vadd.f32 0.0, %v381
  %v383 = vpop.f32.mrf.mxu0
  %v384 = vadd.f32 0.0, %v383
  %385 = vmatmul.bf16.gmra.mxu0 %v269
  %v386 = vpop.f32.mrf.mxu0
  %v387 = vadd.f32 0.0, %v386
  %v388 = vpop.f32.mrf.mxu0
  %v389 = vadd.f32 0.0, %v388
  %390 = vmatmul.bf16.gmra.mxu0 %v272
  %v391 = vpop.f32.mrf.mxu0
  %v392 = vadd.f32 0.0, %v391
  %v393 = vpop.f32.mrf.mxu0
  %v394 = vadd.f32 0.0, %v393
  %395 = vmatmul.bf16.gmra.mxu0 %v275
  %v396 = vpop.f32.mrf.mxu0
  %v397 = vadd.f32 0.0, %v396
  %v398 = vpop.f32.mrf.mxu0
  %v399 = vadd.f32 0.0, %v398
  %400 = vmatmul.bf16.gmra.mxu0 %v278
  %v401 = vpop.f32.mrf.mxu0
  %v402 = vadd.f32 0.0, %v401
  %v403 = vpop.f32.mrf.mxu0
  %v404 = vadd.f32 0.0, %v403
  %405 = vmatmul.bf16.gmra.mxu0 %v281
  %v406 = vpop.f32.mrf.mxu0
  %v407 = vadd.f32 0.0, %v406
  %v408 = vpop.f32.mrf.mxu0
  %v409 = vadd.f32 0.0, %v408
  %410 = vmatmul.bf16.gmra.mxu0 %v284
  %v411 = vpop.f32.mrf.mxu0
  %v412 = vadd.f32 0.0, %v411
  %v413 = vpop.f32.mrf.mxu0
  %v414 = vadd.f32 0.0, %v413
  %415 = vmatmul.bf16.gmra.mxu0 %v287
  %v416 = vpop.f32.mrf.mxu0
  %v417 = vadd.f32 0.0, %v416
  %v418 = vpop.f32.mrf.mxu0
  %v419 = vadd.f32 0.0, %v418
  %420 = vmatmul.bf16.gmra.mxu0 %v290
  %v421 = vpop.f32.mrf.mxu0
  %v422 = vadd.f32 0.0, %v421
  %v423 = vpop.f32.mrf.mxu0
  %v424 = vadd.f32 0.0, %v423
  %425 = vmatmul.bf16.gmra.mxu0 %v293
  %v426 = vpop.f32.mrf.mxu0
  %v427 = vadd.f32 0.0, %v426
  %v428 = vpop.f32.mrf.mxu0
  %v429 = vadd.f32 0.0, %v428
  %430 = vmatmul.bf16.gmra.mxu0 %v296
  %v431 = vpop.f32.mrf.mxu0
  %v432 = vadd.f32 0.0, %v431
  %v433 = vpop.f32.mrf.mxu0
  %v434 = vadd.f32 0.0, %v433
  %435 = vdwg.mxu0
  %v436 = vld [vmem:[%s6] sm:$0x1]
  %v437 = vld [vmem:[%s6 + $0x1] sm:$0x1]
  %v438 = vperm.slane %v436, 0
  %v439 = vmul.f32 %v312, %v438
  %v440 = vmul.f32 %v314, %v438
  %v441 = vperm.slane %v437, 0
  %v442 = vadd.f32 %v439, %v441
  %v443 = vadd.f32 %v440, %v441
  %v444 = vpack.c.bf16 %v442, %v442
  %v445 = vpack.c.bf16 %v443, %v443
  %vm446 = vcmask 257024
  %447 = vst.msk [vmem:[#allocation2] sm:$0xf] %vm446, %v444
  %448 = vst.msk [vmem:[#allocation2 + $0x8] sm:$0xf] %vm446, %v445
  %v449 = vmul.f32 %v317, %v438
  %v450 = vmul.f32 %v319, %v438
  %v451 = vadd.f32 %v449, %v441
  %v452 = vadd.f32 %v450, %v441
  %v453 = vpack.c.bf16 %v451, %v451
  %v454 = vpack.c.bf16 %v452, %v452
  %457 = vrot.lane.b32.xlu0 %v453, 32
  %v458 = vpop.permute.xlu0 %457
  %459 = vrot.lane.b32.xlu0 %v454, 32
  %v460 = vpop.permute.xlu0 %459
  %vm463 = vcmask 519424
  %464 = vst.msk [vmem:[#allocation2] sm:$0xf] %vm463, %v458
  %465 = vst.msk [vmem:[#allocation2 + $0x8] sm:$0xf] %vm463, %v460
  %v466 = vmul.f32 %v322, %v438
  %v467 = vmul.f32 %v324, %v438
  %v468 = vadd.f32 %v466, %v441
  %v469 = vadd.f32 %v467, %v441
  %v470 = vpack.c.bf16 %v468, %v468
  %v471 = vpack.c.bf16 %v469, %v469
  %474 = vrot.lane.b32.xlu0 %v470, 64
  %v475 = vpop.permute.xlu0 %474
  %476 = vrot.lane.b32.xlu0 %v471, 64
  %v477 = vpop.permute.xlu0 %476
  %vm480 = vcmask 781824
  %481 = vst.msk [vmem:[#allocation2] sm:$0xf] %vm480, %v475
  %482 = vst.msk [vmem:[#allocation2 + $0x8] sm:$0xf] %vm480, %v477
  %v483 = vmul.f32 %v327, %v438
  %v484 = vmul.f32 %v329, %v438
  %v485 = vadd.f32 %v483, %v441
  %v486 = vadd.f32 %v484, %v441
  %v487 = vpack.c.bf16 %v485, %v485
  %v488 = vpack.c.bf16 %v486, %v486
  %491 = vrot.lane.b32.xlu0 %v487, 96
  %v492 = vpop.permute.xlu0 %491
  %493 = vrot.lane.b32.xlu0 %v488, 96
  %v494 = vpop.permute.xlu0 %493
  %vm497 = vcmask 1044224
  %498 = vst.msk [vmem:[#allocation2] sm:$0xf] %vm497, %v492
  %499 = vst.msk [vmem:[#allocation2 + $0x8] sm:$0xf] %vm497, %v494
  %v500 = vmul.f32 %v332, %v438
  %v501 = vmul.f32 %v334, %v438
  %v502 = vadd.f32 %v500, %v441
  %v503 = vadd.f32 %v501, %v441
  %v504 = vpack.c.bf16 %v502, %v502
  %v505 = vpack.c.bf16 %v503, %v503
  %506 = vst.msk [vmem:[#allocation2 + $0x4] sm:$0xf] %vm446, %v504
  %507 = vst.msk [vmem:[#allocation2 + $0xc] sm:$0xf] %vm446, %v505
  %v508 = vmul.f32 %v337, %v438
  %v509 = vmul.f32 %v339, %v438
  %v510 = vadd.f32 %v508, %v441
  %v511 = vadd.f32 %v509, %v441
  %v512 = vpack.c.bf16 %v510, %v510
  %v513 = vpack.c.bf16 %v511, %v511
  %s514 = scalar_lea.vmem [#allocation2], 16
  %515 = vst.msk [vmem:[%s514] sm:$0xf] %vm446, %v512
  %516 = vst.msk [vmem:[%s514 + $0x8] sm:$0xf] %vm446, %v513
  %v517 = vmul.f32 %v342, %v438
  %v518 = vmul.f32 %v344, %v438
  %v519 = vadd.f32 %v517, %v441
  %v520 = vadd.f32 %v518, %v441
  %v521 = vpack.c.bf16 %v519, %v519
  %v522 = vpack.c.bf16 %v520, %v520
  %525 = vrot.lane.b32.xlu0 %v521, 32
  %v526 = vpop.permute.xlu0 %525
  %527 = vrot.lane.b32.xlu0 %v522, 32
  %v528 = vpop.permute.xlu0 %527
  %531 = vst.msk [vmem:[%s514] sm:$0xf] %vm463, %v526
  %532 = vst.msk [vmem:[%s514 + $0x8] sm:$0xf] %vm463, %v528
  %v533 = vmul.f32 %v347, %v438
  %v534 = vmul.f32 %v349, %v438
  %v535 = vadd.f32 %v533, %v441
  %v536 = vadd.f32 %v534, %v441
  %v537 = vpack.c.bf16 %v535, %v535
  %v538 = vpack.c.bf16 %v536, %v536
  %541 = vrot.lane.b32.xlu0 %v537, 64
  %v542 = vpop.permute.xlu0 %541
  %543 = vrot.lane.b32.xlu0 %v538, 64
  %v544 = vpop.permute.xlu0 %543
  %547 = vst.msk [vmem:[%s514] sm:$0xf] %vm480, %v542
  %548 = vst.msk [vmem:[%s514 + $0x8] sm:$0xf] %vm480, %v544
  %v549 = vmul.f32 %v352, %v438
  %v550 = vmul.f32 %v354, %v438
  %v551 = vadd.f32 %v549, %v441
  %v552 = vadd.f32 %v550, %v441
  %v553 = vpack.c.bf16 %v551, %v551
  %v554 = vpack.c.bf16 %v552, %v552
  %557 = vrot.lane.b32.xlu0 %v553, 96
  %v558 = vpop.permute.xlu0 %557
  %559 = vrot.lane.b32.xlu0 %v554, 96
  %v560 = vpop.permute.xlu0 %559
  %563 = vst.msk [vmem:[%s514] sm:$0xf] %vm497, %v558
  %564 = vst.msk [vmem:[%s514 + $0x8] sm:$0xf] %vm497, %v560
  %v565 = vmul.f32 %v357, %v438
  %v566 = vmul.f32 %v359, %v438
  %v567 = vadd.f32 %v565, %v441
  %v568 = vadd.f32 %v566, %v441
  %v569 = vpack.c.bf16 %v567, %v567
  %v570 = vpack.c.bf16 %v568, %v568
  %571 = vst.msk [vmem:[%s514 + $0x4] sm:$0xf] %vm446, %v569
  %572 = vst.msk [vmem:[%s514 + $0xc] sm:$0xf] %vm446, %v570
  %v573 = vmul.f32 %v362, %v438
  %v574 = vmul.f32 %v364, %v438
  %v575 = vadd.f32 %v573, %v441
  %v576 = vadd.f32 %v574, %v441
  %v577 = vpack.c.bf16 %v575, %v575
  %v578 = vpack.c.bf16 %v576, %v576
  %s579 = scalar_lea.vmem [#allocation2], 32
  %580 = vst.msk [vmem:[%s579] sm:$0xf] %vm446, %v577
  %581 = vst.msk [vmem:[%s579 + $0x8] sm:$0xf] %vm446, %v578
  %v582 = vmul.f32 %v367, %v438
  %v583 = vmul.f32 %v369, %v438
  %v584 = vadd.f32 %v582, %v441
  %v585 = vadd.f32 %v583, %v441
  %v586 = vpack.c.bf16 %v584, %v584
  %v587 = vpack.c.bf16 %v585, %v585
  %590 = vrot.lane.b32.xlu0 %v586, 32
  %v591 = vpop.permute.xlu0 %590
  %592 = vrot.lane.b32.xlu0 %v587, 32
  %v593 = vpop.permute.xlu0 %592
  %596 = vst.msk [vmem:[%s579] sm:$0xf] %vm463, %v591
  %597 = vst.msk [vmem:[%s579 + $0x8] sm:$0xf] %vm463, %v593
  %v598 = vmul.f32 %v372, %v438
  %v599 = vmul.f32 %v374, %v438
  %v600 = vadd.f32 %v598, %v441
  %v601 = vadd.f32 %v599, %v441
  %v602 = vpack.c.bf16 %v600, %v600
  %v603 = vpack.c.bf16 %v601, %v601
  %606 = vrot.lane.b32.xlu0 %v602, 64
  %v607 = vpop.permute.xlu0 %606
  %608 = vrot.lane.b32.xlu0 %v603, 64
  %v609 = vpop.permute.xlu0 %608
  %612 = vst.msk [vmem:[%s579] sm:$0xf] %vm480, %v607
  %613 = vst.msk [vmem:[%s579 + $0x8] sm:$0xf] %vm480, %v609
  %v614 = vmul.f32 %v377, %v438
  %v615 = vmul.f32 %v379, %v438
  %v616 = vadd.f32 %v614, %v441
  %v617 = vadd.f32 %v615, %v441
  %v618 = vpack.c.bf16 %v616, %v616
  %v619 = vpack.c.bf16 %v617, %v617
  %622 = vrot.lane.b32.xlu0 %v618, 96
  %v623 = vpop.permute.xlu0 %622
  %624 = vrot.lane.b32.xlu0 %v619, 96
  %v625 = vpop.permute.xlu0 %624
  %628 = vst.msk [vmem:[%s579] sm:$0xf] %vm497, %v623
  %629 = vst.msk [vmem:[%s579 + $0x8] sm:$0xf] %vm497, %v625
  %v630 = vmul.f32 %v382, %v438
  %v631 = vmul.f32 %v384, %v438
  %v632 = vadd.f32 %v630, %v441
  %v633 = vadd.f32 %v631, %v441
  %v634 = vpack.c.bf16 %v632, %v632
  %v635 = vpack.c.bf16 %v633, %v633
  %636 = vst.msk [vmem:[%s579 + $0x4] sm:$0xf] %vm446, %v634
  %637 = vst.msk [vmem:[%s579 + $0xc] sm:$0xf] %vm446, %v635
  %v638 = vmul.f32 %v387, %v438
  %v639 = vmul.f32 %v389, %v438
  %v640 = vadd.f32 %v638, %v441
  %v641 = vadd.f32 %v639, %v441
  %v642 = vpack.c.bf16 %v640, %v640
  %v643 = vpack.c.bf16 %v641, %v641
  %s644 = scalar_lea.vmem [#allocation2], 48
  %645 = vst.msk [vmem:[%s644] sm:$0xf] %vm446, %v642
  %646 = vst.msk [vmem:[%s644 + $0x8] sm:$0xf] %vm446, %v643
  %v647 = vmul.f32 %v392, %v438
  %v648 = vmul.f32 %v394, %v438
  %v649 = vadd.f32 %v647, %v441
  %v650 = vadd.f32 %v648, %v441
  %v651 = vpack.c.bf16 %v649, %v649
  %v652 = vpack.c.bf16 %v650, %v650
  %655 = vrot.lane.b32.xlu0 %v651, 32
  %v656 = vpop.permute.xlu0 %655
  %657 = vrot.lane.b32.xlu0 %v652, 32
  %v658 = vpop.permute.xlu0 %657
  %661 = vst.msk [vmem:[%s644] sm:$0xf] %vm463, %v656
  %662 = vst.msk [vmem:[%s644 + $0x8] sm:$0xf] %vm463, %v658
  %v663 = vmul.f32 %v397, %v438
  %v664 = vmul.f32 %v399, %v438
  %v665 = vadd.f32 %v663, %v441
  %v666 = vadd.f32 %v664, %v441
  %v667 = vpack.c.bf16 %v665, %v665
  %v668 = vpack.c.bf16 %v666, %v666
  %671 = vrot.lane.b32.xlu0 %v667, 64
  %v672 = vpop.permute.xlu0 %671
  %673 = vrot.lane.b32.xlu0 %v668, 64
  %v674 = vpop.permute.xlu0 %673
  %677 = vst.msk [vmem:[%s644] sm:$0xf] %vm480, %v672
  %678 = vst.msk [vmem:[%s644 + $0x8] sm:$0xf] %vm480, %v674
  %v679 = vmul.f32 %v402, %v438
  %v680 = vmul.f32 %v404, %v438
  %v681 = vadd.f32 %v679, %v441
  %v682 = vadd.f32 %v680, %v441
  %v683 = vpack.c.bf16 %v681, %v681
  %v684 = vpack.c.bf16 %v682, %v682
  %687 = vrot.lane.b32.xlu0 %v683, 96
  %v688 = vpop.permute.xlu0 %687
  %689 = vrot.lane.b32.xlu0 %v684, 96
  %v690 = vpop.permute.xlu0 %689
  %693 = vst.msk [vmem:[%s644] sm:$0xf] %vm497, %v688
  %694 = vst.msk [vmem:[%s644 + $0x8] sm:$0xf] %vm497, %v690
  %v695 = vmul.f32 %v407, %v438
  %v696 = vmul.f32 %v409, %v438
  %v697 = vadd.f32 %v695, %v441
  %v698 = vadd.f32 %v696, %v441
  %v699 = vpack.c.bf16 %v697, %v697
  %v700 = vpack.c.bf16 %v698, %v698
  %701 = vst.msk [vmem:[%s644 + $0x4] sm:$0xf] %vm446, %v699
  %702 = vst.msk [vmem:[%s644 + $0xc] sm:$0xf] %vm446, %v700
  %v703 = vmul.f32 %v412, %v438
  %v704 = vmul.f32 %v414, %v438
  %v705 = vadd.f32 %v703, %v441
  %v706 = vadd.f32 %v704, %v441
  %v707 = vpack.c.bf16 %v705, %v705
  %v708 = vpack.c.bf16 %v706, %v706
  %s709 = scalar_lea.vmem [#allocation2], 64
  %710 = vst.msk [vmem:[%s709] sm:$0xf] %vm446, %v707
  %711 = vst.msk [vmem:[%s709 + $0x8] sm:$0xf] %vm446, %v708
  %v712 = vmul.f32 %v417, %v438
  %v713 = vmul.f32 %v419, %v438
  %v714 = vadd.f32 %v712, %v441
  %v715 = vadd.f32 %v713, %v441
  %v716 = vpack.c.bf16 %v714, %v714
  %v717 = vpack.c.bf16 %v715, %v715
  %720 = vrot.lane.b32.xlu0 %v716, 32
  %v721 = vpop.permute.xlu0 %720
  %722 = vrot.lane.b32.xlu0 %v717, 32
  %v723 = vpop.permute.xlu0 %722
  %726 = vst.msk [vmem:[%s709] sm:$0xf] %vm463, %v721
  %727 = vst.msk [vmem:[%s709 + $0x8] sm:$0xf] %vm463, %v723
  %v728 = vmul.f32 %v422, %v438
  %v729 = vmul.f32 %v424, %v438
  %v730 = vadd.f32 %v728, %v441
  %v731 = vadd.f32 %v729, %v441
  %v732 = vpack.c.bf16 %v730, %v730
  %v733 = vpack.c.bf16 %v731, %v731
  %736 = vrot.lane.b32.xlu0 %v732, 64
  %v737 = vpop.permute.xlu0 %736
  %738 = vrot.lane.b32.xlu0 %v733, 64
  %v739 = vpop.permute.xlu0 %738
  %742 = vst.msk [vmem:[%s709] sm:$0xf] %vm480, %v737
  %743 = vst.msk [vmem:[%s709 + $0x8] sm:$0xf] %vm480, %v739
  %v744 = vmul.f32 %v427, %v438
  %v745 = vmul.f32 %v429, %v438
  %v746 = vadd.f32 %v744, %v441
  %v747 = vadd.f32 %v745, %v441
  %v748 = vpack.c.bf16 %v746, %v746
  %v749 = vpack.c.bf16 %v747, %v747
  %752 = vrot.lane.b32.xlu0 %v748, 96
  %v753 = vpop.permute.xlu0 %752
  %754 = vrot.lane.b32.xlu0 %v749, 96
  %v755 = vpop.permute.xlu0 %754
  %758 = vst.msk [vmem:[%s709] sm:$0xf] %vm497, %v753
  %759 = vst.msk [vmem:[%s709 + $0x8] sm:$0xf] %vm497, %v755
  %v760 = vmul.f32 %v432, %v438
  %v761 = vmul.f32 %v434, %v438
  %v762 = vadd.f32 %v760, %v441
  %v763 = vadd.f32 %v761, %v441
  %v764 = vpack.c.bf16 %v762, %v762
  %v765 = vpack.c.bf16 %v763, %v763
  %766 = vst.msk [vmem:[%s709 + $0x4] sm:$0xf] %vm446, %v764
  %767 = vst.msk [vmem:[%s709 + $0xc] sm:$0xf] %vm446, %v765
  %v768 = vld [vmem:[%s6 + $0x2] sm:$0x1]
  %v769 = vld [vmem:[%s6 + $0x3] sm:$0x1]
  %v770 = vld [vmem:[#allocation2] sm:$0xf]
  %v771 = vld [vmem:[#allocation2 + $0x8] sm:$0xf]
  %s772 = scalar_lea.vmem %s2, 48
  %v773 = vld [vmem:[%s772 + $0x10] sm:$0xf]
  %v774 = vld [vmem:[%s772 + $0x14] sm:$0xf]
  %v775 = vld [vmem:[%s772 + $0x18] sm:$0xf]
  %v776 = vld [vmem:[%s772 + $0x1c] sm:$0xf]
  %v777 = vld [vmem:[%s772 + $0x20] sm:$0xf]
  %v778 = vld [vmem:[%s772 + $0x24] sm:$0xf]
  %v779 = vld [vmem:[%s772 + $0x28] sm:$0xf]
  %v780 = vld [vmem:[%s772 + $0x2c] sm:$0xf]
  %v781 = vld [vmem:[%s514] sm:$0xf]
  %v782 = vld [vmem:[%s514 + $0x8] sm:$0xf]
  %s783 = scalar_lea.vmem %s2, 96
  %v784 = vld [vmem:[%s783 + $0x10] sm:$0xf]
  %v785 = vld [vmem:[%s783 + $0x14] sm:$0xf]
  %v786 = vld [vmem:[%s783 + $0x18] sm:$0xf]
  %v787 = vld [vmem:[%s783 + $0x1c] sm:$0xf]
  %v788 = vld [vmem:[%s783 + $0x20] sm:$0xf]
  %v789 = vld [vmem:[%s783 + $0x24] sm:$0xf]
  %v790 = vld [vmem:[%s783 + $0x28] sm:$0xf]
  %v791 = vld [vmem:[%s783 + $0x2c] sm:$0xf]
  %v794 = vunpack.c.l.b16 %v781
  %v795 = vunpack.c.l.b16 %v782
  %v796 = vpack.c.b16 %v795, %v794
  %v805 = vunpack.c.l.b16 %v784
  %v806 = vunpack.c.l.b16 %v785
  %v807 = vunpack.c.l.b16 %v786
  %v808 = vunpack.c.l.b16 %v787
  %v809 = vunpack.c.l.b16 %v788
  %v810 = vunpack.c.l.b16 %v789
  %v811 = vunpack.c.l.b16 %v790
  %v812 = vunpack.c.l.b16 %v791
  %v813 = vpack.c.b16 %v806, %v805
  %v814 = vpack.c.b16 %v808, %v807
  %v815 = vpack.c.b16 %v810, %v809
  %v816 = vpack.c.b16 %v812, %v811
  %vm821 = vcmask 523264
  %v823 = vsel %vm821, %v796, 0
  %825 = vmatpush.bf16.msra.mxu0 0
  %826 = vmatpush.bf16.msra.mxu0 0
  %827 = vmatpush.bf16.msra.mxu0 0
  %828 = vmatpush.bf16.msra.mxu0 0
  %829 = vmatpush.bf16.msra.mxu0 %v816
  %830 = vmatpush.bf16.msra.mxu0 %v815
  %831 = vmatpush.bf16.msra.mxu0 %v814
  %832 = vmatpush.bf16.msra.mxu0 %v813
  %833 = vmatmul.bf16.gmra.mxu0 %v823
  %v834 = vpop.f32.mrf.mxu0
  %v835 = vadd.f32 0.0, %v834
  %v836 = vpop.f32.mrf.mxu0
  %v837 = vadd.f32 0.0, %v836
  %838 = vdwg.mxu0
  %v841 = vunpack.c.l.b16 %v770
  %v842 = vunpack.c.l.b16 %v771
  %v843 = vpack.c.b16 %v842, %v841
  %v852 = vunpack.c.l.b16 %v773
  %v853 = vunpack.c.l.b16 %v774
  %v854 = vunpack.c.l.b16 %v775
  %v855 = vunpack.c.l.b16 %v776
  %v856 = vunpack.c.l.b16 %v777
  %v857 = vunpack.c.l.b16 %v778
  %v858 = vunpack.c.l.b16 %v779
  %v859 = vunpack.c.l.b16 %v780
  %v860 = vpack.c.b16 %v853, %v852
  %v861 = vpack.c.b16 %v855, %v854
  %v862 = vpack.c.b16 %v857, %v856
  %v863 = vpack.c.b16 %v859, %v858
  %v869 = vsel %vm821, %v843, 0
  %871 = vmatpush.bf16.msra.mxu0 0
  %872 = vmatpush.bf16.msra.mxu0 0
  %873 = vmatpush.bf16.msra.mxu0 0
  %874 = vmatpush.bf16.msra.mxu0 0
  %875 = vmatpush.bf16.msra.mxu0 %v863
  %876 = vmatpush.bf16.msra.mxu0 %v862
  %877 = vmatpush.bf16.msra.mxu0 %v861
  %878 = vmatpush.bf16.msra.mxu0 %v860
  %879 = vmatmul.bf16.gmra.mxu0 %v869
  %v880 = vpop.f32.mrf.mxu0
  %v881 = vadd.f32 %v835, %v880
  %v882 = vpop.f32.mrf.mxu0
  %v883 = vadd.f32 %v837, %v882
  %884 = vdwg.mxu0
  %v885 = vperm.slane %v768, 0
  %v886 = vmul.f32 %v881, %v885
  %v887 = vmul.f32 %v883, %v885
  %v888 = vperm.slane %v769, 0
  %v889 = vadd.f32 %v886, %v888
  %v890 = vadd.f32 %v887, %v888
  %v891 = vmax.f32 %v889, 0.0
  %v892 = vmax.f32 %v890, 0.0
  %v893 = vld [vmem:[%s772] sm:$0xf]
  %v894 = vld [vmem:[%s772 + $0x4] sm:$0xf]
  %v895 = vld [vmem:[%s772 + $0x8] sm:$0xf]
  %v896 = vld [vmem:[%s772 + $0xc] sm:$0xf]
  %v897 = vld [vmem:[%s783] sm:$0xf]
  %v898 = vld [vmem:[%s783 + $0x4] sm:$0xf]
  %v899 = vld [vmem:[%s783 + $0x8] sm:$0xf]
  %v900 = vld [vmem:[%s783 + $0xc] sm:$0xf]
  %v905 = vunpack.c.l.b16 %v897
  %v906 = vunpack.c.l.b16 %v898
  %v907 = vunpack.c.l.b16 %v899
  %v908 = vunpack.c.l.b16 %v900
  %v909 = vpack.c.b16 %v906, %v905
  %v910 = vpack.c.b16 %v908, %v907
  %vm913 = vcmask 785408
  %v914 = vsel %vm913, %v796, 0
  %916 = vmatpush.bf16.msra.mxu0 0
  %917 = vmatpush.bf16.msra.mxu0 0
  %918 = vmatpush.bf16.msra.mxu0 %v816
  %919 = vmatpush.bf16.msra.mxu0 %v815
  %920 = vmatpush.bf16.msra.mxu0 %v814
  %921 = vmatpush.bf16.msra.mxu0 %v813
  %922 = vmatpush.bf16.msra.mxu0 %v910
  %923 = vmatpush.bf16.msra.mxu0 %v909
  %924 = vmatmul.bf16.gmra.mxu0 %v914
  %v925 = vpop.f32.mrf.mxu0
  %v926 = vadd.f32 0.0, %v925
  %v927 = vpop.f32.mrf.mxu0
  %v928 = vadd.f32 0.0, %v927
  %929 = vdwg.mxu0
  %v934 = vunpack.c.l.b16 %v893
  %v935 = vunpack.c.l.b16 %v894
  %v936 = vunpack.c.l.b16 %v895
  %v937 = vunpack.c.l.b16 %v896
  %v938 = vpack.c.b16 %v935, %v934
  %v939 = vpack.c.b16 %v937, %v936
  %v942 = vsel %vm913, %v843, 0
  %944 = vmatpush.bf16.msra.mxu0 0
  %945 = vmatpush.bf16.msra.mxu0 0
  %946 = vmatpush.bf16.msra.mxu0 %v863
  %947 = vmatpush.bf16.msra.mxu0 %v862
  %948 = vmatpush.bf16.msra.mxu0 %v861
  %949 = vmatpush.bf16.msra.mxu0 %v860
  %950 = vmatpush.bf16.msra.mxu0 %v939
  %951 = vmatpush.bf16.msra.mxu0 %v938
  %952 = vmatmul.bf16.gmra.mxu0 %v942
  %v953 = vpop.f32.mrf.mxu0
  %v954 = vadd.f32 %v926, %v953
  %v955 = vpop.f32.mrf.mxu0
  %v956 = vadd.f32 %v928, %v955
  %957 = vdwg.mxu0
  %v958 = vmul.f32 %v954, %v885
  %v959 = vmul.f32 %v956, %v885
  %v960 = vadd.f32 %v958, %v888
  %v961 = vadd.f32 %v959, %v888
  %v962 = vmax.f32 %v960, 0.0
  %v963 = vmax.f32 %v961, 0.0
  %v964 = vmax.f32 %v891, %v962
  %v965 = vmax.f32 %v892, %v963
  %v966 = vld [vmem:[%s2 + $0x10] sm:$0xf]
  %v967 = vld [vmem:[%s2 + $0x14] sm:$0xf]
  %v968 = vld [vmem:[%s2 + $0x18] sm:$0xf]
  %v969 = vld [vmem:[%s2 + $0x1c] sm:$0xf]
  %v970 = vld [vmem:[%s2 + $0x20] sm:$0xf]
  %v971 = vld [vmem:[%s2 + $0x24] sm:$0xf]
  %v972 = vld [vmem:[%s2 + $0x28] sm:$0xf]
  %v973 = vld [vmem:[%s2 + $0x2c] sm:$0xf]
  %974 = vmatpush.bf16.msra.mxu0 0
  %975 = vmatpush.bf16.msra.mxu0 0
  %976 = vmatpush.bf16.msra.mxu0 0
  %977 = vmatpush.bf16.msra.mxu0 0
  %978 = vmatpush.bf16.msra.mxu0 %v863
  %979 = vmatpush.bf16.msra.mxu0 %v862
  %980 = vmatpush.bf16.msra.mxu0 %v861
  %981 = vmatpush.bf16.msra.mxu0 %v860
  %982 = vmatmul.bf16.gmra.mxu0 %v823
  %v983 = vpop.f32.mrf.mxu0
  %v984 = vadd.f32 0.0, %v983
  %v985 = vpop.f32.mrf.mxu0
  %v986 = vadd.f32 0.0, %v985
  %987 = vdwg.mxu0
  %v996 = vunpack.c.l.b16 %v966
  %v997 = vunpack.c.l.b16 %v967
  %v998 = vunpack.c.l.b16 %v968
  %v999 = vunpack.c.l.b16 %v969
  %v1000 = vunpack.c.l.b16 %v970
  %v1001 = vunpack.c.l.b16 %v971
  %v1002 = vunpack.c.l.b16 %v972
  %v1003 = vunpack.c.l.b16 %v973
  %v1004 = vpack.c.b16 %v997, %v996
  %v1005 = vpack.c.b16 %v999, %v998
  %v1006 = vpack.c.b16 %v1001, %v1000
  %v1007 = vpack.c.b16 %v1003, %v1002
  %1012 = vmatpush.bf16.msra.mxu0 0
  %1013 = vmatpush.bf16.msra.mxu0 0
  %1014 = vmatpush.bf16.msra.mxu0 0
  %1015 = vmatpush.bf16.msra.mxu0 0
  %1016 = vmatpush.bf16.msra.mxu0 %v1007
  %1017 = vmatpush.bf16.msra.mxu0 %v1006
  %1018 = vmatpush.bf16.msra.mxu0 %v1005
  %1019 = vmatpush.bf16.msra.mxu0 %v1004
  %1020 = vmatmul.bf16.gmra.mxu0 %v869
  %v1021 = vpop.f32.mrf.mxu0
  %v1022 = vadd.f32 %v984, %v1021
  %v1023 = vpop.f32.mrf.mxu0
  %v1024 = vadd.f32 %v986, %v1023
  %1025 = vdwg.mxu0
  %v1026 = vld [vmem:[%s579] sm:$0xf]
  %v1027 = vld [vmem:[%s579 + $0x8] sm:$0xf]
  %v1030 = vunpack.c.l.b16 %v1026
  %v1031 = vunpack.c.l.b16 %v1027
  %v1032 = vpack.c.b16 %v1031, %v1030
  %v1034 = vsel %vm821, %v1032, 0
  %1036 = vmatpush.bf16.msra.mxu0 0
  %1037 = vmatpush.bf16.msra.mxu0 0
  %1038 = vmatpush.bf16.msra.mxu0 0
  %1039 = vmatpush.bf16.msra.mxu0 0
  %1040 = vmatpush.bf16.msra.mxu0 %v816
  %1041 = vmatpush.bf16.msra.mxu0 %v815
  %1042 = vmatpush.bf16.msra.mxu0 %v814
  %1043 = vmatpush.bf16.msra.mxu0 %v813
  %1044 = vmatmul.bf16.gmra.mxu0 %v1034
  %v1045 = vpop.f32.mrf.mxu0
  %v1046 = vadd.f32 0.0, %v1045
  %v1047 = vpop.f32.mrf.mxu0
  %v1048 = vadd.f32 0.0, %v1047
  %1049 = vdwg.mxu0
  %v1050 = vadd.f32 %v1022, %v1046
  %v1051 = vadd.f32 %v1024, %v1048
  %v1052 = vmul.f32 %v1050, %v885
  %v1053 = vmul.f32 %v1051, %v885
  %v1054 = vadd.f32 %v1052, %v888
  %v1055 = vadd.f32 %v1053, %v888
  %v1056 = vmax.f32 %v1054, 0.0
  %v1057 = vmax.f32 %v1055, 0.0
  %v1058 = vmax.f32 %v964, %v1056
  %v1059 = vmax.f32 %v965, %v1057
  %v1060 = vld [vmem:[%s2] sm:$0xf]
  %v1061 = vld [vmem:[%s2 + $0x4] sm:$0xf]
  %v1062 = vld [vmem:[%s2 + $0x8] sm:$0xf]
  %v1063 = vld [vmem:[%s2 + $0xc] sm:$0xf]
  %1064 = vmatpush.bf16.msra.mxu0 0
  %1065 = vmatpush.bf16.msra.mxu0 0
  %1066 = vmatpush.bf16.msra.mxu0 %v863
  %1067 = vmatpush.bf16.msra.mxu0 %v862
  %1068 = vmatpush.bf16.msra.mxu0 %v861
  %1069 = vmatpush.bf16.msra.mxu0 %v860
  %1070 = vmatpush.bf16.msra.mxu0 %v939
  %1071 = vmatpush.bf16.msra.mxu0 %v938
  %1072 = vmatmul.bf16.gmra.mxu0 %v914
  %v1073 = vpop.f32.mrf.mxu0
  %v1074 = vadd.f32 0.0, %v1073
  %v1075 = vpop.f32.mrf.mxu0
  %v1076 = vadd.f32 0.0, %v1075
  %1077 = vdwg.mxu0
  %v1082 = vunpack.c.l.b16 %v1060
  %v1083 = vunpack.c.l.b16 %v1061
  %v1084 = vunpack.c.l.b16 %v1062
  %v1085 = vunpack.c.l.b16 %v1063
  %v1086 = vpack.c.b16 %v1083, %v1082
  %v1087 = vpack.c.b16 %v1085, %v1084
  %1090 = vmatpush.bf16.msra.mxu0 0
  %1091 = vmatpush.bf16.msra.mxu0 0
  %1092 = vmatpush.bf16.msra.mxu0 %v1007
  %1093 = vmatpush.bf16.msra.mxu0 %v1006
  %1094 = vmatpush.bf16.msra.mxu0 %v1005
  %1095 = vmatpush.bf16.msra.mxu0 %v1004
  %1096 = vmatpush.bf16.msra.mxu0 %v1087
  %1097 = vmatpush.bf16.msra.mxu0 %v1086
  %1098 = vmatmul.bf16.gmra.mxu0 %v942
  %v1099 = vpop.f32.mrf.mxu0
  %v1100 = vadd.f32 %v1074, %v1099
  %v1101 = vpop.f32.mrf.mxu0
  %v1102 = vadd.f32 %v1076, %v1101
  %1103 = vdwg.mxu0
  %v1104 = vsel %vm913, %v1032, 0
  %1106 = vmatpush.bf16.msra.mxu0 0
  %1107 = vmatpush.bf16.msra.mxu0 0
  %1108 = vmatpush.bf16.msra.mxu0 %v816
  %1109 = vmatpush.bf16.msra.mxu0 %v815
  %1110 = vmatpush.bf16.msra.mxu0 %v814
  %1111 = vmatpush.bf16.msra.mxu0 %v813
  %1112 = vmatpush.bf16.msra.mxu0 %v910
  %1113 = vmatpush.bf16.msra.mxu0 %v909
  %1114 = vmatmul.bf16.gmra.mxu0 %v1104
  %v1115 = vpop.f32.mrf.mxu0
  %v1116 = vadd.f32 0.0, %v1115
  %v1117 = vpop.f32.mrf.mxu0
  %v1118 = vadd.f32 0.0, %v1117
  %1119 = vdwg.mxu0
  %v1120 = vadd.f32 %v1100, %v1116
  %v1121 = vadd.f32 %v1102, %v1118
  %v1122 = vmul.f32 %v1120, %v885
  %v1123 = vmul.f32 %v1121, %v885
  %v1124 = vadd.f32 %v1122, %v888
  %v1125 = vadd.f32 %v1123, %v888
  %v1126 = vmax.f32 %v1124, 0.0
  %v1127 = vmax.f32 %v1125, 0.0
  %v1128 = vmax.f32 %v1058, %v1126
  %v1129 = vmax.f32 %v1059, %v1127
  %v1130 = vpack.c.bf16 %v1128, %v1128
  %v1131 = vpack.c.bf16 %v1129, %v1129
  %1132 = vst.msk [vmem:[#allocation3] sm:$0xf] %vm446, %v1130
  %1133 = vst.msk [vmem:[#allocation3 + $0x4] sm:$0xf] %vm446, %v1131
  %v1134 = vld [vmem:[#allocation2] sm:$0xf]
  %v1135 = vld [vmem:[#allocation2 + $0x8] sm:$0xf]
  %v1136 = vld [vmem:[%s772] sm:$0xf]
  %v1137 = vld [vmem:[%s772 + $0x4] sm:$0xf]
  %v1138 = vld [vmem:[%s772 + $0x8] sm:$0xf]
  %v1139 = vld [vmem:[%s772 + $0xc] sm:$0xf]
  %v1140 = vld [vmem:[%s772 + $0x10] sm:$0xf]
  %v1141 = vld [vmem:[%s772 + $0x14] sm:$0xf]
  %v1142 = vld [vmem:[%s772 + $0x18] sm:$0xf]
  %v1143 = vld [vmem:[%s772 + $0x1c] sm:$0xf]
  %v1144 = vld [vmem:[%s772 + $0x20] sm:$0xf]
  %v1145 = vld [vmem:[%s772 + $0x24] sm:$0xf]
  %v1146 = vld [vmem:[%s772 + $0x28] sm:$0xf]
  %v1147 = vld [vmem:[%s772 + $0x2c] sm:$0xf]
  %v1148 = vld [vmem:[%s514] sm:$0xf]
  %v1149 = vld [vmem:[%s514 + $0x8] sm:$0xf]
  %v1150 = vld [vmem:[%s783] sm:$0xf]
  %v1151 = vld [vmem:[%s783 + $0x4] sm:$0xf]
  %v1152 = vld [vmem:[%s783 + $0x8] sm:$0xf]
  %v1153 = vld [vmem:[%s783 + $0xc] sm:$0xf]
  %v1154 = vld [vmem:[%s783 + $0x10] sm:$0xf]
  %v1155 = vld [vmem:[%s783 + $0x14] sm:$0xf]
  %v1156 = vld [vmem:[%s783 + $0x18] sm:$0xf]
  %v1157 = vld [vmem:[%s783 + $0x1c] sm:$0xf]
  %v1158 = vld [vmem:[%s783 + $0x20] sm:$0xf]
  %v1159 = vld [vmem:[%s783 + $0x24] sm:$0xf]
  %v1160 = vld [vmem:[%s783 + $0x28] sm:$0xf]
  %v1161 = vld [vmem:[%s783 + $0x2c] sm:$0xf]
  %v1164 = vunpack.c.l.b16 %v1148
  %v1165 = vunpack.c.l.b16 %v1149
  %v1166 = vpack.c.b16 %v1165, %v1164
  %1167 = vrot.lane.b32.xlu0 %v1166, 96
  %v1168 = vpop.permute.xlu0 %1167
  %v1181 = vunpack.c.l.b16 %v1150
  %v1182 = vunpack.c.l.b16 %v1151
  %v1183 = vunpack.c.l.b16 %v1152
  %v1184 = vunpack.c.l.b16 %v1153
  %v1185 = vunpack.c.l.b16 %v1154
  %v1186 = vunpack.c.l.b16 %v1155
  %v1187 = vunpack.c.l.b16 %v1156
  %v1188 = vunpack.c.l.b16 %v1157
  %v1189 = vunpack.c.l.b16 %v1158
  %v1190 = vunpack.c.l.b16 %v1159
  %v1191 = vunpack.c.l.b16 %v1160
  %v1192 = vunpack.c.l.b16 %v1161
  %v1193 = vpack.c.b16 %v1182, %v1181
  %v1194 = vpack.c.b16 %v1184, %v1183
  %v1195 = vpack.c.b16 %v1186, %v1185
  %v1196 = vpack.c.b16 %v1188, %v1187
  %v1197 = vpack.c.b16 %v1190, %v1189
  %v1198 = vpack.c.b16 %v1192, %v1191
  %v1206 = vsel %vm913, %v1168, 0
  %1208 = vmatpush.bf16.msra.mxu0 0
  %1209 = vmatpush.bf16.msra.mxu0 0
  %1210 = vmatpush.bf16.msra.mxu0 %v1198
  %1211 = vmatpush.bf16.msra.mxu0 %v1197
  %1212 = vmatpush.bf16.msra.mxu0 %v1196
  %1213 = vmatpush.bf16.msra.mxu0 %v1195
  %1214 = vmatpush.bf16.msra.mxu0 %v1194
  %1215 = vmatpush.bf16.msra.mxu0 %v1193
  %1216 = vmatmul.bf16.gmra.mxu0 %v1206
  %v1217 = vpop.f32.mrf.mxu0
  %v1218 = vadd.f32 0.0, %v1217
  %v1219 = vpop.f32.mrf.mxu0
  %v1220 = vadd.f32 0.0, %v1219
  %1221 = vdwg.mxu0
  %v1224 = vunpack.c.l.b16 %v1134
  %v1225 = vunpack.c.l.b16 %v1135
  %v1226 = vpack.c.b16 %v1225, %v1224
  %1227 = vrot.lane.b32.xlu0 %v1226, 96
  %v1228 = vpop.permute.xlu0 %1227
  %v1241 = vunpack.c.l.b16 %v1136
  %v1242 = vunpack.c.l.b16 %v1137
  %v1243 = vunpack.c.l.b16 %v1138
  %v1244 = vunpack.c.l.b16 %v1139
  %v1245 = vunpack.c.l.b16 %v1140
  %v1246 = vunpack.c.l.b16 %v1141
  %v1247 = vunpack.c.l.b16 %v1142
  %v1248 = vunpack.c.l.b16 %v1143
  %v1249 = vunpack.c.l.b16 %v1144
  %v1250 = vunpack.c.l.b16 %v1145
  %v1251 = vunpack.c.l.b16 %v1146
  %v1252 = vunpack.c.l.b16 %v1147
  %v1253 = vpack.c.b16 %v1242, %v1241
  %v1254 = vpack.c.b16 %v1244, %v1243
  %v1255 = vpack.c.b16 %v1246, %v1245
  %v1256 = vpack.c.b16 %v1248, %v1247
  %v1257 = vpack.c.b16 %v1250, %v1249
  %v1258 = vpack.c.b16 %v1252, %v1251
  %v1266 = vsel %vm913, %v1228, 0
  %1268 = vmatpush.bf16.msra.mxu0 0
  %1269 = vmatpush.bf16.msra.mxu0 0
  %1270 = vmatpush.bf16.msra.mxu0 %v1258
  %1271 = vmatpush.bf16.msra.mxu0 %v1257
  %1272 = vmatpush.bf16.msra.mxu0 %v1256
  %1273 = vmatpush.bf16.msra.mxu0 %v1255
  %1274 = vmatpush.bf16.msra.mxu0 %v1254
  %1275 = vmatpush.bf16.msra.mxu0 %v1253
  %1276 = vmatmul.bf16.gmra.mxu0 %v1266
  %v1277 = vpop.f32.mrf.mxu0
  %v1278 = vadd.f32 %v1218, %v1277
  %v1279 = vpop.f32.mrf.mxu0
  %v1280 = vadd.f32 %v1220, %v1279
  %1281 = vdwg.mxu0
  %v1282 = vmul.f32 %v1278, %v885
  %v1283 = vmul.f32 %v1280, %v885
  %v1284 = vadd.f32 %v1282, %v888
  %v1285 = vadd.f32 %v1283, %v888
  %v1286 = vmax.f32 %v1284, 0.0
  %v1287 = vmax.f32 %v1285, 0.0
  %v1288 = vld [vmem:[#allocation2] sm:$0xff]
  %v1289 = vld [vmem:[#allocation2 + $0x8] sm:$0xff]
  %v1290 = vld [vmem:[%s514] sm:$0xff]
  %v1291 = vld [vmem:[%s514 + $0x8] sm:$0xff]
  %v1294 = vunpack.c.l.b16 %v1290
  %v1295 = vunpack.c.h.b16 %v1290
  %v1296 = vunpack.c.l.b16 %v1291
  %v1297 = vunpack.c.h.b16 %v1291
  %v1298 = vpack.c.b16 %v1296, %v1294
  %v1299 = vpack.c.b16 %v1297, %v1295
  %1300 = vrot.lane.b32.xlu0 %v1298, 64
  %v1301 = vpop.permute.xlu0 %1300
  %1302 = vrot.lane.b32.xlu0 %v1299, 64
  %v1303 = vpop.permute.xlu0 %1302
  %vm1304 = vcmask 523264
  %v1305 = vsel %vm1304, %v1301, %v1303
  %v1307 = vsel %vm913, %v1305, 0
  %1309 = vmatpush.bf16.msra.mxu0 0
  %1310 = vmatpush.bf16.msra.mxu0 0
  %1311 = vmatpush.bf16.msra.mxu0 %v1198
  %1312 = vmatpush.bf16.msra.mxu0 %v1197
  %1313 = vmatpush.bf16.msra.mxu0 %v1196
  %1314 = vmatpush.bf16.msra.mxu0 %v1195
  %1315 = vmatpush.bf16.msra.mxu0 %v1194
  %1316 = vmatpush.bf16.msra.mxu0 %v1193
  %1317 = vmatmul.bf16.gmra.mxu0 %v1307
  %v1318 = vpop.f32.mrf.mxu0
  %v1319 = vadd.f32 0.0, %v1318
  %v1320 = vpop.f32.mrf.mxu0
  %v1321 = vadd.f32 0.0, %v1320
  %1322 = vdwg.mxu0
  %v1325 = vunpack.c.l.b16 %v1288
  %v1326 = vunpack.c.h.b16 %v1288
  %v1327 = vunpack.c.l.b16 %v1289
  %v1328 = vunpack.c.h.b16 %v1289
  %v1329 = vpack.c.b16 %v1327, %v1325
  %v1330 = vpack.c.b16 %v1328, %v1326
  %1331 = vrot.lane.b32.xlu0 %v1329, 64
  %v1332 = vpop.permute.xlu0 %1331
  %1333 = vrot.lane.b32.xlu0 %v1330, 64
  %v1334 = vpop.permute.xlu0 %1333
  %v1335 = vsel %vm1304, %v1332, %v1334
  %v1337 = vsel %vm913, %v1335, 0
  %1339 = vmatpush.bf16.msra.mxu0 0
  %1340 = vmatpush.bf16.msra.mxu0 0
  %1341 = vmatpush.bf16.msra.mxu0 %v1258
  %1342 = vmatpush.bf16.msra.mxu0 %v1257
  %1343 = vmatpush.bf16.msra.mxu0 %v1256
  %1344 = vmatpush.bf16.msra.mxu0 %v1255
  %1345 = vmatpush.bf16.msra.mxu0 %v1254
  %1346 = vmatpush.bf16.msra.mxu0 %v1253
  %1347 = vmatmul.bf16.gmra.mxu0 %v1337
  %v1348 = vpop.f32.mrf.mxu0
  %v1349 = vadd.f32 %v1319, %v1348
  %v1350 = vpop.f32.mrf.mxu0
  %v1351 = vadd.f32 %v1321, %v1350
  %1352 = vdwg.mxu0
  %v1353 = vmul.f32 %v1349, %v885
  %v1354 = vmul.f32 %v1351, %v885
  %v1355 = vadd.f32 %v1353, %v888
  %v1356 = vadd.f32 %v1354, %v888
  %v1357 = vmax.f32 %v1355, 0.0
  %v1358 = vmax.f32 %v1356, 0.0
  %v1359 = vmax.f32 %v1286, %v1357
  %v1360 = vmax.f32 %v1287, %v1358
  %v1361 = vld [vmem:[%s2] sm:$0xf]
  %v1362 = vld [vmem:[%s2 + $0x4] sm:$0xf]
  %v1363 = vld [vmem:[%s2 + $0x8] sm:$0xf]
  %v1364 = vld [vmem:[%s2 + $0xc] sm:$0xf]
  %v1365 = vld [vmem:[%s2 + $0x10] sm:$0xf]
  %v1366 = vld [vmem:[%s2 + $0x14] sm:$0xf]
  %v1367 = vld [vmem:[%s2 + $0x18] sm:$0xf]
  %v1368 = vld [vmem:[%s2 + $0x1c] sm:$0xf]
  %v1369 = vld [vmem:[%s2 + $0x20] sm:$0xf]
  %v1370 = vld [vmem:[%s2 + $0x24] sm:$0xf]
  %v1371 = vld [vmem:[%s2 + $0x28] sm:$0xf]
  %v1372 = vld [vmem:[%s2 + $0x2c] sm:$0xf]
  %1373 = vmatpush.bf16.msra.mxu0 0
  %1374 = vmatpush.bf16.msra.mxu0 0
  %1375 = vmatpush.bf16.msra.mxu0 %v1258
  %1376 = vmatpush.bf16.msra.mxu0 %v1257
  %1377 = vmatpush.bf16.msra.mxu0 %v1256
  %1378 = vmatpush.bf16.msra.mxu0 %v1255
  %1379 = vmatpush.bf16.msra.mxu0 %v1254
  %1380 = vmatpush.bf16.msra.mxu0 %v1253
  %1381 = vmatmul.bf16.gmra.mxu0 %v1206
  %v1382 = vpop.f32.mrf.mxu0
  %v1383 = vadd.f32 0.0, %v1382
  %v1384 = vpop.f32.mrf.mxu0
  %v1385 = vadd.f32 0.0, %v1384
  %1386 = vdwg.mxu0
  %v1399 = vunpack.c.l.b16 %v1361
  %v1400 = vunpack.c.l.b16 %v1362
  %v1401 = vunpack.c.l.b16 %v1363
  %v1402 = vunpack.c.l.b16 %v1364
  %v1403 = vunpack.c.l.b16 %v1365
  %v1404 = vunpack.c.l.b16 %v1366
  %v1405 = vunpack.c.l.b16 %v1367
  %v1406 = vunpack.c.l.b16 %v1368
  %v1407 = vunpack.c.l.b16 %v1369
  %v1408 = vunpack.c.l.b16 %v1370
  %v1409 = vunpack.c.l.b16 %v1371
  %v1410 = vunpack.c.l.b16 %v1372
  %v1411 = vpack.c.b16 %v1400, %v1399
  %v1412 = vpack.c.b16 %v1402, %v1401
  %v1413 = vpack.c.b16 %v1404, %v1403
  %v1414 = vpack.c.b16 %v1406, %v1405
  %v1415 = vpack.c.b16 %v1408, %v1407
  %v1416 = vpack.c.b16 %v1410, %v1409
  %1423 = vmatpush.bf16.msra.mxu0 0
  %1424 = vmatpush.bf16.msra.mxu0 0
  %1425 = vmatpush.bf16.msra.mxu0 %v1416
  %1426 = vmatpush.bf16.msra.mxu0 %v1415
  %1427 = vmatpush.bf16.msra.mxu0 %v1414
  %1428 = vmatpush.bf16.msra.mxu0 %v1413
  %1429 = vmatpush.bf16.msra.mxu0 %v1412
  %1430 = vmatpush.bf16.msra.mxu0 %v1411
  %1431 = vmatmul.bf16.gmra.mxu0 %v1266
  %v1432 = vpop.f32.mrf.mxu0
  %v1433 = vadd.f32 %v1383, %v1432
  %v1434 = vpop.f32.mrf.mxu0
  %v1435 = vadd.f32 %v1385, %v1434
  %1436 = vdwg.mxu0
  %v1437 = vld [vmem:[%s579] sm:$0xf]
  %v1438 = vld [vmem:[%s579 + $0x8] sm:$0xf]
  %v1441 = vunpack.c.l.b16 %v1437
  %v1442 = vunpack.c.l.b16 %v1438
  %v1443 = vpack.c.b16 %v1442, %v1441
  %1444 = vrot.lane.b32.xlu0 %v1443, 96
  %v1445 = vpop.permute.xlu0 %1444
  %v1447 = vsel %vm913, %v1445, 0
  %1449 = vmatpush.bf16.msra.mxu0 0
  %1450 = vmatpush.bf16.msra.mxu0 0
  %1451 = vmatpush.bf16.msra.mxu0 %v1198
  %1452 = vmatpush.bf16.msra.mxu0 %v1197
  %1453 = vmatpush.bf16.msra.mxu0 %v1196
  %1454 = vmatpush.bf16.msra.mxu0 %v1195
  %1455 = vmatpush.bf16.msra.mxu0 %v1194
  %1456 = vmatpush.bf16.msra.mxu0 %v1193
  %1457 = vmatmul.bf16.gmra.mxu0 %v1447
  %v1458 = vpop.f32.mrf.mxu0
  %v1459 = vadd.f32 0.0, %v1458
  %v1460 = vpop.f32.mrf.mxu0
  %v1461 = vadd.f32 0.0, %v1460
  %1462 = vdwg.mxu0
  %v1463 = vadd.f32 %v1433, %v1459
  %v1464 = vadd.f32 %v1435, %v1461
  %v1465 = vmul.f32 %v1463, %v885
  %v1466 = vmul.f32 %v1464, %v885
  %v1467 = vadd.f32 %v1465, %v888
  %v1468 = vadd.f32 %v1466, %v888
  %v1469 = vmax.f32 %v1467, 0.0
  %v1470 = vmax.f32 %v1468, 0.0
  %v1471 = vmax.f32 %v1359, %v1469
  %v1472 = vmax.f32 %v1360, %v1470
  %1473 = vmatpush.bf16.msra.mxu0 0
  %1474 = vmatpush.bf16.msra.mxu0 0
  %1475 = vmatpush.bf16.msra.mxu0 %v1258
  %1476 = vmatpush.bf16.msra.mxu0 %v1257
  %1477 = vmatpush.bf16.msra.mxu0 %v1256
  %1478 = vmatpush.bf16.msra.mxu0 %v1255
  %1479 = vmatpush.bf16.msra.mxu0 %v1254
  %1480 = vmatpush.bf16.msra.mxu0 %v1253
  %1481 = vmatmul.bf16.gmra.mxu0 %v1307
  %v1482 = vpop.f32.mrf.mxu0
  %v1483 = vadd.f32 0.0, %v1482
  %v1484 = vpop.f32.mrf.mxu0
  %v1485 = vadd.f32 0.0, %v1484
  %1486 = vdwg.mxu0
  %1487 = vmatpush.bf16.msra.mxu0 0
  %1488 = vmatpush.bf16.msra.mxu0 0
  %1489 = vmatpush.bf16.msra.mxu0 %v1416
  %1490 = vmatpush.bf16.msra.mxu0 %v1415
  %1491 = vmatpush.bf16.msra.mxu0 %v1414
  %1492 = vmatpush.bf16.msra.mxu0 %v1413
  %1493 = vmatpush.bf16.msra.mxu0 %v1412
  %1494 = vmatpush.bf16.msra.mxu0 %v1411
  %1495 = vmatmul.bf16.gmra.mxu0 %v1337
  %v1496 = vpop.f32.mrf.mxu0
  %v1497 = vadd.f32 %v1483, %v1496
  %v1498 = vpop.f32.mrf.mxu0
  %v1499 = vadd.f32 %v1485, %v1498
  %1500 = vdwg.mxu0
  %v1501 = vld [vmem:[%s579] sm:$0xff]
  %v1502 = vld [vmem:[%s579 + $0x8] sm:$0xff]
  %v1505 = vunpack.c.l.b16 %v1501
  %v1506 = vunpack.c.h.b16 %v1501
  %v1507 = vunpack.c.l.b16 %v1502
  %v1508 = vunpack.c.h.b16 %v1502
  %v1509 = vpack.c.b16 %v1507, %v1505
  %v1510 = vpack.c.b16 %v1508, %v1506
  %1511 = vrot.lane.b32.xlu0 %v1509, 64
  %v1512 = vpop.permute.xlu0 %1511
  %1513 = vrot.lane.b32.xlu0 %v1510, 64
  %v1514 = vpop.permute.xlu0 %1513
  %v1515 = vsel %vm1304, %v1512, %v1514
  %v1517 = vsel %vm913, %v1515, 0
  %1519 = vmatpush.bf16.msra.mxu0 0
  %1520 = vmatpush.bf16.msra.mxu0 0
  %1521 = vmatpush.bf16.msra.mxu0 %v1198
  %1522 = vmatpush.bf16.msra.mxu0 %v1197
  %1523 = vmatpush.bf16.msra.mxu0 %v1196
  %1524 = vmatpush.bf16.msra.mxu0 %v1195
  %1525 = vmatpush.bf16.msra.mxu0 %v1194
  %1526 = vmatpush.bf16.msra.mxu0 %v1193
  %1527 = vmatmul.bf16.gmra.mxu0 %v1517
  %v1528 = vpop.f32.mrf.mxu0
  %v1529 = vadd.f32 0.0, %v1528
  %v1530 = vpop.f32.mrf.mxu0
  %v1531 = vadd.f32 0.0, %v1530
  %1532 = vdwg.mxu0
  %v1533 = vadd.f32 %v1497, %v1529
  %v1534 = vadd.f32 %v1499, %v1531
  %v1535 = vmul.f32 %v1533, %v885
  %v1536 = vmul.f32 %v1534, %v885
  %v1537 = vadd.f32 %v1535, %v888
  %v1538 = vadd.f32 %v1536, %v888
  %v1539 = vmax.f32 %v1537, 0.0
  %v1540 = vmax.f32 %v1538, 0.0
  %v1541 = vmax.f32 %v1471, %v1539
  %v1542 = vmax.f32 %v1472, %v1540
  %v1543 = vpack.c.bf16 %v1541, %v1541
  %v1544 = vpack.c.bf16 %v1542, %v1542
  %1547 = vrot.lane.b32.xlu0 %v1543, 32
  %v1548 = vpop.permute.xlu0 %1547
  %1549 = vrot.lane.b32.xlu0 %v1544, 32
  %v1550 = vpop.permute.xlu0 %1549
  %1553 = vst.msk [vmem:[#allocation3] sm:$0xf] %vm463, %v1548
  %1554 = vst.msk [vmem:[#allocation3 + $0x4] sm:$0xf] %vm463, %v1550
  %v1555 = vld [vmem:[%s514] sm:$0xf]
  %v1556 = vld [vmem:[%s514 + $0x8] sm:$0xf]
  %v1557 = vld [vmem:[%s2 + $0x10] sm:$0xf]
  %v1558 = vld [vmem:[%s2 + $0x14] sm:$0xf]
  %v1559 = vld [vmem:[%s2 + $0x18] sm:$0xf]
  %v1560 = vld [vmem:[%s2 + $0x1c] sm:$0xf]
  %v1561 = vld [vmem:[%s2 + $0x20] sm:$0xf]
  %v1562 = vld [vmem:[%s2 + $0x24] sm:$0xf]
  %v1563 = vld [vmem:[%s2 + $0x28] sm:$0xf]
  %v1564 = vld [vmem:[%s2 + $0x2c] sm:$0xf]
  %v1565 = vld [vmem:[%s579] sm:$0xf]
  %v1566 = vld [vmem:[%s579 + $0x8] sm:$0xf]
  %v1567 = vld [vmem:[%s772 + $0x10] sm:$0xf]
  %v1568 = vld [vmem:[%s772 + $0x14] sm:$0xf]
  %v1569 = vld [vmem:[%s772 + $0x18] sm:$0xf]
  %v1570 = vld [vmem:[%s772 + $0x1c] sm:$0xf]
  %v1571 = vld [vmem:[%s772 + $0x20] sm:$0xf]
  %v1572 = vld [vmem:[%s772 + $0x24] sm:$0xf]
  %v1573 = vld [vmem:[%s772 + $0x28] sm:$0xf]
  %v1574 = vld [vmem:[%s772 + $0x2c] sm:$0xf]
  %v1577 = vunpack.c.l.b16 %v1565
  %v1578 = vunpack.c.l.b16 %v1566
  %v1579 = vpack.c.b16 %v1578, %v1577
  %v1588 = vunpack.c.l.b16 %v1567
  %v1589 = vunpack.c.l.b16 %v1568
  %v1590 = vunpack.c.l.b16 %v1569
  %v1591 = vunpack.c.l.b16 %v1570
  %v1592 = vunpack.c.l.b16 %v1571
  %v1593 = vunpack.c.l.b16 %v1572
  %v1594 = vunpack.c.l.b16 %v1573
  %v1595 = vunpack.c.l.b16 %v1574
  %v1596 = vpack.c.b16 %v1589, %v1588
  %v1597 = vpack.c.b16 %v1591, %v1590
  %v1598 = vpack.c.b16 %v1593, %v1592
  %v1599 = vpack.c.b16 %v1595, %v1594
  %v1605 = vsel %vm821, %v1579, 0
  %1607 = vmatpush.bf16.msra.mxu0 0
  %1608 = vmatpush.bf16.msra.mxu0 0
  %1609 = vmatpush.bf16.msra.mxu0 0
  %1610 = vmatpush.bf16.msra.mxu0 0
  %1611 = vmatpush.bf16.msra.mxu0 %v1599
  %1612 = vmatpush.bf16.msra.mxu0 %v1598
  %1613 = vmatpush.bf16.msra.mxu0 %v1597
  %1614 = vmatpush.bf16.msra.mxu0 %v1596
  %1615 = vmatmul.bf16.gmra.mxu0 %v1605
  %v1616 = vpop.f32.mrf.mxu0
  %v1617 = vadd.f32 0.0, %v1616
  %v1618 = vpop.f32.mrf.mxu0
  %v1619 = vadd.f32 0.0, %v1618
  %1620 = vdwg.mxu0
  %v1623 = vunpack.c.l.b16 %v1555
  %v1624 = vunpack.c.l.b16 %v1556
  %v1625 = vpack.c.b16 %v1624, %v1623
  %v1634 = vunpack.c.l.b16 %v1557
  %v1635 = vunpack.c.l.b16 %v1558
  %v1636 = vunpack.c.l.b16 %v1559
  %v1637 = vunpack.c.l.b16 %v1560
  %v1638 = vunpack.c.l.b16 %v1561
  %v1639 = vunpack.c.l.b16 %v1562
  %v1640 = vunpack.c.l.b16 %v1563
  %v1641 = vunpack.c.l.b16 %v1564
  %v1642 = vpack.c.b16 %v1635, %v1634
  %v1643 = vpack.c.b16 %v1637, %v1636
  %v1644 = vpack.c.b16 %v1639, %v1638
  %v1645 = vpack.c.b16 %v1641, %v1640
  %v1651 = vsel %vm821, %v1625, 0
  %1653 = vmatpush.bf16.msra.mxu0 0
  %1654 = vmatpush.bf16.msra.mxu0 0
  %1655 = vmatpush.bf16.msra.mxu0 0
  %1656 = vmatpush.bf16.msra.mxu0 0
  %1657 = vmatpush.bf16.msra.mxu0 %v1645
  %1658 = vmatpush.bf16.msra.mxu0 %v1644
  %1659 = vmatpush.bf16.msra.mxu0 %v1643
  %1660 = vmatpush.bf16.msra.mxu0 %v1642
  %1661 = vmatmul.bf16.gmra.mxu0 %v1651
  %v1662 = vpop.f32.mrf.mxu0
  %v1663 = vadd.f32 %v1617, %v1662
  %v1664 = vpop.f32.mrf.mxu0
  %v1665 = vadd.f32 %v1619, %v1664
  %1666 = vdwg.mxu0
  %v1667 = vld [vmem:[%s644] sm:$0xf]
  %v1668 = vld [vmem:[%s644 + $0x8] sm:$0xf]
  %v1669 = vld [vmem:[%s783 + $0x10] sm:$0xf]
  %v1670 = vld [vmem:[%s783 + $0x14] sm:$0xf]
  %v1671 = vld [vmem:[%s783 + $0x18] sm:$0xf]
  %v1672 = vld [vmem:[%s783 + $0x1c] sm:$0xf]
  %v1673 = vld [vmem:[%s783 + $0x20] sm:$0xf]
  %v1674 = vld [vmem:[%s783 + $0x24] sm:$0xf]
  %v1675 = vld [vmem:[%s783 + $0x28] sm:$0xf]
  %v1676 = vld [vmem:[%s783 + $0x2c] sm:$0xf]
  %v1679 = vunpack.c.l.b16 %v1667
  %v1680 = vunpack.c.l.b16 %v1668
  %v1681 = vpack.c.b16 %v1680, %v1679
  %v1690 = vunpack.c.l.b16 %v1669
  %v1691 = vunpack.c.l.b16 %v1670
  %v1692 = vunpack.c.l.b16 %v1671
  %v1693 = vunpack.c.l.b16 %v1672
  %v1694 = vunpack.c.l.b16 %v1673
  %v1695 = vunpack.c.l.b16 %v1674
  %v1696 = vunpack.c.l.b16 %v1675
  %v1697 = vunpack.c.l.b16 %v1676
  %v1698 = vpack.c.b16 %v1691, %v1690
  %v1699 = vpack.c.b16 %v1693, %v1692
  %v1700 = vpack.c.b16 %v1695, %v1694
  %v1701 = vpack.c.b16 %v1697, %v1696
  %v1707 = vsel %vm821, %v1681, 0
  %1709 = vmatpush.bf16.msra.mxu0 0
  %1710 = vmatpush.bf16.msra.mxu0 0
  %1711 = vmatpush.bf16.msra.mxu0 0
  %1712 = vmatpush.bf16.msra.mxu0 0
  %1713 = vmatpush.bf16.msra.mxu0 %v1701
  %1714 = vmatpush.bf16.msra.mxu0 %v1700
  %1715 = vmatpush.bf16.msra.mxu0 %v1699
  %1716 = vmatpush.bf16.msra.mxu0 %v1698
  %1717 = vmatmul.bf16.gmra.mxu0 %v1707
  %v1718 = vpop.f32.mrf.mxu0
  %v1719 = vadd.f32 0.0, %v1718
  %v1720 = vpop.f32.mrf.mxu0
  %v1721 = vadd.f32 0.0, %v1720
  %1722 = vdwg.mxu0
  %v1723 = vadd.f32 %v1663, %v1719
  %v1724 = vadd.f32 %v1665, %v1721
  %v1725 = vmul.f32 %v1723, %v885
  %v1726 = vmul.f32 %v1724, %v885
  %v1727 = vadd.f32 %v1725, %v888
  %v1728 = vadd.f32 %v1726, %v888
  %v1729 = vmax.f32 %v1727, 0.0
  %v1730 = vmax.f32 %v1728, 0.0
  %v1731 = vld [vmem:[%s2] sm:$0xf]
  %v1732 = vld [vmem:[%s2 + $0x4] sm:$0xf]
  %v1733 = vld [vmem:[%s2 + $0x8] sm:$0xf]
  %v1734 = vld [vmem:[%s2 + $0xc] sm:$0xf]
  %v1735 = vld [vmem:[%s772] sm:$0xf]
  %v1736 = vld [vmem:[%s772 + $0x4] sm:$0xf]
  %v1737 = vld [vmem:[%s772 + $0x8] sm:$0xf]
  %v1738 = vld [vmem:[%s772 + $0xc] sm:$0xf]
  %v1743 = vunpack.c.l.b16 %v1735
  %v1744 = vunpack.c.l.b16 %v1736
  %v1745 = vunpack.c.l.b16 %v1737
  %v1746 = vunpack.c.l.b16 %v1738
  %v1747 = vpack.c.b16 %v1744, %v1743
  %v1748 = vpack.c.b16 %v1746, %v1745
  %v1751 = vsel %vm913, %v1579, 0
  %1753 = vmatpush.bf16.msra.mxu0 0
  %1754 = vmatpush.bf16.msra.mxu0 0
  %1755 = vmatpush.bf16.msra.mxu0 %v1599
  %1756 = vmatpush.bf16.msra.mxu0 %v1598
  %1757 = vmatpush.bf16.msra.mxu0 %v1597
  %1758 = vmatpush.bf16.msra.mxu0 %v1596
  %1759 = vmatpush.bf16.msra.mxu0 %v1748
  %1760 = vmatpush.bf16.msra.mxu0 %v1747
  %1761 = vmatmul.bf16.gmra.mxu0 %v1751
  %v1762 = vpop.f32.mrf.mxu0
  %v1763 = vadd.f32 0.0, %v1762
  %v1764 = vpop.f32.mrf.mxu0
  %v1765 = vadd.f32 0.0, %v1764
  %1766 = vdwg.mxu0
  %v1771 = vunpack.c.l.b16 %v1731
  %v1772 = vunpack.c.l.b16 %v1732
  %v1773 = vunpack.c.l.b16 %v1733
  %v1774 = vunpack.c.l.b16 %v1734
  %v1775 = vpack.c.b16 %v1772, %v1771
  %v1776 = vpack.c.b16 %v1774, %v1773
  %v1779 = vsel %vm913, %v1625, 0
  %1781 = vmatpush.bf16.msra.mxu0 0
  %1782 = vmatpush.bf16.msra.mxu0 0
  %1783 = vmatpush.bf16.msra.mxu0 %v1645
  %1784 = vmatpush.bf16.msra.mxu0 %v1644
  %1785 = vmatpush.bf16.msra.mxu0 %v1643
  %1786 = vmatpush.bf16.msra.mxu0 %v1642
  %1787 = vmatpush.bf16.msra.mxu0 %v1776
  %1788 = vmatpush.bf16.msra.mxu0 %v1775
  %1789 = vmatmul.bf16.gmra.mxu0 %v1779
  %v1790 = vpop.f32.mrf.mxu0
  %v1791 = vadd.f32 %v1763, %v1790
  %v1792 = vpop.f32.mrf.mxu0
  %v1793 = vadd.f32 %v1765, %v1792
  %1794 = vdwg.mxu0
  %v1795 = vld [vmem:[%s783] sm:$0xf]
  %v1796 = vld [vmem:[%s783 + $0x4] sm:$0xf]
  %v1797 = vld [vmem:[%s783 + $0x8] sm:$0xf]
  %v1798 = vld [vmem:[%s783 + $0xc] sm:$0xf]
  %v1803 = vunpack.c.l.b16 %v1795
  %v1804 = vunpack.c.l.b16 %v1796
  %v1805 = vunpack.c.l.b16 %v1797
  %v1806 = vunpack.c.l.b16 %v1798
  %v1807 = vpack.c.b16 %v1804, %v1803
  %v1808 = vpack.c.b16 %v1806, %v1805
  %v1811 = vsel %vm913, %v1681, 0
  %1813 = vmatpush.bf16.msra.mxu0 0
  %1814 = vmatpush.bf16.msra.mxu0 0
  %1815 = vmatpush.bf16.msra.mxu0 %v1701
  %1816 = vmatpush.bf16.msra.mxu0 %v1700
  %1817 = vmatpush.bf16.msra.mxu0 %v1699
  %1818 = vmatpush.bf16.msra.mxu0 %v1698
  %1819 = vmatpush.bf16.msra.mxu0 %v1808
  %1820 = vmatpush.bf16.msra.mxu0 %v1807
  %1821 = vmatmul.bf16.gmra.mxu0 %v1811
  %v1822 = vpop.f32.mrf.mxu0
  %v1823 = vadd.f32 0.0, %v1822
  %v1824 = vpop.f32.mrf.mxu0
  %v1825 = vadd.f32 0.0, %v1824
  %1826 = vdwg.mxu0
  %v1827 = vadd.f32 %v1791, %v1823
  %v1828 = vadd.f32 %v1793, %v1825
  %v1829 = vmul.f32 %v1827, %v885
  %v1830 = vmul.f32 %v1828, %v885
  %v1831 = vadd.f32 %v1829, %v888
  %v1832 = vadd.f32 %v1830, %v888
  %v1833 = vmax.f32 %v1831, 0.0
  %v1834 = vmax.f32 %v1832, 0.0
  %v1835 = vmax.f32 %v1729, %v1833
  %v1836 = vmax.f32 %v1730, %v1834
  %1837 = vmatpush.bf16.msra.mxu0 0
  %1838 = vmatpush.bf16.msra.mxu0 0
  %1839 = vmatpush.bf16.msra.mxu0 0
  %1840 = vmatpush.bf16.msra.mxu0 0
  %1841 = vmatpush.bf16.msra.mxu0 %v1599
  %1842 = vmatpush.bf16.msra.mxu0 %v1598
  %1843 = vmatpush.bf16.msra.mxu0 %v1597
  %1844 = vmatpush.bf16.msra.mxu0 %v1596
  %1845 = vmatmul.bf16.gmra.mxu0 %v1707
  %v1846 = vpop.f32.mrf.mxu0
  %v1847 = vadd.f32 0.0, %v1846
  %v1848 = vpop.f32.mrf.mxu0
  %v1849 = vadd.f32 0.0, %v1848
  %1850 = vdwg.mxu0
  %1851 = vmatpush.bf16.msra.mxu0 0
  %1852 = vmatpush.bf16.msra.mxu0 0
  %1853 = vmatpush.bf16.msra.mxu0 0
  %1854 = vmatpush.bf16.msra.mxu0 0
  %1855 = vmatpush.bf16.msra.mxu0 %v1645
  %1856 = vmatpush.bf16.msra.mxu0 %v1644
  %1857 = vmatpush.bf16.msra.mxu0 %v1643
  %1858 = vmatpush.bf16.msra.mxu0 %v1642
  %1859 = vmatmul.bf16.gmra.mxu0 %v1605
  %v1860 = vpop.f32.mrf.mxu0
  %v1861 = vadd.f32 %v1847, %v1860
  %v1862 = vpop.f32.mrf.mxu0
  %v1863 = vadd.f32 %v1849, %v1862
  %1864 = vdwg.mxu0
  %v1865 = vld [vmem:[%s709] sm:$0xf]
  %v1866 = vld [vmem:[%s709 + $0x8] sm:$0xf]
  %v1869 = vunpack.c.l.b16 %v1865
  %v1870 = vunpack.c.l.b16 %v1866
  %v1871 = vpack.c.b16 %v1870, %v1869
  %v1873 = vsel %vm821, %v1871, 0
  %1875 = vmatpush.bf16.msra.mxu0 0
  %1876 = vmatpush.bf16.msra.mxu0 0
  %1877 = vmatpush.bf16.msra.mxu0 0
  %1878 = vmatpush.bf16.msra.mxu0 0
  %1879 = vmatpush.bf16.msra.mxu0 %v1701
  %1880 = vmatpush.bf16.msra.mxu0 %v1700
  %1881 = vmatpush.bf16.msra.mxu0 %v1699
  %1882 = vmatpush.bf16.msra.mxu0 %v1698
  %1883 = vmatmul.bf16.gmra.mxu0 %v1873
  %v1884 = vpop.f32.mrf.mxu0
  %v1885 = vadd.f32 0.0, %v1884
  %v1886 = vpop.f32.mrf.mxu0
  %v1887 = vadd.f32 0.0, %v1886
  %1888 = vdwg.mxu0
  %v1889 = vadd.f32 %v1861, %v1885
  %v1890 = vadd.f32 %v1863, %v1887
  %v1891 = vmul.f32 %v1889, %v885
  %v1892 = vmul.f32 %v1890, %v885
  %v1893 = vadd.f32 %v1891, %v888
  %v1894 = vadd.f32 %v1892, %v888
  %v1895 = vmax.f32 %v1893, 0.0
  %v1896 = vmax.f32 %v1894, 0.0
  %v1897 = vmax.f32 %v1835, %v1895
  %v1898 = vmax.f32 %v1836, %v1896
  %1899 = vmatpush.bf16.msra.mxu0 0
  %1900 = vmatpush.bf16.msra.mxu0 0
  %1901 = vmatpush.bf16.msra.mxu0 %v1599
  %1902 = vmatpush.bf16.msra.mxu0 %v1598
  %1903 = vmatpush.bf16.msra.mxu0 %v1597
  %1904 = vmatpush.bf16.msra.mxu0 %v1596
  %1905 = vmatpush.bf16.msra.mxu0 %v1748
  %1906 = vmatpush.bf16.msra.mxu0 %v1747
  %1907 = vmatmul.bf16.gmra.mxu0 %v1811
  %v1908 = vpop.f32.mrf.mxu0
  %v1909 = vadd.f32 0.0, %v1908
  %v1910 = vpop.f32.mrf.mxu0
  %v1911 = vadd.f32 0.0, %v1910
  %1912 = vdwg.mxu0
  %1913 = vmatpush.bf16.msra.mxu0 0
  %1914 = vmatpush.bf16.msra.mxu0 0
  %1915 = vmatpush.bf16.msra.mxu0 %v1645
  %1916 = vmatpush.bf16.msra.mxu0 %v1644
  %1917 = vmatpush.bf16.msra.mxu0 %v1643
  %1918 = vmatpush.bf16.msra.mxu0 %v1642
  %1919 = vmatpush.bf16.msra.mxu0 %v1776
  %1920 = vmatpush.bf16.msra.mxu0 %v1775
  %1921 = vmatmul.bf16.gmra.mxu0 %v1751
  %v1922 = vpop.f32.mrf.mxu0
  %v1923 = vadd.f32 %v1909, %v1922
  %v1924 = vpop.f32.mrf.mxu0
  %v1925 = vadd.f32 %v1911, %v1924
  %1926 = vdwg.mxu0
  %v1927 = vsel %vm913, %v1871, 0
  %1929 = vmatpush.bf16.msra.mxu0 0
  %1930 = vmatpush.bf16.msra.mxu0 0
  %1931 = vmatpush.bf16.msra.mxu0 %v1701
  %1932 = vmatpush.bf16.msra.mxu0 %v1700
  %1933 = vmatpush.bf16.msra.mxu0 %v1699
  %1934 = vmatpush.bf16.msra.mxu0 %v1698
  %1935 = vmatpush.bf16.msra.mxu0 %v1808
  %1936 = vmatpush.bf16.msra.mxu0 %v1807
  %1937 = vmatmul.bf16.gmra.mxu0 %v1927
  %v1938 = vpop.f32.mrf.mxu0
  %v1939 = vadd.f32 0.0, %v1938
  %v1940 = vpop.f32.mrf.mxu0
  %v1941 = vadd.f32 0.0, %v1940
  %1942 = vdwg.mxu0
  %v1943 = vadd.f32 %v1923, %v1939
  %v1944 = vadd.f32 %v1925, %v1941
  %v1945 = vmul.f32 %v1943, %v885
  %v1946 = vmul.f32 %v1944, %v885
  %v1947 = vadd.f32 %v1945, %v888
  %v1948 = vadd.f32 %v1946, %v888
  %v1949 = vmax.f32 %v1947, 0.0
  %v1950 = vmax.f32 %v1948, 0.0
  %v1951 = vmax.f32 %v1897, %v1949
  %v1952 = vmax.f32 %v1898, %v1950
  %v1953 = vpack.c.bf16 %v1951, %v1951
  %v1954 = vpack.c.bf16 %v1952, %v1952
  %s1955 = scalar_lea.vmem [#allocation3], 8
  %1956 = vst.msk [vmem:[%s1955] sm:$0xf] %vm446, %v1953
  %1957 = vst.msk [vmem:[%s1955 + $0x4] sm:$0xf] %vm446, %v1954
  %v1958 = vld [vmem:[%s514] sm:$0xf]
  %v1959 = vld [vmem:[%s514 + $0x8] sm:$0xf]
  %v1960 = vld [vmem:[%s2] sm:$0xf]
  %v1961 = vld [vmem:[%s2 + $0x4] sm:$0xf]
  %v1962 = vld [vmem:[%s2 + $0x8] sm:$0xf]
  %v1963 = vld [vmem:[%s2 + $0xc] sm:$0xf]
  %v1964 = vld [vmem:[%s2 + $0x10] sm:$0xf]
  %v1965 = vld [vmem:[%s2 + $0x14] sm:$0xf]
  %v1966 = vld [vmem:[%s2 + $0x18] sm:$0xf]
  %v1967 = vld [vmem:[%s2 + $0x1c] sm:$0xf]
  %v1968 = vld [vmem:[%s2 + $0x20] sm:$0xf]
  %v1969 = vld [vmem:[%s2 + $0x24] sm:$0xf]
  %v1970 = vld [vmem:[%s2 + $0x28] sm:$0xf]
  %v1971 = vld [vmem:[%s2 + $0x2c] sm:$0xf]
  %v1972 = vld [vmem:[%s579] sm:$0xf]
  %v1973 = vld [vmem:[%s579 + $0x8] sm:$0xf]
  %v1974 = vld [vmem:[%s772] sm:$0xf]
  %v1975 = vld [vmem:[%s772 + $0x4] sm:$0xf]
  %v1976 = vld [vmem:[%s772 + $0x8] sm:$0xf]
  %v1977 = vld [vmem:[%s772 + $0xc] sm:$0xf]
  %v1978 = vld [vmem:[%s772 + $0x10] sm:$0xf]
  %v1979 = vld [vmem:[%s772 + $0x14] sm:$0xf]
  %v1980 = vld [vmem:[%s772 + $0x18] sm:$0xf]
  %v1981 = vld [vmem:[%s772 + $0x1c] sm:$0xf]
  %v1982 = vld [vmem:[%s772 + $0x20] sm:$0xf]
  %v1983 = vld [vmem:[%s772 + $0x24] sm:$0xf]
  %v1984 = vld [vmem:[%s772 + $0x28] sm:$0xf]
  %v1985 = vld [vmem:[%s772 + $0x2c] sm:$0xf]
  %v1988 = vunpack.c.l.b16 %v1972
  %v1989 = vunpack.c.l.b16 %v1973
  %v1990 = vpack.c.b16 %v1989, %v1988
  %1991 = vrot.lane.b32.xlu0 %v1990, 96
  %v1992 = vpop.permute.xlu0 %1991
  %v2005 = vunpack.c.l.b16 %v1974
  %v2006 = vunpack.c.l.b16 %v1975
  %v2007 = vunpack.c.l.b16 %v1976
  %v2008 = vunpack.c.l.b16 %v1977
  %v2009 = vunpack.c.l.b16 %v1978
  %v2010 = vunpack.c.l.b16 %v1979
  %v2011 = vunpack.c.l.b16 %v1980
  %v2012 = vunpack.c.l.b16 %v1981
  %v2013 = vunpack.c.l.b16 %v1982
  %v2014 = vunpack.c.l.b16 %v1983
  %v2015 = vunpack.c.l.b16 %v1984
  %v2016 = vunpack.c.l.b16 %v1985
  %v2017 = vpack.c.b16 %v2006, %v2005
  %v2018 = vpack.c.b16 %v2008, %v2007
  %v2019 = vpack.c.b16 %v2010, %v2009
  %v2020 = vpack.c.b16 %v2012, %v2011
  %v2021 = vpack.c.b16 %v2014, %v2013
  %v2022 = vpack.c.b16 %v2016, %v2015
  %v2030 = vsel %vm913, %v1992, 0
  %2032 = vmatpush.bf16.msra.mxu0 0
  %2033 = vmatpush.bf16.msra.mxu0 0
  %2034 = vmatpush.bf16.msra.mxu0 %v2022
  %2035 = vmatpush.bf16.msra.mxu0 %v2021
  %2036 = vmatpush.bf16.msra.mxu0 %v2020
  %2037 = vmatpush.bf16.msra.mxu0 %v2019
  %2038 = vmatpush.bf16.msra.mxu0 %v2018
  %2039 = vmatpush.bf16.msra.mxu0 %v2017
  %2040 = vmatmul.bf16.gmra.mxu0 %v2030
  %v2041 = vpop.f32.mrf.mxu0
  %v2042 = vadd.f32 0.0, %v2041
  %v2043 = vpop.f32.mrf.mxu0
  %v2044 = vadd.f32 0.0, %v2043
  %2045 = vdwg.mxu0
  %v2048 = vunpack.c.l.b16 %v1958
  %v2049 = vunpack.c.l.b16 %v1959
  %v2050 = vpack.c.b16 %v2049, %v2048
  %2051 = vrot.lane.b32.xlu0 %v2050, 96
  %v2052 = vpop.permute.xlu0 %2051
  %v2065 = vunpack.c.l.b16 %v1960
  %v2066 = vunpack.c.l.b16 %v1961
  %v2067 = vunpack.c.l.b16 %v1962
  %v2068 = vunpack.c.l.b16 %v1963
  %v2069 = vunpack.c.l.b16 %v1964
  %v2070 = vunpack.c.l.b16 %v1965
  %v2071 = vunpack.c.l.b16 %v1966
  %v2072 = vunpack.c.l.b16 %v1967
  %v2073 = vunpack.c.l.b16 %v1968
  %v2074 = vunpack.c.l.b16 %v1969
  %v2075 = vunpack.c.l.b16 %v1970
  %v2076 = vunpack.c.l.b16 %v1971
  %v2077 = vpack.c.b16 %v2066, %v2065
  %v2078 = vpack.c.b16 %v2068, %v2067
  %v2079 = vpack.c.b16 %v2070, %v2069
  %v2080 = vpack.c.b16 %v2072, %v2071
  %v2081 = vpack.c.b16 %v2074, %v2073
  %v2082 = vpack.c.b16 %v2076, %v2075
  %v2090 = vsel %vm913, %v2052, 0
  %2092 = vmatpush.bf16.msra.mxu0 0
  %2093 = vmatpush.bf16.msra.mxu0 0
  %2094 = vmatpush.bf16.msra.mxu0 %v2082
  %2095 = vmatpush.bf16.msra.mxu0 %v2081
  %2096 = vmatpush.bf16.msra.mxu0 %v2080
  %2097 = vmatpush.bf16.msra.mxu0 %v2079
  %2098 = vmatpush.bf16.msra.mxu0 %v2078
  %2099 = vmatpush.bf16.msra.mxu0 %v2077
  %2100 = vmatmul.bf16.gmra.mxu0 %v2090
  %v2101 = vpop.f32.mrf.mxu0
  %v2102 = vadd.f32 %v2042, %v2101
  %v2103 = vpop.f32.mrf.mxu0
  %v2104 = vadd.f32 %v2044, %v2103
  %2105 = vdwg.mxu0
  %v2106 = vld [vmem:[%s644] sm:$0xf]
  %v2107 = vld [vmem:[%s644 + $0x8] sm:$0xf]
  %v2108 = vld [vmem:[%s783] sm:$0xf]
  %v2109 = vld [vmem:[%s783 + $0x4] sm:$0xf]
  %v2110 = vld [vmem:[%s783 + $0x8] sm:$0xf]
  %v2111 = vld [vmem:[%s783 + $0xc] sm:$0xf]
  %v2112 = vld [vmem:[%s783 + $0x10] sm:$0xf]
  %v2113 = vld [vmem:[%s783 + $0x14] sm:$0xf]
  %v2114 = vld [vmem:[%s783 + $0x18] sm:$0xf]
  %v2115 = vld [vmem:[%s783 + $0x1c] sm:$0xf]
  %v2116 = vld [vmem:[%s783 + $0x20] sm:$0xf]
  %v2117 = vld [vmem:[%s783 + $0x24] sm:$0xf]
  %v2118 = vld [vmem:[%s783 + $0x28] sm:$0xf]
  %v2119 = vld [vmem:[%s783 + $0x2c] sm:$0xf]
  %v2122 = vunpack.c.l.b16 %v2106
  %v2123 = vunpack.c.l.b16 %v2107
  %v2124 = vpack.c.b16 %v2123, %v2122
  %2125 = vrot.lane.b32.xlu0 %v2124, 96
  %v2126 = vpop.permute.xlu0 %2125
  %v2139 = vunpack.c.l.b16 %v2108
  %v2140 = vunpack.c.l.b16 %v2109
  %v2141 = vunpack.c.l.b16 %v2110
  %v2142 = vunpack.c.l.b16 %v2111
  %v2143 = vunpack.c.l.b16 %v2112
  %v2144 = vunpack.c.l.b16 %v2113
  %v2145 = vunpack.c.l.b16 %v2114
  %v2146 = vunpack.c.l.b16 %v2115
  %v2147 = vunpack.c.l.b16 %v2116
  %v2148 = vunpack.c.l.b16 %v2117
  %v2149 = vunpack.c.l.b16 %v2118
  %v2150 = vunpack.c.l.b16 %v2119
  %v2151 = vpack.c.b16 %v2140, %v2139
  %v2152 = vpack.c.b16 %v2142, %v2141
  %v2153 = vpack.c.b16 %v2144, %v2143
  %v2154 = vpack.c.b16 %v2146, %v2145
  %v2155 = vpack.c.b16 %v2148, %v2147
  %v2156 = vpack.c.b16 %v2150, %v2149
  %v2164 = vsel %vm913, %v2126, 0
  %2166 = vmatpush.bf16.msra.mxu0 0
  %2167 = vmatpush.bf16.msra.mxu0 0
  %2168 = vmatpush.bf16.msra.mxu0 %v2156
  %2169 = vmatpush.bf16.msra.mxu0 %v2155
  %2170 = vmatpush.bf16.msra.mxu0 %v2154
  %2171 = vmatpush.bf16.msra.mxu0 %v2153
  %2172 = vmatpush.bf16.msra.mxu0 %v2152
  %2173 = vmatpush.bf16.msra.mxu0 %v2151
  %2174 = vmatmul.bf16.gmra.mxu0 %v2164
  %v2175 = vpop.f32.mrf.mxu0
  %v2176 = vadd.f32 0.0, %v2175
  %v2177 = vpop.f32.mrf.mxu0
  %v2178 = vadd.f32 0.0, %v2177
  %2179 = vdwg.mxu0
  %v2180 = vadd.f32 %v2102, %v2176
  %v2181 = vadd.f32 %v2104, %v2178
  %v2182 = vmul.f32 %v2180, %v885
  %v2183 = vmul.f32 %v2181, %v885
  %v2184 = vadd.f32 %v2182, %v888
  %v2185 = vadd.f32 %v2183, %v888
  %v2186 = vmax.f32 %v2184, 0.0
  %v2187 = vmax.f32 %v2185, 0.0
  %v2188 = vld [vmem:[%s514] sm:$0xff]
  %v2189 = vld [vmem:[%s514 + $0x8] sm:$0xff]
  %v2190 = vld [vmem:[%s579] sm:$0xff]
  %v2191 = vld [vmem:[%s579 + $0x8] sm:$0xff]
  %v2194 = vunpack.c.l.b16 %v2190
  %v2195 = vunpack.c.h.b16 %v2190
  %v2196 = vunpack.c.l.b16 %v2191
  %v2197 = vunpack.c.h.b16 %v2191
  %v2198 = vpack.c.b16 %v2196, %v2194
  %v2199 = vpack.c.b16 %v2197, %v2195
  %2200 = vrot.lane.b32.xlu0 %v2198, 64
  %v2201 = vpop.permute.xlu0 %2200
  %2202 = vrot.lane.b32.xlu0 %v2199, 64
  %v2203 = vpop.permute.xlu0 %2202
  %v2204 = vsel %vm1304, %v2201, %v2203
  %v2206 = vsel %vm913, %v2204, 0
  %2208 = vmatpush.bf16.msra.mxu0 0
  %2209 = vmatpush.bf16.msra.mxu0 0
  %2210 = vmatpush.bf16.msra.mxu0 %v2022
  %2211 = vmatpush.bf16.msra.mxu0 %v2021
  %2212 = vmatpush.bf16.msra.mxu0 %v2020
  %2213 = vmatpush.bf16.msra.mxu0 %v2019
  %2214 = vmatpush.bf16.msra.mxu0 %v2018
  %2215 = vmatpush.bf16.msra.mxu0 %v2017
  %2216 = vmatmul.bf16.gmra.mxu0 %v2206
  %v2217 = vpop.f32.mrf.mxu0
  %v2218 = vadd.f32 0.0, %v2217
  %v2219 = vpop.f32.mrf.mxu0
  %v2220 = vadd.f32 0.0, %v2219
  %2221 = vdwg.mxu0
  %v2224 = vunpack.c.l.b16 %v2188
  %v2225 = vunpack.c.h.b16 %v2188
  %v2226 = vunpack.c.l.b16 %v2189
  %v2227 = vunpack.c.h.b16 %v2189
  %v2228 = vpack.c.b16 %v2226, %v2224
  %v2229 = vpack.c.b16 %v2227, %v2225
  %2230 = vrot.lane.b32.xlu0 %v2228, 64
  %v2231 = vpop.permute.xlu0 %2230
  %2232 = vrot.lane.b32.xlu0 %v2229, 64
  %v2233 = vpop.permute.xlu0 %2232
  %v2234 = vsel %vm1304, %v2231, %v2233
  %v2236 = vsel %vm913, %v2234, 0
  %2238 = vmatpush.bf16.msra.mxu0 0
  %2239 = vmatpush.bf16.msra.mxu0 0
  %2240 = vmatpush.bf16.msra.mxu0 %v2082
  %2241 = vmatpush.bf16.msra.mxu0 %v2081
  %2242 = vmatpush.bf16.msra.mxu0 %v2080
  %2243 = vmatpush.bf16.msra.mxu0 %v2079
  %2244 = vmatpush.bf16.msra.mxu0 %v2078
  %2245 = vmatpush.bf16.msra.mxu0 %v2077
  %2246 = vmatmul.bf16.gmra.mxu0 %v2236
  %v2247 = vpop.f32.mrf.mxu0
  %v2248 = vadd.f32 %v2218, %v2247
  %v2249 = vpop.f32.mrf.mxu0
  %v2250 = vadd.f32 %v2220, %v2249
  %2251 = vdwg.mxu0
  %v2252 = vld [vmem:[%s644] sm:$0xff]
  %v2253 = vld [vmem:[%s644 + $0x8] sm:$0xff]
  %v2256 = vunpack.c.l.b16 %v2252
  %v2257 = vunpack.c.h.b16 %v2252
  %v2258 = vunpack.c.l.b16 %v2253
  %v2259 = vunpack.c.h.b16 %v2253
  %v2260 = vpack.c.b16 %v2258, %v2256
  %v2261 = vpack.c.b16 %v2259, %v2257
  %2262 = vrot.lane.b32.xlu0 %v2260, 64
  %v2263 = vpop.permute.xlu0 %2262
  %2264 = vrot.lane.b32.xlu0 %v2261, 64
  %v2265 = vpop.permute.xlu0 %2264
  %v2266 = vsel %vm1304, %v2263, %v2265
  %v2268 = vsel %vm913, %v2266, 0
  %2270 = vmatpush.bf16.msra.mxu0 0
  %2271 = vmatpush.bf16.msra.mxu0 0
  %2272 = vmatpush.bf16.msra.mxu0 %v2156
  %2273 = vmatpush.bf16.msra.mxu0 %v2155
  %2274 = vmatpush.bf16.msra.mxu0 %v2154
  %2275 = vmatpush.bf16.msra.mxu0 %v2153
  %2276 = vmatpush.bf16.msra.mxu0 %v2152
  %2277 = vmatpush.bf16.msra.mxu0 %v2151
  %2278 = vmatmul.bf16.gmra.mxu0 %v2268
  %v2279 = vpop.f32.mrf.mxu0
  %v2280 = vadd.f32 0.0, %v2279
  %v2281 = vpop.f32.mrf.mxu0
  %v2282 = vadd.f32 0.0, %v2281
  %2283 = vdwg.mxu0
  %v2284 = vadd.f32 %v2248, %v2280
  %v2285 = vadd.f32 %v2250, %v2282
  %v2286 = vmul.f32 %v2284, %v885
  %v2287 = vmul.f32 %v2285, %v885
  %v2288 = vadd.f32 %v2286, %v888
  %v2289 = vadd.f32 %v2287, %v888
  %v2290 = vmax.f32 %v2288, 0.0
  %v2291 = vmax.f32 %v2289, 0.0
  %v2292 = vmax.f32 %v2186, %v2290
  %v2293 = vmax.f32 %v2187, %v2291
  %2294 = vmatpush.bf16.msra.mxu0 0
  %2295 = vmatpush.bf16.msra.mxu0 0
  %2296 = vmatpush.bf16.msra.mxu0 %v2022
  %2297 = vmatpush.bf16.msra.mxu0 %v2021
  %2298 = vmatpush.bf16.msra.mxu0 %v2020
  %2299 = vmatpush.bf16.msra.mxu0 %v2019
  %2300 = vmatpush.bf16.msra.mxu0 %v2018
  %2301 = vmatpush.bf16.msra.mxu0 %v2017
  %2302 = vmatmul.bf16.gmra.mxu0 %v2164
  %v2303 = vpop.f32.mrf.mxu0
  %v2304 = vadd.f32 0.0, %v2303
  %v2305 = vpop.f32.mrf.mxu0
  %v2306 = vadd.f32 0.0, %v2305
  %2307 = vdwg.mxu0
  %2308 = vmatpush.bf16.msra.mxu0 0
  %2309 = vmatpush.bf16.msra.mxu0 0
  %2310 = vmatpush.bf16.msra.mxu0 %v2082
  %2311 = vmatpush.bf16.msra.mxu0 %v2081
  %2312 = vmatpush.bf16.msra.mxu0 %v2080
  %2313 = vmatpush.bf16.msra.mxu0 %v2079
  %2314 = vmatpush.bf16.msra.mxu0 %v2078
  %2315 = vmatpush.bf16.msra.mxu0 %v2077
  %2316 = vmatmul.bf16.gmra.mxu0 %v2030
  %v2317 = vpop.f32.mrf.mxu0
  %v2318 = vadd.f32 %v2304, %v2317
  %v2319 = vpop.f32.mrf.mxu0
  %v2320 = vadd.f32 %v2306, %v2319
  %2321 = vdwg.mxu0
  %v2322 = vld [vmem:[%s709] sm:$0xf]
  %v2323 = vld [vmem:[%s709 + $0x8] sm:$0xf]
  %v2326 = vunpack.c.l.b16 %v2322
  %v2327 = vunpack.c.l.b16 %v2323
  %v2328 = vpack.c.b16 %v2327, %v2326
  %2329 = vrot.lane.b32.xlu0 %v2328, 96
  %v2330 = vpop.permute.xlu0 %2329
  %v2332 = vsel %vm913, %v2330, 0
  %2334 = vmatpush.bf16.msra.mxu0 0
  %2335 = vmatpush.bf16.msra.mxu0 0
  %2336 = vmatpush.bf16.msra.mxu0 %v2156
  %2337 = vmatpush.bf16.msra.mxu0 %v2155
  %2338 = vmatpush.bf16.msra.mxu0 %v2154
  %2339 = vmatpush.bf16.msra.mxu0 %v2153
  %2340 = vmatpush.bf16.msra.mxu0 %v2152
  %2341 = vmatpush.bf16.msra.mxu0 %v2151
  %2342 = vmatmul.bf16.gmra.mxu0 %v2332
  %v2343 = vpop.f32.mrf.mxu0
  %v2344 = vadd.f32 0.0, %v2343
  %v2345 = vpop.f32.mrf.mxu0
  %v2346 = vadd.f32 0.0, %v2345
  %2347 = vdwg.mxu0
  %v2348 = vadd.f32 %v2318, %v2344
  %v2349 = vadd.f32 %v2320, %v2346
  %v2350 = vmul.f32 %v2348, %v885
  %v2351 = vmul.f32 %v2349, %v885
  %v2352 = vadd.f32 %v2350, %v888
  %v2353 = vadd.f32 %v2351, %v888
  %v2354 = vmax.f32 %v2352, 0.0
  %v2355 = vmax.f32 %v2353, 0.0
  %v2356 = vmax.f32 %v2292, %v2354
  %v2357 = vmax.f32 %v2293, %v2355
  %2358 = vmatpush.bf16.msra.mxu0 0
  %2359 = vmatpush.bf16.msra.mxu0 0
  %2360 = vmatpush.bf16.msra.mxu0 %v2022
  %2361 = vmatpush.bf16.msra.mxu0 %v2021
  %2362 = vmatpush.bf16.msra.mxu0 %v2020
  %2363 = vmatpush.bf16.msra.mxu0 %v2019
  %2364 = vmatpush.bf16.msra.mxu0 %v2018
  %2365 = vmatpush.bf16.msra.mxu0 %v2017
  %2366 = vmatmul.bf16.gmra.mxu0 %v2268
  %v2367 = vpop.f32.mrf.mxu0
  %v2368 = vadd.f32 0.0, %v2367
  %v2369 = vpop.f32.mrf.mxu0
  %v2370 = vadd.f32 0.0, %v2369
  %2371 = vdwg.mxu0
  %2372 = vmatpush.bf16.msra.mxu0 0
  %2373 = vmatpush.bf16.msra.mxu0 0
  %2374 = vmatpush.bf16.msra.mxu0 %v2082
  %2375 = vmatpush.bf16.msra.mxu0 %v2081
  %2376 = vmatpush.bf16.msra.mxu0 %v2080
  %2377 = vmatpush.bf16.msra.mxu0 %v2079
  %2378 = vmatpush.bf16.msra.mxu0 %v2078
  %2379 = vmatpush.bf16.msra.mxu0 %v2077
  %2380 = vmatmul.bf16.gmra.mxu0 %v2206
  %v2381 = vpop.f32.mrf.mxu0
  %v2382 = vadd.f32 %v2368, %v2381
  %v2383 = vpop.f32.mrf.mxu0
  %v2384 = vadd.f32 %v2370, %v2383
  %2385 = vdwg.mxu0
  %v2386 = vld [vmem:[%s709] sm:$0xff]
  %v2387 = vld [vmem:[%s709 + $0x8] sm:$0xff]
  %v2390 = vunpack.c.l.b16 %v2386
  %v2391 = vunpack.c.h.b16 %v2386
  %v2392 = vunpack.c.l.b16 %v2387
  %v2393 = vunpack.c.h.b16 %v2387
  %v2394 = vpack.c.b16 %v2392, %v2390
  %v2395 = vpack.c.b16 %v2393, %v2391
  %2396 = vrot.lane.b32.xlu0 %v2394, 64
  %v2397 = vpop.permute.xlu0 %2396
  %2398 = vrot.lane.b32.xlu0 %v2395, 64
  %v2399 = vpop.permute.xlu0 %2398
  %v2400 = vsel %vm1304, %v2397, %v2399
  %v2402 = vsel %vm913, %v2400, 0
  %2404 = vmatpush.bf16.msra.mxu0 0
  %2405 = vmatpush.bf16.msra.mxu0 0
  %2406 = vmatpush.bf16.msra.mxu0 %v2156
  %2407 = vmatpush.bf16.msra.mxu0 %v2155
  %2408 = vmatpush.bf16.msra.mxu0 %v2154
  %2409 = vmatpush.bf16.msra.mxu0 %v2153
  %2410 = vmatpush.bf16.msra.mxu0 %v2152
  %2411 = vmatpush.bf16.msra.mxu0 %v2151
  %2412 = vmatmul.bf16.gmra.mxu0 %v2402
  %v2413 = vpop.f32.mrf.mxu0
  %v2414 = vadd.f32 0.0, %v2413
  %v2415 = vpop.f32.mrf.mxu0
  %v2416 = vadd.f32 0.0, %v2415
  %2417 = vdwg.mxu0
  %v2418 = vadd.f32 %v2382, %v2414
  %v2419 = vadd.f32 %v2384, %v2416
  %v2420 = vmul.f32 %v2418, %v885
  %v2421 = vmul.f32 %v2419, %v885
  %v2422 = vadd.f32 %v2420, %v888
  %v2423 = vadd.f32 %v2421, %v888
  %v2424 = vmax.f32 %v2422, 0.0
  %v2425 = vmax.f32 %v2423, 0.0
  %v2426 = vmax.f32 %v2356, %v2424
  %v2427 = vmax.f32 %v2357, %v2425
  %v2428 = vpack.c.bf16 %v2426, %v2426
  %v2429 = vpack.c.bf16 %v2427, %v2427
  %2432 = vrot.lane.b32.xlu0 %v2428, 32
  %v2433 = vpop.permute.xlu0 %2432
  %2434 = vrot.lane.b32.xlu0 %v2429, 32
  %v2435 = vpop.permute.xlu0 %2434
  %2438 = vst.msk [vmem:[%s1955] sm:$0xf] %vm463, %v2433
  %2439 = vst.msk [vmem:[%s1955 + $0x4] sm:$0xf] %vm463, %v2435
  %v2440 = vld [vmem:[%s6 + $0x4] sm:$0x1]
  %v2441 = vld [vmem:[%s6 + $0x5] sm:$0x1]
  %v2442 = vld [vmem:[#allocation3] sm:$0xf]
  %v2443 = vld [vmem:[#allocation3 + $0x4] sm:$0xf]
  %s2444 = scalar_lea.vmem %s3, 48
  %v2445 = vld [vmem:[%s2444 + $0x10] sm:$0xf]
  %v2446 = vld [vmem:[%s2444 + $0x14] sm:$0xf]
  %v2447 = vld [vmem:[%s2444 + $0x18] sm:$0xf]
  %v2448 = vld [vmem:[%s2444 + $0x1c] sm:$0xf]
  %v2449 = vld [vmem:[%s2444 + $0x20] sm:$0xf]
  %v2450 = vld [vmem:[%s2444 + $0x24] sm:$0xf]
  %v2451 = vld [vmem:[%s2444 + $0x28] sm:$0xf]
  %v2452 = vld [vmem:[%s2444 + $0x2c] sm:$0xf]
  %v2453 = vld [vmem:[%s1955] sm:$0xf]
  %v2454 = vld [vmem:[%s1955 + $0x4] sm:$0xf]
  %s2455 = scalar_lea.vmem %s3, 96
  %v2456 = vld [vmem:[%s2455 + $0x10] sm:$0xf]
  %v2457 = vld [vmem:[%s2455 + $0x14] sm:$0xf]
  %v2458 = vld [vmem:[%s2455 + $0x18] sm:$0xf]
  %v2459 = vld [vmem:[%s2455 + $0x1c] sm:$0xf]
  %v2460 = vld [vmem:[%s2455 + $0x20] sm:$0xf]
  %v2461 = vld [vmem:[%s2455 + $0x24] sm:$0xf]
  %v2462 = vld [vmem:[%s2455 + $0x28] sm:$0xf]
  %v2463 = vld [vmem:[%s2455 + $0x2c] sm:$0xf]
  %v2466 = vunpack.c.l.b16 %v2453
  %v2467 = vunpack.c.l.b16 %v2454
  %v2468 = vpack.c.b16 %v2467, %v2466
  %v2477 = vunpack.c.l.b16 %v2456
  %v2478 = vunpack.c.l.b16 %v2457
  %v2479 = vunpack.c.l.b16 %v2458
  %v2480 = vunpack.c.l.b16 %v2459
  %v2481 = vunpack.c.l.b16 %v2460
  %v2482 = vunpack.c.l.b16 %v2461
  %v2483 = vunpack.c.l.b16 %v2462
  %v2484 = vunpack.c.l.b16 %v2463
  %v2485 = vpack.c.b16 %v2478, %v2477
  %v2486 = vpack.c.b16 %v2480, %v2479
  %v2487 = vpack.c.b16 %v2482, %v2481
  %v2488 = vpack.c.b16 %v2484, %v2483
  %v2494 = vsel %vm821, %v2468, 0
  %2496 = vmatpush.bf16.msra.mxu0 0
  %2497 = vmatpush.bf16.msra.mxu0 0
  %2498 = vmatpush.bf16.msra.mxu0 0
  %2499 = vmatpush.bf16.msra.mxu0 0
  %2500 = vmatpush.bf16.msra.mxu0 %v2488
  %2501 = vmatpush.bf16.msra.mxu0 %v2487
  %2502 = vmatpush.bf16.msra.mxu0 %v2486
  %2503 = vmatpush.bf16.msra.mxu0 %v2485
  %2504 = vmatmul.bf16.gmra.mxu0 %v2494
  %v2505 = vpop.f32.mrf.mxu0
  %v2506 = vadd.f32 0.0, %v2505
  %v2507 = vpop.f32.mrf.mxu0
  %v2508 = vadd.f32 0.0, %v2507
  %2509 = vdwg.mxu0
  %v2512 = vunpack.c.l.b16 %v2442
  %v2513 = vunpack.c.l.b16 %v2443
  %v2514 = vpack.c.b16 %v2513, %v2512
  %v2523 = vunpack.c.l.b16 %v2445
  %v2524 = vunpack.c.l.b16 %v2446
  %v2525 = vunpack.c.l.b16 %v2447
  %v2526 = vunpack.c.l.b16 %v2448
  %v2527 = vunpack.c.l.b16 %v2449
  %v2528 = vunpack.c.l.b16 %v2450
  %v2529 = vunpack.c.l.b16 %v2451
  %v2530 = vunpack.c.l.b16 %v2452
  %v2531 = vpack.c.b16 %v2524, %v2523
  %v2532 = vpack.c.b16 %v2526, %v2525
  %v2533 = vpack.c.b16 %v2528, %v2527
  %v2534 = vpack.c.b16 %v2530, %v2529
  %v2540 = vsel %vm821, %v2514, 0
  %2542 = vmatpush.bf16.msra.mxu0 0
  %2543 = vmatpush.bf16.msra.mxu0 0
  %2544 = vmatpush.bf16.msra.mxu0 0
  %2545 = vmatpush.bf16.msra.mxu0 0
  %2546 = vmatpush.bf16.msra.mxu0 %v2534
  %2547 = vmatpush.bf16.msra.mxu0 %v2533
  %2548 = vmatpush.bf16.msra.mxu0 %v2532
  %2549 = vmatpush.bf16.msra.mxu0 %v2531
  %2550 = vmatmul.bf16.gmra.mxu0 %v2540
  %v2551 = vpop.f32.mrf.mxu0
  %v2552 = vadd.f32 %v2506, %v2551
  %v2553 = vpop.f32.mrf.mxu0
  %v2554 = vadd.f32 %v2508, %v2553
  %2555 = vdwg.mxu0
  %v2556 = vperm.slane %v2440, 0
  %v2557 = vmul.f32 %v2552, %v2556
  %v2558 = vmul.f32 %v2554, %v2556
  %v2559 = vperm.slane %v2441, 0
  %v2560 = vadd.f32 %v2557, %v2559
  %v2561 = vadd.f32 %v2558, %v2559
  %v2562 = vmax.f32 %v2560, 0.0
  %v2563 = vmax.f32 %v2561, 0.0
  %v2564 = vld [vmem:[%s2444] sm:$0xf]
  %v2565 = vld [vmem:[%s2444 + $0x4] sm:$0xf]
  %v2566 = vld [vmem:[%s2444 + $0x8] sm:$0xf]
  %v2567 = vld [vmem:[%s2444 + $0xc] sm:$0xf]
  %v2568 = vld [vmem:[%s2444 + $0x10] sm:$0xf]
  %v2569 = vld [vmem:[%s2444 + $0x14] sm:$0xf]
  %v2570 = vld [vmem:[%s2444 + $0x18] sm:$0xf]
  %v2571 = vld [vmem:[%s2444 + $0x1c] sm:$0xf]
  %v2572 = vld [vmem:[%s2455] sm:$0xf]
  %v2573 = vld [vmem:[%s2455 + $0x4] sm:$0xf]
  %v2574 = vld [vmem:[%s2455 + $0x8] sm:$0xf]
  %v2575 = vld [vmem:[%s2455 + $0xc] sm:$0xf]
  %v2576 = vld [vmem:[%s2455 + $0x10] sm:$0xf]
  %v2577 = vld [vmem:[%s2455 + $0x14] sm:$0xf]
  %v2578 = vld [vmem:[%s2455 + $0x18] sm:$0xf]
  %v2579 = vld [vmem:[%s2455 + $0x1c] sm:$0xf]
  %v2588 = vunpack.c.l.b16 %v2572
  %v2589 = vunpack.c.l.b16 %v2573
  %v2590 = vunpack.c.l.b16 %v2574
  %v2591 = vunpack.c.l.b16 %v2575
  %v2592 = vunpack.c.l.b16 %v2576
  %v2593 = vunpack.c.l.b16 %v2577
  %v2594 = vunpack.c.l.b16 %v2578
  %v2595 = vunpack.c.l.b16 %v2579
  %v2596 = vpack.c.b16 %v2589, %v2588
  %v2597 = vpack.c.b16 %v2591, %v2590
  %v2598 = vpack.c.b16 %v2593, %v2592
  %v2599 = vpack.c.b16 %v2595, %v2594
  %2604 = vmatpush.bf16.msra.mxu0 0
  %2605 = vmatpush.bf16.msra.mxu0 0
  %2606 = vmatpush.bf16.msra.mxu0 0
  %2607 = vmatpush.bf16.msra.mxu0 0
  %2608 = vmatpush.bf16.msra.mxu0 %v2599
  %2609 = vmatpush.bf16.msra.mxu0 %v2598
  %2610 = vmatpush.bf16.msra.mxu0 %v2597
  %2611 = vmatpush.bf16.msra.mxu0 %v2596
  %2612 = vmatmul.bf16.gmra.mxu0 %v2494
  %v2613 = vpop.f32.mrf.mxu0
  %v2614 = vadd.f32 0.0, %v2613
  %v2615 = vpop.f32.mrf.mxu0
  %v2616 = vadd.f32 0.0, %v2615
  %2617 = vdwg.mxu0
  %v2626 = vunpack.c.l.b16 %v2564
  %v2627 = vunpack.c.l.b16 %v2565
  %v2628 = vunpack.c.l.b16 %v2566
  %v2629 = vunpack.c.l.b16 %v2567
  %v2630 = vunpack.c.l.b16 %v2568
  %v2631 = vunpack.c.l.b16 %v2569
  %v2632 = vunpack.c.l.b16 %v2570
  %v2633 = vunpack.c.l.b16 %v2571
  %v2634 = vpack.c.b16 %v2627, %v2626
  %v2635 = vpack.c.b16 %v2629, %v2628
  %v2636 = vpack.c.b16 %v2631, %v2630
  %v2637 = vpack.c.b16 %v2633, %v2632
  %2642 = vmatpush.bf16.msra.mxu0 0
  %2643 = vmatpush.bf16.msra.mxu0 0
  %2644 = vmatpush.bf16.msra.mxu0 0
  %2645 = vmatpush.bf16.msra.mxu0 0
  %2646 = vmatpush.bf16.msra.mxu0 %v2637
  %2647 = vmatpush.bf16.msra.mxu0 %v2636
  %2648 = vmatpush.bf16.msra.mxu0 %v2635
  %2649 = vmatpush.bf16.msra.mxu0 %v2634
  %2650 = vmatmul.bf16.gmra.mxu0 %v2540
  %v2651 = vpop.f32.mrf.mxu0
  %v2652 = vadd.f32 %v2614, %v2651
  %v2653 = vpop.f32.mrf.mxu0
  %v2654 = vadd.f32 %v2616, %v2653
  %2655 = vdwg.mxu0
  %v2656 = vmul.f32 %v2652, %v2556
  %v2657 = vmul.f32 %v2654, %v2556
  %v2658 = vadd.f32 %v2656, %v2559
  %v2659 = vadd.f32 %v2657, %v2559
  %v2660 = vmax.f32 %v2658, 0.0
  %v2661 = vmax.f32 %v2659, 0.0
  %v2662 = vmax.f32 %v2562, %v2660
  %v2663 = vmax.f32 %v2563, %v2661
  %v2664 = vld [vmem:[%s3 + $0x10] sm:$0xf]
  %v2665 = vld [vmem:[%s3 + $0x14] sm:$0xf]
  %v2666 = vld [vmem:[%s3 + $0x18] sm:$0xf]
  %v2667 = vld [vmem:[%s3 + $0x1c] sm:$0xf]
  %v2668 = vld [vmem:[%s3 + $0x20] sm:$0xf]
  %v2669 = vld [vmem:[%s3 + $0x24] sm:$0xf]
  %v2670 = vld [vmem:[%s3 + $0x28] sm:$0xf]
  %v2671 = vld [vmem:[%s3 + $0x2c] sm:$0xf]
  %2672 = vmatpush.bf16.msra.mxu0 0
  %2673 = vmatpush.bf16.msra.mxu0 0
  %2674 = vmatpush.bf16.msra.mxu0 0
  %2675 = vmatpush.bf16.msra.mxu0 0
  %2676 = vmatpush.bf16.msra.mxu0 %v2534
  %2677 = vmatpush.bf16.msra.mxu0 %v2533
  %2678 = vmatpush.bf16.msra.mxu0 %v2532
  %2679 = vmatpush.bf16.msra.mxu0 %v2531
  %2680 = vmatmul.bf16.gmra.mxu0 %v2494
  %v2681 = vpop.f32.mrf.mxu0
  %v2682 = vadd.f32 0.0, %v2681
  %v2683 = vpop.f32.mrf.mxu0
  %v2684 = vadd.f32 0.0, %v2683
  %2685 = vdwg.mxu0
  %v2694 = vunpack.c.l.b16 %v2664
  %v2695 = vunpack.c.l.b16 %v2665
  %v2696 = vunpack.c.l.b16 %v2666
  %v2697 = vunpack.c.l.b16 %v2667
  %v2698 = vunpack.c.l.b16 %v2668
  %v2699 = vunpack.c.l.b16 %v2669
  %v2700 = vunpack.c.l.b16 %v2670
  %v2701 = vunpack.c.l.b16 %v2671
  %v2702 = vpack.c.b16 %v2695, %v2694
  %v2703 = vpack.c.b16 %v2697, %v2696
  %v2704 = vpack.c.b16 %v2699, %v2698
  %v2705 = vpack.c.b16 %v2701, %v2700
  %2710 = vmatpush.bf16.msra.mxu0 0
  %2711 = vmatpush.bf16.msra.mxu0 0
  %2712 = vmatpush.bf16.msra.mxu0 0
  %2713 = vmatpush.bf16.msra.mxu0 0
  %2714 = vmatpush.bf16.msra.mxu0 %v2705
  %2715 = vmatpush.bf16.msra.mxu0 %v2704
  %2716 = vmatpush.bf16.msra.mxu0 %v2703
  %2717 = vmatpush.bf16.msra.mxu0 %v2702
  %2718 = vmatmul.bf16.gmra.mxu0 %v2540
  %v2719 = vpop.f32.mrf.mxu0
  %v2720 = vadd.f32 %v2682, %v2719
  %v2721 = vpop.f32.mrf.mxu0
  %v2722 = vadd.f32 %v2684, %v2721
  %2723 = vdwg.mxu0
  %v2724 = vmul.f32 %v2720, %v2556
  %v2725 = vmul.f32 %v2722, %v2556
  %v2726 = vadd.f32 %v2724, %v2559
  %v2727 = vadd.f32 %v2725, %v2559
  %v2728 = vmax.f32 %v2726, 0.0
  %v2729 = vmax.f32 %v2727, 0.0
  %v2730 = vmax.f32 %v2662, %v2728
  %v2731 = vmax.f32 %v2663, %v2729
  %v2732 = vld [vmem:[%s3] sm:$0xf]
  %v2733 = vld [vmem:[%s3 + $0x4] sm:$0xf]
  %v2734 = vld [vmem:[%s3 + $0x8] sm:$0xf]
  %v2735 = vld [vmem:[%s3 + $0xc] sm:$0xf]
  %v2736 = vld [vmem:[%s3 + $0x10] sm:$0xf]
  %v2737 = vld [vmem:[%s3 + $0x14] sm:$0xf]
  %v2738 = vld [vmem:[%s3 + $0x18] sm:$0xf]
  %v2739 = vld [vmem:[%s3 + $0x1c] sm:$0xf]
  %2740 = vmatpush.bf16.msra.mxu0 0
  %2741 = vmatpush.bf16.msra.mxu0 0
  %2742 = vmatpush.bf16.msra.mxu0 0
  %2743 = vmatpush.bf16.msra.mxu0 0
  %2744 = vmatpush.bf16.msra.mxu0 %v2637
  %2745 = vmatpush.bf16.msra.mxu0 %v2636
  %2746 = vmatpush.bf16.msra.mxu0 %v2635
  %2747 = vmatpush.bf16.msra.mxu0 %v2634
  %2748 = vmatmul.bf16.gmra.mxu0 %v2494
  %v2749 = vpop.f32.mrf.mxu0
  %v2750 = vadd.f32 0.0, %v2749
  %v2751 = vpop.f32.mrf.mxu0
  %v2752 = vadd.f32 0.0, %v2751
  %2753 = vdwg.mxu0
  %v2762 = vunpack.c.l.b16 %v2732
  %v2763 = vunpack.c.l.b16 %v2733
  %v2764 = vunpack.c.l.b16 %v2734
  %v2765 = vunpack.c.l.b16 %v2735
  %v2766 = vunpack.c.l.b16 %v2736
  %v2767 = vunpack.c.l.b16 %v2737
  %v2768 = vunpack.c.l.b16 %v2738
  %v2769 = vunpack.c.l.b16 %v2739
  %v2770 = vpack.c.b16 %v2763, %v2762
  %v2771 = vpack.c.b16 %v2765, %v2764
  %v2772 = vpack.c.b16 %v2767, %v2766
  %v2773 = vpack.c.b16 %v2769, %v2768
  %2778 = vmatpush.bf16.msra.mxu0 0
  %2779 = vmatpush.bf16.msra.mxu0 0
  %2780 = vmatpush.bf16.msra.mxu0 0
  %2781 = vmatpush.bf16.msra.mxu0 0
  %2782 = vmatpush.bf16.msra.mxu0 %v2773
  %2783 = vmatpush.bf16.msra.mxu0 %v2772
  %2784 = vmatpush.bf16.msra.mxu0 %v2771
  %2785 = vmatpush.bf16.msra.mxu0 %v2770
  %2786 = vmatmul.bf16.gmra.mxu0 %v2540
  %v2787 = vpop.f32.mrf.mxu0
  %v2788 = vadd.f32 %v2750, %v2787
  %v2789 = vpop.f32.mrf.mxu0
  %v2790 = vadd.f32 %v2752, %v2789
  %2791 = vdwg.mxu0
  %v2792 = vmul.f32 %v2788, %v2556
  %v2793 = vmul.f32 %v2790, %v2556
  %v2794 = vadd.f32 %v2792, %v2559
  %v2795 = vadd.f32 %v2793, %v2559
  %v2796 = vmax.f32 %v2794, 0.0
  %v2797 = vmax.f32 %v2795, 0.0
  %v2798 = vmax.f32 %v2730, %v2796
  %v2799 = vmax.f32 %v2731, %v2797
  %v2800 = vpack.c.bf16 %v2799, %v2798
  %v2801 = vld [vmem:[%s4] sm:$0xf]
  %v2802 = vld [vmem:[%s4 + $0x4] sm:$0xf]
  %v2803 = vld [vmem:[%s4 + $0x8] sm:$0xf]
  %v2804 = vld [vmem:[%s4 + $0xc] sm:$0xf]
  %v2805 = vld [vmem:[%s4 + $0x10] sm:$0xf]
  %v2806 = vld [vmem:[%s4 + $0x14] sm:$0xf]
  %v2807 = vld [vmem:[%s4 + $0x18] sm:$0xf]
  %v2808 = vld [vmem:[%s4 + $0x1c] sm:$0xf]
  %v2817 = vunpack.c.l.b16 %v2801
  %v2818 = vunpack.c.l.b16 %v2802
  %v2819 = vunpack.c.l.b16 %v2803
  %v2820 = vunpack.c.l.b16 %v2804
  %v2821 = vunpack.c.l.b16 %v2805
  %v2822 = vunpack.c.l.b16 %v2806
  %v2823 = vunpack.c.l.b16 %v2807
  %v2824 = vunpack.c.l.b16 %v2808
  %v2825 = vpack.c.b16 %v2818, %v2817
  %v2826 = vpack.c.b16 %v2820, %v2819
  %v2827 = vpack.c.b16 %v2822, %v2821
  %v2828 = vpack.c.b16 %v2824, %v2823
  %v2834 = vsel %vm821, %v2800, 0
  %2836 = vmatpush.bf16.msra.mxu0 0
  %2837 = vmatpush.bf16.msra.mxu0 0
  %2838 = vmatpush.bf16.msra.mxu0 0
  %2839 = vmatpush.bf16.msra.mxu0 0
  %2840 = vmatpush.bf16.msra.mxu0 %v2828
  %2841 = vmatpush.bf16.msra.mxu0 %v2827
  %2842 = vmatpush.bf16.msra.mxu0 %v2826
  %2843 = vmatpush.bf16.msra.mxu0 %v2825
  %2844 = vmatmul.bf16.gmra.mxu0 %v2834
  %v2845 = vpop.f32.mrf.mxu0
  %v2846 = vadd.f32 0.0, %v2845
  %v2847 = vpop.f32.mrf.mxu0
  %v2848 = vadd.f32 0.0, %v2847
  %2849 = vdwg.mxu0
  %v2850 = vld [vmem:[%s6 + $0x6] sm:$0x1]
  %v2851 = vld [vmem:[%s6 + $0x7] sm:$0x1]
  %v2852 = vperm.slane %v2850, 0
  %v2853 = vmul.f32 %v2846, %v2852
  %v2854 = vmul.f32 %v2848, %v2852
  %v2855 = vperm.slane %v2851, 0
  %v2856 = vadd.f32 %v2853, %v2855
  %v2857 = vadd.f32 %v2854, %v2855
  %v2858 = vmax.f32 %v2856, 0.0
  %v2859 = vmax.f32 %v2857, 0.0
  %v2860 = vpack.c.bf16 %v2859, %v2858
  %v2861 = vld [vmem:[%s5] sm:$0xf]
  %v2862 = vld [vmem:[%s5 + $0x4] sm:$0xf]
  %v2863 = vld [vmem:[%s5 + $0x8] sm:$0xf]
  %v2864 = vld [vmem:[%s5 + $0xc] sm:$0xf]
  %v2865 = vld [vmem:[%s5 + $0x10] sm:$0xf]
  %v2866 = vld [vmem:[%s5 + $0x14] sm:$0xf]
  %v2867 = vld [vmem:[%s5 + $0x18] sm:$0xf]
  %v2868 = vld [vmem:[%s5 + $0x1c] sm:$0xf]
  %v2869 = vld [vmem:[%s5 + $0x20] sm:$0xf]
  %v2870 = vld [vmem:[%s5 + $0x24] sm:$0xf]
  %v2871 = vld [vmem:[%s5 + $0x28] sm:$0xf]
  %v2872 = vld [vmem:[%s5 + $0x2c] sm:$0xf]
  %v2873 = vld [vmem:[%s5 + $0x30] sm:$0xf]
  %v2874 = vld [vmem:[%s5 + $0x34] sm:$0xf]
  %v2875 = vld [vmem:[%s5 + $0x38] sm:$0xf]
  %v2876 = vld [vmem:[%s5 + $0x3c] sm:$0xf]
  %v2877 = vld [vmem:[%s6 + $0x8] sm:$0x1]
  %v2878 = vperm.slane %v2877, 0
  %v2895 = vunpack.c.l.b16 %v2861
  %v2896 = vunpack.c.l.b16 %v2862
  %v2897 = vunpack.c.l.b16 %v2863
  %v2898 = vunpack.c.l.b16 %v2864
  %v2899 = vunpack.c.l.b16 %v2865
  %v2900 = vunpack.c.l.b16 %v2866
  %v2901 = vunpack.c.l.b16 %v2867
  %v2902 = vunpack.c.l.b16 %v2868
  %v2903 = vunpack.c.l.b16 %v2869
  %v2904 = vunpack.c.l.b16 %v2870
  %v2905 = vunpack.c.l.b16 %v2871
  %v2906 = vunpack.c.l.b16 %v2872
  %v2907 = vunpack.c.l.b16 %v2873
  %v2908 = vunpack.c.l.b16 %v2874
  %v2909 = vunpack.c.l.b16 %v2875
  %v2910 = vunpack.c.l.b16 %v2876
  %v2911 = vpack.c.b16 %v2896, %v2895
  %v2912 = vpack.c.b16 %v2898, %v2897
  %v2913 = vpack.c.b16 %v2900, %v2899
  %v2914 = vpack.c.b16 %v2902, %v2901
  %v2915 = vpack.c.b16 %v2904, %v2903
  %v2916 = vpack.c.b16 %v2906, %v2905
  %v2917 = vpack.c.b16 %v2908, %v2907
  %v2918 = vpack.c.b16 %v2910, %v2909
  %2927 = vmatpush.bf16.msra.mxu0 %v2918
  %2928 = vmatpush.bf16.msra.mxu0 %v2917
  %2929 = vmatpush.bf16.msra.mxu0 %v2916
  %2930 = vmatpush.bf16.msra.mxu0 %v2915
  %2931 = vmatpush.bf16.msra.mxu0 %v2914
  %2932 = vmatpush.bf16.msra.mxu0 %v2913
  %2933 = vmatpush.bf16.msra.mxu0 %v2912
  %2934 = vmatpush.bf16.msra.mxu0 %v2911
  %2935 = vmatmul.bf16.gmra.mxu0 %v2860
  %v2936 = vpop.f32.mrf.mxu0
  %v2937 = vadd.f32 %v2878, %v2936
  %v2938 = vpop.f32.mrf.mxu0
  %v2939 = vadd.f32 %v2878, %v2938
  %2940 = vdwg.mxu0
  %2941 = vst [vmem:[%s7] sm:$0xff] %v2937
  %2942 = vst [vmem:[%s7 + $0x8] sm:$0xff] %v2939
  // Predicated region
  $region30: #{cnn2d_new_forward.1} parent=0 // pred_check
    _
  $region31: #{cnn2d_new_forward.1} parent=0 // pred_check_branch
    %2944 = sbr.rel (0) target = $region33
  $region32: #{cnn2d_new_forward.1} parent=0 // pred_region
    _
  $region33: #{cnn2d_new_forward.1} parent=0 // pred_fallthru
    _
  // Predicated region
  $region34: #{cnn2d_new_forward.1} parent=0 // pred_check
    _
  $region35: #{cnn2d_new_forward.1} parent=0 // pred_check_branch
    %2946 = sbr.rel (0) target = $region37
  $region36: #{cnn2d_new_forward.1} parent=0 // pred_region
    _
  $region37: #{cnn2d_new_forward.1} parent=0 // pred_fallthru
    _

</llo_original>
